<compile_context>
chip_gen: v6e
topology: v6e:2x2x1
jax: 0.10.0
libtpu: 0.0.40
codegen_flags: <defaults>
</compile_context>

<pallas_src>
import functools

import jax
import jax.numpy as jnp
from jax.experimental import pallas as pl
from jax.experimental.pallas import tpu as pltpu


# ---------------------------------------------------------------------------
# Kernel bodies
# ---------------------------------------------------------------------------

def _gn_stats_kernel(x_ref, s_ref, ss_ref):
    """Accumulate per-channel sum and sum-of-squares over all spatial tiles."""
    @pl.when(pl.program_id(1) == 0)
    def _init():
        s_ref[...] = jnp.zeros_like(s_ref)
        ss_ref[...] = jnp.zeros_like(ss_ref)

    x = x_ref[0].astype(jnp.float32)                      # (TH, W, C) -> f32 accum
    s_ref[...] += jnp.sum(x, axis=(0, 1), keepdims=True)  # (1, 1, C)
    ss_ref[...] += jnp.sum(x * x, axis=(0, 1), keepdims=True)


def _fused_gn_silu_conv_kernel(*refs, TH, W, Cin, Cout, mode, emit_stats, small_k):
    """Fused GroupNorm(affine folded) -> SiLU -> 3x3 conv (+ shortcut, + GN2 partials).

    mode: 0 = no residual, 1 = identity residual, 2 = 1x1-conv residual.
    emit_stats: also write per-tile sum / sum-of-squares of the output (for GN2).
    Grid: (N, H // TH). Halo rows come from the two 1-row `up_ref` / `dn_ref` blocks.
    """
    x_ref, up_ref, dn_ref, scale_ref, shift_ref, wcat_ref, b_ref = refs[:7]
    pos = 7
    res_ref = scw_ref = scb_ref = None
    if mode >= 1:
        res_ref = refs[pos]; pos += 1
    if mode == 2:
        scw_ref, scb_ref = refs[pos], refs[pos + 1]; pos += 2
    o_ref = refs[pos]; pos += 1
    s_ref = ss_ref = None
    if emit_stats:
        s_ref, ss_ref = refs[pos], refs[pos + 1]

    t = pl.program_id(1)
    n_t = pl.num_programs(1)

    scale = scale_ref[0]          # (1, Cin) f32  (gamma * inv_std, per channel)
    shift = shift_ref[0]          # (1, Cin) f32  (beta  - mean * gamma * inv_std)

    def norm_silu(v):             # f32 VPU/EUP math (v5e has no bf16 VPU/EUP)
        a = v.astype(jnp.float32) * scale + shift
        return (a * jax.nn.sigmoid(a)).astype(jnp.bfloat16)

    def mask_row(keep_scalar, row):
        # NaN-safe row zeroing: select with a full-shape predicate (no 0*NaN).
        keep = (jnp.zeros(row.shape, jnp.int32) + keep_scalar.astype(jnp.int32)) > 0
        return jnp.where(keep, row, jnp.zeros_like(row))

    # Main tile rows + 1-row halo above/below. The halo rows are clamped real rows;
    # they are zeroed here when they fall outside the image (the conv zero-pads its
    # *post-activation* input).
    a_mid = norm_silu(x_ref[0])                           # (TH, W, Cin) bf16
    a_up = mask_row(t > 0, norm_silu(up_ref[0]))          # (1, W, Cin)
    a_dn = mask_row(t < n_t - 1, norm_silu(dn_ref[0]))    # (1, W, Cin)
    a = jnp.concatenate([a_up, a_mid, a_dn], axis=0)      # (TH+2, W, Cin) bf16

    # dx-shifted taps with zero edge columns (built once per tile, kept as values;
    # no VMEM scratch round-trip).
    zcol = jnp.zeros((TH + 2, 1, Cin), jnp.bfloat16)
    left = jnp.concatenate([zcol, a[:, :W - 1, :]], axis=1)    # x[.., w-1, :]
    right = jnp.concatenate([a[:, 1:, :], zcol], axis=1)       # x[.., w+1, :]

    acc = jnp.zeros((TH * W, Cout), jnp.float32)
    if small_k:
        # Small Cin: fold dx into K (K = 3*Cin) -> 3 well-filled MXU matmuls.
        pcat = jnp.concatenate([left, a, right], axis=-1)      # (TH+2, W, 3*Cin)
        for dy in range(3):
            patch = pcat[dy:dy + TH].reshape(TH * W, 3 * Cin)
            acc = acc + jnp.dot(patch, wcat_ref[dy],
                                preferred_element_type=jnp.float32)
    else:
        # Large Cin: K = Cin already fills the MXU; skip the lane concat (9 dots).
        taps = (left, a, right)
        for dy in range(3):
            w_dy = wcat_ref[dy]                                 # (3*Cin, Cout)
            for dx in range(3):
                patch = taps[dx][dy:dy + TH].reshape(TH * W, Cin)
                acc = acc + jnp.dot(patch, w_dy[dx * Cin:(dx + 1) * Cin, :],
                                    preferred_element_type=jnp.float32)

    y = acc + b_ref[...]

    # Residual add fused into the epilogue (saves a full extra HBM pass).
    if mode == 1:
        y = y + res_ref[0].reshape(TH * W, Cout).astype(jnp.float32)
    elif mode == 2:
        xs = res_ref[0].reshape(TH * W, res_ref.shape[-1])      # bf16 MXU operands
        y = y + jnp.dot(xs, scw_ref[...],
                        preferred_element_type=jnp.float32) + scb_ref[...]

    yb = y.astype(o_ref.dtype)
    o_ref[0] = yb.reshape(TH, W, Cout)

    if emit_stats:
        # GN2 partial statistics, computed on exactly what the next pass will read
        # (same dtype as the stored h1). Per-tile partials keep both grid axes parallel.
        yf = yb.astype(jnp.float32)
        s_ref[0, 0] = jnp.sum(yf, axis=0, keepdims=True)
        ss_ref[0, 0] = jnp.sum(yf * yf, axis=0, keepdims=True)


# ---------------------------------------------------------------------------
# VMEM-aware tile selection
# ---------------------------------------------------------------------------

def _divisor_tiles(H):
    """Multiples of 8 that divide H, descending."""
    return [d for d in range(H, 7, -8) if H % d == 0]


def _conv_vmem_estimate(th, W, Cin, Cout, Cres):
    """Per-step VMEM footprint estimate (bytes) for the fused conv kernel."""
    bf2, f4 = 2, 4
    x_tiles = 2 * (th + 2) * W * Cin * bf2                 # main + 2 halo rows, double-buffered
    res_tiles = 2 * th * W * Cres * bf2 if Cres else 0
    out_tiles = 2 * th * W * Cout * f4                     # conservative (f32 out)
    weights = 2 * (3 * 3 * Cin * Cout * bf2 + Cres * Cout * bf2)
    # in-kernel temporaries: shifted taps / channel concat + f32 accumulator
    temps = 2 * (th + 2) * W * (3 * Cin) * bf2 + 2 * th * W * Cout * f4
    return x_tiles + res_tiles + out_tiles + weights + temps + (1 << 20)


def _vmem_limit(est):
    return int(min(max(est + (8 << 20), 32 << 20), 110 << 20))


def _pick_conv_tile_h(H, W, Cin, Cout, Cres, budget=40 << 20):
    # Budget chosen so the footprint (double-buffering included) stays under v7x's
    # 64 MiB physical VMEM with headroom; v5e/v6e (128 MiB) are covered a fortiori.
    for th in _divisor_tiles(H):
        if _conv_vmem_estimate(th, W, Cin, Cout, Cres) <= budget:
            return th
    return 8


def _pick_stats_tile_h(H, W, C, itemsize, budget=32 << 20):
    # Stats pass is pure HBM bandwidth: use the largest tile that fits
    # (2x double-buffered input block), independently of the conv tile.
    for th in _divisor_tiles(H):
        if 2 * th * W * C * itemsize <= budget:
            return th
    return 8


# ---------------------------------------------------------------------------
# pallas_call wrappers (NHWC)
# ---------------------------------------------------------------------------

def gn_channel_stats(x, *, tile_h):
    """Per-sample per-channel sum and sum-of-squares: outputs 2 x (N, 1, C) f32."""
    N, H, W, C = x.shape
    assert H % tile_h == 0
    nT = H // tile_h
    est = 4 * tile_h * W * C * x.dtype.itemsize + (1 << 20)
    return pl.pallas_call(
        _gn_stats_kernel,
        out_shape=[jax.ShapeDtypeStruct((N, 1, C), jnp.float32),
                   jax.ShapeDtypeStruct((N, 1, C), jnp.float32)],
        grid=(N, nT),
        in_specs=[pl.BlockSpec((1, tile_h, W, C), lambda n, t: (n, t, 0, 0))],
        out_specs=[pl.BlockSpec((1, 1, C), lambda n, t: (n, 0, 0)),
                   pl.BlockSpec((1, 1, C), lambda n, t: (n, 0, 0))],
        compiler_params=pltpu.CompilerParams(
            dimension_semantics=("parallel", "arbitrary"),
            vmem_limit_bytes=_vmem_limit(est)),
    )(x)


def _fold_gn_affine(s, ss, gamma, beta, num_groups, eps, hw):
    """Tiny O(N*C) glue: per-group mean/var -> folded per-channel scale/shift."""
    N, _, C = s.shape
    cs = C // num_groups
    count = cs * hw
    sg = s.reshape(N, num_groups, cs).sum(axis=-1, keepdims=True)
    ssg = ss.reshape(N, num_groups, cs).sum(axis=-1, keepdims=True)
    mean = sg / count
    var = jnp.maximum(ssg / count - mean * mean, 0.0)   # clamp: avoid negative variance
    inv = jax.lax.rsqrt(var + eps)
    inv_c = jnp.broadcast_to(inv, (N, num_groups, cs)).reshape(N, 1, C)
    mean_c = jnp.broadcast_to(mean, (N, num_groups, cs)).reshape(N, 1, C)
    scale = inv_c * gamma.reshape(1, 1, C).astype(jnp.float32)
    shift = beta.reshape(1, 1, C).astype(jnp.float32) - mean_c * scale
    return scale.astype(jnp.float32), shift.astype(jnp.float32)


def gn_silu_conv3x3(x, scale, shift, wcat, bias, *, tile_h, out_dtype,
                    residual=None, sc_w=None, sc_b=None, emit_stats=False):
    """Fused normalize(scale/shift) -> SiLU -> conv3x3 (+ residual, + GN2 partials).

    x:     (N, H, W, Cin)     activation (bf16 preferred)
    scale: (N, 1, Cin) f32    folded GroupNorm scale (gamma * inv_std)
    shift: (N, 1, Cin) f32    folded GroupNorm shift
    wcat:  (3, 3*Cin, Cout)   bf16 conv weights, dx taps concatenated along K
    bias:  (1, Cout) f32
    residual: optional (N, H, W, Cres) bf16; sc_w/sc_b: optional 1x1-shortcut params.
    emit_stats: also return per-tile (N, nT, 1, Cout) sum / sum-of-squares partials.
    """
    N, H, W, Cin = x.shape
    Cout = wcat.shape[-1]
    th = tile_h
    assert H % th == 0 and th % 8 == 0
    nT = H // th
    mode = 0 if residual is None else (1 if sc_w is None else 2)
    Cres = 0 if residual is None else residual.shape[-1]

    in_specs = [
        # main tile rows [t*th, t*th+th)
        pl.BlockSpec((1, th, W, Cin), lambda n, t: (n, t, 0, 0)),
        # 1-row halo above (clamped; zeroed in-kernel at t == 0)
        pl.BlockSpec((1, 1, W, Cin),
                     lambda n, t: (n, jnp.maximum(t * th - 1, 0), 0, 0)),
        # 1-row halo below (clamped; zeroed in-kernel at the last tile)
        pl.BlockSpec((1, 1, W, Cin),
                     lambda n, t: (n, jnp.minimum((t + 1) * th, H - 1), 0, 0)),
        pl.BlockSpec((1, 1, Cin), lambda n, t: (n, 0, 0)),
        pl.BlockSpec((1, 1, Cin), lambda n, t: (n, 0, 0)),
        pl.BlockSpec((3, 3 * Cin, Cout), lambda n, t: (0, 0, 0)),
        pl.BlockSpec((1, Cout), lambda n, t: (0, 0)),
    ]
    args = [x, x, x, scale, shift, wcat, bias]
    if residual is not None:
        in_specs.append(pl.BlockSpec((1, th, W, Cres), lambda n, t: (n, t, 0, 0)))
        args.append(residual)
        if sc_w is not None:
            in_specs.append(pl.BlockSpec((Cres, Cout), lambda n, t: (0, 0)))
            in_specs.append(pl.BlockSpec((1, Cout), lambda n, t: (0, 0)))
            args += [sc_w, sc_b]

    out_shape = [jax.ShapeDtypeStruct((N, H, W, Cout), out_dtype)]
    out_specs = [pl.BlockSpec((1, th, W, Cout), lambda n, t: (n, t, 0, 0))]
    if emit_stats:
        out_shape += [jax.ShapeDtypeStruct((N, nT, 1, Cout), jnp.float32)] * 2
        out_specs += [pl.BlockSpec((1, 1, 1, Cout), lambda n, t: (n, t, 0, 0))] * 2

    est = _conv_vmem_estimate(th, W, Cin, Cout, Cres)
    kernel = functools.partial(
        _fused_gn_silu_conv_kernel, TH=th, W=W, Cin=Cin, Cout=Cout,
        mode=mode, emit_stats=emit_stats, small_k=(Cin < 256))
    outs = pl.pallas_call(
        kernel,
        out_shape=out_shape,
        grid=(N, nT),
        in_specs=in_specs,
        out_specs=out_specs,
        compiler_params=pltpu.CompilerParams(
            dimension_semantics=("parallel", "parallel"),
            vmem_limit_bytes=_vmem_limit(est)),
    )(*args)
    return outs if emit_stats else outs[0]


# ---------------------------------------------------------------------------
# Residual module: parameters + forward
# ---------------------------------------------------------------------------

def init_residual_params(key, in_channels, out_channels, dtype=jnp.float32):
    ks = jax.random.split(key, 10)
    p = {
        "gn1_g": jnp.ones((in_channels,), dtype) + 0.01 * jax.random.normal(ks[0], (in_channels,), dtype),
        "gn1_b": 0.01 * jax.random.normal(ks[1], (in_channels,), dtype),
        "gn2_g": jnp.ones((out_channels,), dtype) + 0.01 * jax.random.normal(ks[2], (out_channels,), dtype),
        "gn2_b": 0.01 * jax.random.normal(ks[3], (out_channels,), dtype),
        # conv weights in HWIO
        "conv1_w": 0.05 * jax.random.normal(ks[4], (3, 3, in_channels, out_channels), dtype),
        "conv1_b": 0.02 * jax.random.normal(ks[5], (out_channels,), dtype),
        "conv2_w": 0.05 * jax.random.normal(ks[6], (3, 3, out_channels, out_channels), dtype),
        "conv2_b": 0.02 * jax.random.normal(ks[7], (out_channels,), dtype),
    }
    if in_channels != out_channels:
        p["sc_w"] = 0.05 * jax.random.normal(ks[8], (in_channels, out_channels), dtype)
        p["sc_b"] = 0.02 * jax.random.normal(ks[9], (out_channels,), dtype)
    return p


def residual_forward_nhwc(x, params, *, in_channels, out_channels,
                          num_groups=32, eps=1e-6, tile_h=None):
    N, H, W, Cin = x.shape
    assert Cin == in_channels
    # TODO(synk): support H/W not divisible by 8 (ragged last tile / relayout-free reshape).
    assert H % 8 == 0 and W % 8 == 0
    out_dtype = x.dtype
    hw = H * W

    # Activation path in bf16 (halves HBM reads in every pass); statistics,
    # normalization/SiLU math and matmul accumulators stay f32 in-kernel.
    xb = x.astype(jnp.bfloat16)

    # GN1 statistics: stats tile decoupled from the conv tile (pure-bandwidth pass).
    th_stats = _pick_stats_tile_h(H, W, Cin, xb.dtype.itemsize)
    s1, ss1 = gn_channel_stats(xb, tile_h=th_stats)
    scale1, shift1 = _fold_gn_affine(s1, ss1, params["gn1_g"], params["gn1_b"],
                                     num_groups, eps, hw)

    if tile_h is None:
        th = _pick_conv_tile_h(H, W, max(in_channels, out_channels),
                               out_channels, in_channels)
    else:
        th = tile_h
    assert H % th == 0 and th % 8 == 0

    # Fused GN1 -> SiLU -> conv1, epilogue also emits GN2 per-tile partial stats.
    wcat1 = params["conv1_w"].reshape(3, 3 * in_channels, out_channels).astype(jnp.bfloat16)
    b1 = params["conv1_b"].reshape(1, -1).astype(jnp.float32)
    h1, s2p, ss2p = gn_silu_conv3x3(xb, scale1, shift1, wcat1, b1,
                                    tile_h=th, out_dtype=jnp.bfloat16,
                                    emit_stats=True)

    # Reduce the per-tile GN2 partials (tiny O(N*nT*C) glue) and fold the affine.
    s2 = s2p.sum(axis=1)
    ss2 = ss2p.sum(axis=1)
    scale2, shift2 = _fold_gn_affine(s2, ss2, params["gn2_g"], params["gn2_b"],
                                     num_groups, eps, hw)

    # Fused GN2 -> SiLU -> conv2 with the shortcut add in the epilogue.
    wcat2 = params["conv2_w"].reshape(3, 3 * out_channels, out_channels).astype(jnp.bfloat16)
    b2 = params["conv2_b"].reshape(1, -1).astype(jnp.float32)
    if in_channels == out_channels:
        out = gn_silu_conv3x3(h1, scale2, shift2, wcat2, b2,
                              tile_h=th, out_dtype=out_dtype, residual=xb)
    else:
        out = gn_silu_conv3x3(h1, scale2, shift2, wcat2, b2,
                              tile_h=th, out_dtype=out_dtype, residual=xb,
                              sc_w=params["sc_w"].astype(jnp.bfloat16),
                              sc_b=params["sc_b"].reshape(1, -1).astype(jnp.float32))
    return out


def residual_forward(x_nchw, params, *, in_channels, out_channels,
                     num_groups=32, eps=1e-6, tile_h=None):
    # PyTorch-parity entry point (NCHW in/out). The transposes are boundary glue;
    # pipelines that already carry NHWC activations should call residual_forward_nhwc.
    x = jnp.transpose(x_nchw, (0, 2, 3, 1))
    out = residual_forward_nhwc(x, params, in_channels=in_channels,
                                out_channels=out_channels,
                                num_groups=num_groups, eps=eps, tile_h=tile_h)
    return jnp.transpose(out, (0, 3, 1, 2))


# ---------------------------------------------------------------------------
# Pure-JAX reference (correctness check)
# ---------------------------------------------------------------------------

def _ref_gn_silu(x, gamma, beta, num_groups, eps):
    N, H, W, C = x.shape
    cs = C // num_groups
    xr = x.reshape(N, H, W, num_groups, cs)
    mean = xr.mean(axis=(1, 2, 4), keepdims=True)
    var = xr.var(axis=(1, 2, 4), keepdims=True)
    y = ((xr - mean) / jnp.sqrt(var + eps)).reshape(N, H, W, C)
    y = y * gamma + beta
    return y * jax.nn.sigmoid(y)


def _ref_conv3x3(x, w, b):
    y = jax.lax.conv_general_dilated(
        x, w, window_strides=(1, 1), padding="SAME",
        dimension_numbers=("NHWC", "HWIO", "NHWC"))
    return y + b


def residual_reference(x_nchw, params, *, in_channels, out_channels,
                       num_groups=32, eps=1e-6):
    x = jnp.transpose(x_nchw, (0, 2, 3, 1))
    h = _ref_gn_silu(x, params["gn1_g"], params["gn1_b"], num_groups, eps)
    h = _ref_conv3x3(h, params["conv1_w"], params["conv1_b"])
    h = _ref_gn_silu(h, params["gn2_g"], params["gn2_b"], num_groups, eps)
    h = _ref_conv3x3(h, params["conv2_w"], params["conv2_b"])
    if in_channels == out_channels:
        out = x + h
    else:
        out = jnp.einsum("nhwi,io->nhwo", x, params["sc_w"]) + params["sc_b"] + h
    return jnp.transpose(out, (0, 3, 1, 2))


# ---------------------------------------------------------------------------
# Demo
# ---------------------------------------------------------------------------

if __name__ == "__main__":
    # GroupNorm(32, C) requires C % 32 == 0 -> smallest sensible channel counts.
    N, Cin, Cout, H, W = 2, 32, 64, 16, 16

    key = jax.random.PRNGKey(0)
    kx, kp = jax.random.split(key)
    x = jax.random.normal(kx, (N, Cin, H, W), jnp.float32)   # NCHW, as in PyTorch

    def check(out, ref):
        err = float(jnp.max(jnp.abs(out - ref)))
        scl = float(jnp.max(jnp.abs(ref)))
        assert err <= 5e-2 * scl, (err, scl)   # bf16 activation path -> loose-ish bound

    # Projection-shortcut variant (in_channels != out_channels). tile_h=8 forces a
    # 2-tile spatial grid so the 1-row halo path is exercised and validated.
    params = init_residual_params(kp, Cin, Cout)
    fwd = jax.jit(lambda xx, pp: residual_forward(
        xx, pp, in_channels=Cin, out_channels=Cout, tile_h=8))
    out = jax.block_until_ready(fwd(x, params))
    assert out.shape == (N, Cout, H, W), out.shape
    ref = residual_reference(x, params, in_channels=Cin, out_channels=Cout)
    check(out, ref)

    # Identity-shortcut variant (in_channels == out_channels), auto tile selection
    # (single-tile grid -> both halo masks hit the "outside image" branch).
    params_id = init_residual_params(jax.random.PRNGKey(1), Cin, Cin)
    fwd_id = jax.jit(lambda xx, pp: residual_forward(
        xx, pp, in_channels=Cin, out_channels=Cin))
    out_id = jax.block_until_ready(fwd_id(x, params_id))
    assert out_id.shape == (N, Cin, H, W), out_id.shape
    ref_id = residual_reference(x, params_id, in_channels=Cin, out_channels=Cin)
    check(out_id, ref_id)

    print("KERNEL_OK")
</pallas_src>

<mosaic_0001>
module attributes {stable_mosaic.version = 11 : i64} {
  func.func @_gn_stats_kernel(%arg0: i32, %arg1: i32, %arg2: memref<1x16x16x32xbf16, #tpu.memory_space<vmem>>, %arg3: memref<1x1x32xf32, #tpu.memory_space<vmem>>, %arg4: memref<1x1x32xf32, #tpu.memory_space<vmem>>) attributes {dimension_semantics = [#tpu.dimension_semantics<parallel>, #tpu.dimension_semantics<arbitrary>], iteration_bounds = array<i64: 2, 1>, scalar_prefetch = 0 : i64, scratch_operands = 0 : i64, tpu.core_type = #tpu.core_type<tc>, window_params = [{transform_indices = @transform_0, window_bounds = array<i64: 1, 16, 16, 32>}, {transform_indices = @transform_1, window_bounds = array<i64: 1, 1, 32>}, {transform_indices = @transform_2, window_bounds = array<i64: 1, 1, 32>}]} {
    %c0_i32 = arith.constant 0 : i32
    %0 = arith.cmpi eq, %arg1, %c0_i32 : i32
    %1 = arith.extui %0 : i1 to i32
    %c0_i32_0 = arith.constant 0 : i32
    %2 = arith.cmpi ne, %1, %c0_i32_0 : i32
    scf.if %2 {
      %cst_17 = arith.constant 0.000000e+00 : f32
      %17 = vector.broadcast %cst_17 : f32 to vector<1x1x32xf32>
      %c0_18 = arith.constant 0 : index
      %c0_19 = arith.constant 0 : index
      %c0_20 = arith.constant 0 : index
      %18 = vector.load %arg3[%c0_18, %c0_19, %c0_20] : memref<1x1x32xf32, #tpu.memory_space<vmem>>, vector<1x1x32xf32>
      tpu.vector_store %arg3[%c0_18, %c0_19, %c0_20], %17 {strides = array<i32>} : memref<1x1x32xf32, #tpu.memory_space<vmem>>, vector<1x1x32xf32>,
      %cst_21 = arith.constant 0.000000e+00 : f32
      %19 = vector.broadcast %cst_21 : f32 to vector<1x1x32xf32>
      %c0_22 = arith.constant 0 : index
      %c0_23 = arith.constant 0 : index
      %c0_24 = arith.constant 0 : index
      %20 = vector.load %arg4[%c0_22, %c0_23, %c0_24] : memref<1x1x32xf32, #tpu.memory_space<vmem>>, vector<1x1x32xf32>
      tpu.vector_store %arg4[%c0_22, %c0_23, %c0_24], %19 {strides = array<i32>} : memref<1x1x32xf32, #tpu.memory_space<vmem>>, vector<1x1x32xf32>,
    } else {
    }
    %c0 = arith.constant 0 : index
    %c0_1 = arith.constant 0 : index
    %c0_2 = arith.constant 0 : index
    %c0_3 = arith.constant 0 : index
    %3 = vector.load %arg2[%c0, %c0_1, %c0_2, %c0_3] : memref<1x16x16x32xbf16, #tpu.memory_space<vmem>>, vector<1x16x16x32xbf16>
    %4 = vector.shape_cast %3 : vector<1x16x16x32xbf16> to vector<16x16x32xbf16>
    %5 = arith.extf %4 : vector<16x16x32xbf16> to vector<16x16x32xf32>
    %c0_4 = arith.constant 0 : index
    %c0_5 = arith.constant 0 : index
    %c0_6 = arith.constant 0 : index
    %6 = vector.load %arg3[%c0_4, %c0_5, %c0_6] : memref<1x1x32xf32, #tpu.memory_space<vmem>>, vector<1x1x32xf32>
    %cst = arith.constant dense<0.000000e+00> : vector<32xf32>
    %7 = vector.multi_reduction <add>, %5, %cst [0, 1] : vector<16x16x32xf32> to vector<32xf32>
    %8 = vector.shape_cast %7 : vector<32xf32> to vector<1x1x32xf32>
    %9 = arith.addf %6, %8 : vector<1x1x32xf32>
    %c0_7 = arith.constant 0 : index
    %c0_8 = arith.constant 0 : index
    %c0_9 = arith.constant 0 : index
    %10 = vector.load %arg3[%c0_7, %c0_8, %c0_9] : memref<1x1x32xf32, #tpu.memory_space<vmem>>, vector<1x1x32xf32>
    tpu.vector_store %arg3[%c0_7, %c0_8, %c0_9], %9 {strides = array<i32>} : memref<1x1x32xf32, #tpu.memory_space<vmem>>, vector<1x1x32xf32>,
    %c0_10 = arith.constant 0 : index
    %c0_11 = arith.constant 0 : index
    %c0_12 = arith.constant 0 : index
    %11 = vector.load %arg4[%c0_10, %c0_11, %c0_12] : memref<1x1x32xf32, #tpu.memory_space<vmem>>, vector<1x1x32xf32>
    %12 = arith.mulf %5, %5 : vector<16x16x32xf32>
    %cst_13 = arith.constant dense<0.000000e+00> : vector<32xf32>
    %13 = vector.multi_reduction <add>, %12, %cst_13 [0, 1] : vector<16x16x32xf32> to vector<32xf32>
    %14 = vector.shape_cast %13 : vector<32xf32> to vector<1x1x32xf32>
    %15 = arith.addf %11, %14 : vector<1x1x32xf32>
    %c0_14 = arith.constant 0 : index
    %c0_15 = arith.constant 0 : index
    %c0_16 = arith.constant 0 : index
    %16 = vector.load %arg4[%c0_14, %c0_15, %c0_16] : memref<1x1x32xf32, #tpu.memory_space<vmem>>, vector<1x1x32xf32>
    tpu.vector_store %arg4[%c0_14, %c0_15, %c0_16], %15 {strides = array<i32>} : memref<1x1x32xf32, #tpu.memory_space<vmem>>, vector<1x1x32xf32>,
    return
  }
  func.func @transform_0(%arg0: i32, %arg1: i32) -> (i32, i32, i32, i32) {
    %c0_i32 = arith.constant 0 : i32
    %c0_i32_0 = arith.constant 0 : i32
    %c0_i32_1 = arith.constant 0 : i32
    return %arg0, %arg1, %c0_i32, %c0_i32_0 : i32, i32, i32, i32
  }
  func.func @transform_1(%arg0: i32, %arg1: i32) -> (i32, i32, i32) {
    %c0_i32 = arith.constant 0 : i32
    %c0_i32_0 = arith.constant 0 : i32
    %c0_i32_1 = arith.constant 0 : i32
    return %arg0, %c0_i32, %c0_i32_0 : i32, i32, i32
  }
  func.func @transform_2(%arg0: i32, %arg1: i32) -> (i32, i32, i32) {
    %c0_i32 = arith.constant 0 : i32
    %c0_i32_0 = arith.constant 0 : i32
    %c0_i32_1 = arith.constant 0 : i32
    return %arg0, %c0_i32, %c0_i32_0 : i32, i32, i32
  }
}

module attributes {stable_mosaic.version = 11 : i64} {
  func.func @_fused_gn_silu_conv_kernel(%arg0: i32, %arg1: i32, %arg2: memref<1x8x16x32xbf16, #tpu.memory_space<vmem>>, %arg3: memref<1x1x16x32xbf16, #tpu.memory_space<vmem>>, %arg4: memref<1x1x16x32xbf16, #tpu.memory_space<vmem>>, %arg5: memref<1x1x32xf32, #tpu.memory_space<vmem>>, %arg6: memref<1x1x32xf32, #tpu.memory_space<vmem>>, %arg7: memref<3x96x64xbf16, #tpu.memory_space<vmem>>, %arg8: memref<1x64xf32, #tpu.memory_space<vmem>>, %arg9: memref<1x8x16x64xbf16, #tpu.memory_space<vmem>>, %arg10: memref<1x1x1x64xf32, #tpu.memory_space<vmem>>, %arg11: memref<1x1x1x64xf32, #tpu.memory_space<vmem>>) attributes {dimension_semantics = [#tpu.dimension_semantics<parallel>, #tpu.dimension_semantics<parallel>], iteration_bounds = array<i64: 2, 2>, scalar_prefetch = 0 : i64, scratch_operands = 0 : i64, tpu.core_type = #tpu.core_type<tc>, window_params = [{transform_indices = @transform_0, window_bounds = array<i64: 1, 8, 16, 32>}, {transform_indices = @transform_1, window_bounds = array<i64: 1, 1, 16, 32>}, {transform_indices = @transform_2, window_bounds = array<i64: 1, 1, 16, 32>}, {transform_indices = @transform_3, window_bounds = array<i64: 1, 1, 32>}, {transform_indices = @transform_4, window_bounds = array<i64: 1, 1, 32>}, {pipeline_mode = #tpu.pipeline_mode<synchronous>, transform_indices = @transform_5, window_bounds = array<i64: 3, 96, 64>}, {pipeline_mode = #tpu.pipeline_mode<synchronous>, transform_indices = @transform_6, window_bounds = array<i64: 1, 64>}, {transform_indices = @transform_7, window_bounds = array<i64: 1, 8, 16, 64>}, {transform_indices = @transform_8, window_bounds = array<i64: 1, 1, 1, 64>}, {transform_indices = @transform_9, window_bounds = array<i64: 1, 1, 1, 64>}]} {
    %c0 = arith.constant 0 : index
    %c0_0 = arith.constant 0 : index
    %c0_1 = arith.constant 0 : index
    %0 = vector.load %arg5[%c0, %c0_0, %c0_1] : memref<1x1x32xf32, #tpu.memory_space<vmem>>, vector<1x1x32xf32>
    %1 = vector.shape_cast %0 : vector<1x1x32xf32> to vector<1x32xf32>
    %c0_2 = arith.constant 0 : index
    %c0_3 = arith.constant 0 : index
    %c0_4 = arith.constant 0 : index
    %2 = vector.load %arg6[%c0_2, %c0_3, %c0_4] : memref<1x1x32xf32, #tpu.memory_space<vmem>>, vector<1x1x32xf32>
    %3 = vector.shape_cast %2 : vector<1x1x32xf32> to vector<1x32xf32>
    %c0_5 = arith.constant 0 : index
    %c0_6 = arith.constant 0 : index
    %c0_7 = arith.constant 0 : index
    %c0_8 = arith.constant 0 : index
    %4 = vector.load %arg2[%c0_5, %c0_6, %c0_7, %c0_8] : memref<1x8x16x32xbf16, #tpu.memory_space<vmem>>, vector<1x8x16x32xbf16>
    %5 = vector.shape_cast %4 : vector<1x8x16x32xbf16> to vector<8x16x32xbf16>
    %6 = arith.extf %5 : vector<8x16x32xbf16> to vector<8x16x32xf32>
    %7 = vector.shape_cast %1 : vector<1x32xf32> to vector<1x1x32xf32>
    %8 = vector.broadcast %7 : vector<1x1x32xf32> to vector<8x16x32xf32>
    %9 = arith.mulf %6, %8 : vector<8x16x32xf32>
    %10 = vector.shape_cast %3 : vector<1x32xf32> to vector<1x1x32xf32>
    %11 = vector.broadcast %10 : vector<1x1x32xf32> to vector<8x16x32xf32>
    %12 = arith.addf %9, %11 : vector<8x16x32xf32>
    %13 = arith.negf %12 : vector<8x16x32xf32>
    %14 = math.exp %13 : vector<8x16x32xf32>
    %cst = arith.constant 1.000000e+00 : f32
    %15 = vector.broadcast %cst : f32 to vector<8x16x32xf32>
    %16 = arith.addf %15, %14 : vector<8x16x32xf32>
    %17 = arith.divf %15, %16 : vector<8x16x32xf32>
    %18 = arith.mulf %12, %17 : vector<8x16x32xf32>
    %19 = arith.truncf %18 : vector<8x16x32xf32> to vector<8x16x32xbf16>
    %c0_i32 = arith.constant 0 : i32
    %20 = arith.cmpi sgt, %arg1, %c0_i32 : i32
    %c0_9 = arith.constant 0 : index
    %c0_10 = arith.constant 0 : index
    %c0_11 = arith.constant 0 : index
    %c0_12 = arith.constant 0 : index
    %21 = vector.load %arg3[%c0_9, %c0_10, %c0_11, %c0_12] : memref<1x1x16x32xbf16, #tpu.memory_space<vmem>>, vector<1x1x16x32xbf16>
    %22 = vector.shape_cast %21 : vector<1x1x16x32xbf16> to vector<1x16x32xbf16>
    %23 = arith.extf %22 : vector<1x16x32xbf16> to vector<1x16x32xf32>
    %24 = vector.shape_cast %1 : vector<1x32xf32> to vector<1x1x32xf32>
    %25 = vector.broadcast %24 : vector<1x1x32xf32> to vector<1x16x32xf32>
    %26 = arith.mulf %23, %25 : vector<1x16x32xf32>
    %27 = vector.shape_cast %3 : vector<1x32xf32> to vector<1x1x32xf32>
    %28 = vector.broadcast %27 : vector<1x1x32xf32> to vector<1x16x32xf32>
    %29 = arith.addf %26, %28 : vector<1x16x32xf32>
    %30 = arith.negf %29 : vector<1x16x32xf32>
    %31 = math.exp %30 : vector<1x16x32xf32>
    %cst_13 = arith.constant 1.000000e+00 : f32
    %32 = vector.broadcast %cst_13 : f32 to vector<1x16x32xf32>
    %33 = arith.addf %32, %31 : vector<1x16x32xf32>
    %34 = arith.divf %32, %33 : vector<1x16x32xf32>
    %35 = arith.mulf %29, %34 : vector<1x16x32xf32>
    %36 = arith.truncf %35 : vector<1x16x32xf32> to vector<1x16x32xbf16>
    %c0_i32_14 = arith.constant 0 : i32
    %37 = vector.broadcast %c0_i32_14 : i32 to vector<1x16x32xi32>
    %38 = arith.extui %20 : i1 to i32
    %39 = vector.broadcast %38 : i32 to vector<1x16x32xi32>
    %40 = arith.addi %37, %39 : vector<1x16x32xi32>
    %c0_i32_15 = arith.constant 0 : i32
    %41 = vector.broadcast %c0_i32_15 : i32 to vector<1x16x32xi32>
    %42 = arith.cmpi sgt, %40, %41 : vector<1x16x32xi32>
    %cst_16 = arith.constant 0.000000e+00 : bf16
    %43 = vector.broadcast %cst_16 : bf16 to vector<1x16x32xbf16>
    %44 = arith.select %42, %36, %43 : vector<1x16x32xi1>, vector<1x16x32xbf16>
    %c1_i32 = arith.constant 1 : i32
    %45 = arith.cmpi slt, %arg1, %c1_i32 : i32
    %c0_17 = arith.constant 0 : index
    %c0_18 = arith.constant 0 : index
    %c0_19 = arith.constant 0 : index
    %c0_20 = arith.constant 0 : index
    %46 = vector.load %arg4[%c0_17, %c0_18, %c0_19, %c0_20] : memref<1x1x16x32xbf16, #tpu.memory_space<vmem>>, vector<1x1x16x32xbf16>
    %47 = vector.shape_cast %46 : vector<1x1x16x32xbf16> to vector<1x16x32xbf16>
    %48 = arith.extf %47 : vector<1x16x32xbf16> to vector<1x16x32xf32>
    %49 = vector.shape_cast %1 : vector<1x32xf32> to vector<1x1x32xf32>
    %50 = vector.broadcast %49 : vector<1x1x32xf32> to vector<1x16x32xf32>
    %51 = arith.mulf %48, %50 : vector<1x16x32xf32>
    %52 = vector.shape_cast %3 : vector<1x32xf32> to vector<1x1x32xf32>
    %53 = vector.broadcast %52 : vector<1x1x32xf32> to vector<1x16x32xf32>
    %54 = arith.addf %51, %53 : vector<1x16x32xf32>
    %55 = arith.negf %54 : vector<1x16x32xf32>
    %56 = math.exp %55 : vector<1x16x32xf32>
    %cst_21 = arith.constant 1.000000e+00 : f32
    %57 = vector.broadcast %cst_21 : f32 to vector<1x16x32xf32>
    %58 = arith.addf %57, %56 : vector<1x16x32xf32>
    %59 = arith.divf %57, %58 : vector<1x16x32xf32>
    %60 = arith.mulf %54, %59 : vector<1x16x32xf32>
    %61 = arith.truncf %60 : vector<1x16x32xf32> to vector<1x16x32xbf16>
    %c0_i32_22 = arith.constant 0 : i32
    %62 = vector.broadcast %c0_i32_22 : i32 to vector<1x16x32xi32>
    %63 = arith.extui %45 : i1 to i32
    %64 = vector.broadcast %63 : i32 to vector<1x16x32xi32>
    %65 = arith.addi %62, %64 : vector<1x16x32xi32>
    %c0_i32_23 = arith.constant 0 : i32
    %66 = vector.broadcast %c0_i32_23 : i32 to vector<1x16x32xi32>
    %67 = arith.cmpi sgt, %65, %66 : vector<1x16x32xi32>
    %cst_24 = arith.constant 0.000000e+00 : bf16
    %68 = vector.broadcast %cst_24 : bf16 to vector<1x16x32xbf16>
    %69 = arith.select %67, %61, %68 : vector<1x16x32xi1>, vector<1x16x32xbf16>
    %70 = tpu.concatenate %44, %19, %69 in 0 : vector<1x16x32xbf16>, vector<8x16x32xbf16>, vector<1x16x32xbf16> -> vector<10x16x32xbf16>
    %cst_25 = arith.constant 0.000000e+00 : bf16
    %71 = vector.broadcast %cst_25 : bf16 to vector<10x1x32xbf16>
    %72 = vector.extract_strided_slice %70 {offsets = [0, 0, 0], sizes = [10, 15, 32], strides = [1, 1, 1]} : vector<10x16x32xbf16> to vector<10x15x32xbf16>
    %73 = tpu.concatenate %71, %72 in 1 : vector<10x1x32xbf16>, vector<10x15x32xbf16> -> vector<10x16x32xbf16>
    %74 = vector.extract_strided_slice %70 {offsets = [0, 1, 0], sizes = [10, 15, 32], strides = [1, 1, 1]} : vector<10x16x32xbf16> to vector<10x15x32xbf16>
    %75 = tpu.concatenate %74, %71 in 1 : vector<10x15x32xbf16>, vector<10x1x32xbf16> -> vector<10x16x32xbf16>
    %cst_26 = arith.constant 0.000000e+00 : f32
    %76 = vector.broadcast %cst_26 : f32 to vector<128x64xf32>
    %77 = tpu.concatenate %73, %70, %75 in 2 : vector<10x16x32xbf16>, vector<10x16x32xbf16>, vector<10x16x32xbf16> -> vector<10x16x96xbf16>
    %78 = vector.extract_strided_slice %77 {offsets = [0, 0, 0], sizes = [8, 16, 96], strides = [1, 1, 1]} : vector<10x16x96xbf16> to vector<8x16x96xbf16>
    %79 = vector.shape_cast %78 : vector<8x16x96xbf16> to vector<128x96xbf16>
    %c0_27 = arith.constant 0 : index
    %c0_28 = arith.constant 0 : index
    %c0_29 = arith.constant 0 : index
    %80 = vector.load %arg7[%c0_27, %c0_28, %c0_29] : memref<3x96x64xbf16, #tpu.memory_space<vmem>>, vector<1x96x64xbf16>
    %81 = vector.shape_cast %80 : vector<1x96x64xbf16> to vector<96x64xbf16>
    %cst_30 = arith.constant dense<0.000000e+00> : vector<128x64xf32>
    %82 = tpu.matmul %79, %81, %cst_30 {dimension_numbers = #tpu.dot_dimension_numbers<[1], [0], [0], [1], [0, 0, 1, 1], [], []>} : vector<128x96xbf16>, vector<96x64xbf16>, vector<128x64xf32> -> vector<128x64xf32>
    %83 = arith.addf %76, %82 : vector<128x64xf32>
    %84 = vector.extract_strided_slice %77 {offsets = [1, 0, 0], sizes = [8, 16, 96], strides = [1, 1, 1]} : vector<10x16x96xbf16> to vector<8x16x96xbf16>
    %85 = vector.shape_cast %84 : vector<8x16x96xbf16> to vector<128x96xbf16>
    %c1 = arith.constant 1 : index
    %c0_31 = arith.constant 0 : index
    %c0_32 = arith.constant 0 : index
    %86 = vector.load %arg7[%c1, %c0_31, %c0_32] : memref<3x96x64xbf16, #tpu.memory_space<vmem>>, vector<1x96x64xbf16>
    %87 = vector.shape_cast %86 : vector<1x96x64xbf16> to vector<96x64xbf16>
    %cst_33 = arith.constant dense<0.000000e+00> : vector<128x64xf32>
    %88 = tpu.matmul %85, %87, %cst_33 {dimension_numbers = #tpu.dot_dimension_numbers<[1], [0], [0], [1], [0, 0, 1, 1], [], []>} : vector<128x96xbf16>, vector<96x64xbf16>, vector<128x64xf32> -> vector<128x64xf32>
    %89 = arith.addf %83, %88 : vector<128x64xf32>
    %90 = vector.extract_strided_slice %77 {offsets = [2, 0, 0], sizes = [8, 16, 96], strides = [1, 1, 1]} : vector<10x16x96xbf16> to vector<8x16x96xbf16>
    %91 = vector.shape_cast %90 : vector<8x16x96xbf16> to vector<128x96xbf16>
    %c2 = arith.constant 2 : index
    %c0_34 = arith.constant 0 : index
    %c0_35 = arith.constant 0 : index
    %92 = vector.load %arg7[%c2, %c0_34, %c0_35] : memref<3x96x64xbf16, #tpu.memory_space<vmem>>, vector<1x96x64xbf16>
    %93 = vector.shape_cast %92 : vector<1x96x64xbf16> to vector<96x64xbf16>
    %cst_36 = arith.constant dense<0.000000e+00> : vector<128x64xf32>
    %94 = tpu.matmul %91, %93, %cst_36 {dimension_numbers = #tpu.dot_dimension_numbers<[1], [0], [0], [1], [0, 0, 1, 1], [], []>} : vector<128x96xbf16>, vector<96x64xbf16>, vector<128x64xf32> -> vector<128x64xf32>
    %95 = arith.addf %89, %94 : vector<128x64xf32>
    %c0_37 = arith.constant 0 : index
    %c0_38 = arith.constant 0 : index
    %96 = vector.load %arg8[%c0_37, %c0_38] : memref<1x64xf32, #tpu.memory_space<vmem>>, vector<1x64xf32>
    %97 = vector.broadcast %96 : vector<1x64xf32> to vector<128x64xf32>
    %98 = arith.addf %95, %97 : vector<128x64xf32>
    %99 = arith.truncf %98 : vector<128x64xf32> to vector<128x64xbf16>
    %100 = vector.shape_cast %99 : vector<128x64xbf16> to vector<8x16x64xbf16>
    %c0_39 = arith.constant 0 : index
    %c0_40 = arith.constant 0 : index
    %c0_41 = arith.constant 0 : index
    %c0_42 = arith.constant 0 : index
    %101 = vector.load %arg9[%c0_39, %c0_40, %c0_41, %c0_42] : memref<1x8x16x64xbf16, #tpu.memory_space<vmem>>, vector<1x8x16x64xbf16>
    %102 = vector.shape_cast %101 : vector<1x8x16x64xbf16> to vector<8x16x64xbf16>
    %103 = vector.shape_cast %100 : vector<8x16x64xbf16> to vector<1x8x16x64xbf16>
    tpu.vector_store %arg9[%c0_39, %c0_40, %c0_41, %c0_42], %103 {strides = array<i32>} : memref<1x8x16x64xbf16, #tpu.memory_space<vmem>>, vector<1x8x16x64xbf16>,
    %104 = arith.extf %99 : vector<128x64xbf16> to vector<128x64xf32>
    %cst_43 = arith.constant dense<0.000000e+00> : vector<64xf32>
    %105 = vector.multi_reduction <add>, %104, %cst_43 [0] : vector<128x64xf32> to vector<64xf32>
    %106 = vector.shape_cast %105 : vector<64xf32> to vector<1x64xf32>
    %c0_44 = arith.constant 0 : index
    %c0_45 = arith.constant 0 : index
    %c0_46 = arith.constant 0 : index
    %c0_47 = arith.constant 0 : index
    %107 = vector.load %arg10[%c0_44, %c0_45, %c0_46, %c0_47] : memref<1x1x1x64xf32, #tpu.memory_space<vmem>>, vector<1x1x1x64xf32>
    %108 = vector.shape_cast %107 : vector<1x1x1x64xf32> to vector<1x64xf32>
    %109 = vector.shape_cast %106 : vector<1x64xf32> to vector<1x1x1x64xf32>
    tpu.vector_store %arg10[%c0_44, %c0_45, %c0_46, %c0_47], %109 {strides = array<i32>} : memref<1x1x1x64xf32, #tpu.memory_space<vmem>>, vector<1x1x1x64xf32>,
    %110 = arith.mulf %104, %104 : vector<128x64xf32>
    %cst_48 = arith.constant dense<0.000000e+00> : vector<64xf32>
    %111 = vector.multi_reduction <add>, %110, %cst_48 [0] : vector<128x64xf32> to vector<64xf32>
    %112 = vector.shape_cast %111 : vector<64xf32> to vector<1x64xf32>
    %c0_49 = arith.constant 0 : index
    %c0_50 = arith.constant 0 : index
    %c0_51 = arith.constant 0 : index
    %c0_52 = arith.constant 0 : index
    %113 = vector.load %arg11[%c0_49, %c0_50, %c0_51, %c0_52] : memref<1x1x1x64xf32, #tpu.memory_space<vmem>>, vector<1x1x1x64xf32>
    %114 = vector.shape_cast %113 : vector<1x1x1x64xf32> to vector<1x64xf32>
    %115 = vector.shape_cast %112 : vector<1x64xf32> to vector<1x1x1x64xf32>
    tpu.vector_store %arg11[%c0_49, %c0_50, %c0_51, %c0_52], %115 {strides = array<i32>} : memref<1x1x1x64xf32, #tpu.memory_space<vmem>>, vector<1x1x1x64xf32>,
    return
  }
  func.func @transform_0(%arg0: i32, %arg1: i32) -> (i32, i32, i32, i32) {
    %c0_i32 = arith.constant 0 : i32
    %c0_i32_0 = arith.constant 0 : i32
    %c0_i32_1 = arith.constant 0 : i32
    return %arg0, %arg1, %c0_i32, %c0_i32_0 : i32, i32, i32, i32
  }
  func.func @transform_1(%arg0: i32, %arg1: i32) -> (i32, i32, i32, i32) {
    %c8_i32 = arith.constant 8 : i32
    %0 = arith.muli %arg1, %c8_i32 : i32
    %c1_i32 = arith.constant 1 : i32
    %1 = arith.subi %0, %c1_i32 : i32
    %c0_i32 = arith.constant 0 : i32
    %2 = arith.maxsi %1, %c0_i32 : i32
    %c0_i32_0 = arith.constant 0 : i32
    %c0_i32_1 = arith.constant 0 : i32
    %c0_i32_2 = arith.constant 0 : i32
    return %arg0, %2, %c0_i32_0, %c0_i32_1 : i32, i32, i32, i32
  }
  func.func @transform_2(%arg0: i32, %arg1: i32) -> (i32, i32, i32, i32) {
    %c1_i32 = arith.constant 1 : i32
    %0 = arith.addi %arg1, %c1_i32 : i32
    %c8_i32 = arith.constant 8 : i32
    %1 = arith.muli %0, %c8_i32 : i32
    %c15_i32 = arith.constant 15 : i32
    %2 = arith.minsi %1, %c15_i32 : i32
    %c0_i32 = arith.constant 0 : i32
    %c0_i32_0 = arith.constant 0 : i32
    %c0_i32_1 = arith.constant 0 : i32
    return %arg0, %2, %c0_i32, %c0_i32_0 : i32, i32, i32, i32
  }
  func.func @transform_3(%arg0: i32, %arg1: i32) -> (i32, i32, i32) {
    %c0_i32 = arith.constant 0 : i32
    %c0_i32_0 = arith.constant 0 : i32
    %c0_i32_1 = arith.constant 0 : i32
    return %arg0, %c0_i32, %c0_i32_0 : i32, i32, i32
  }
  func.func @transform_4(%arg0: i32, %arg1: i32) -> (i32, i32, i32) {
    %c0_i32 = arith.constant 0 : i32
    %c0_i32_0 = arith.constant 0 : i32
    %c0_i32_1 = arith.constant 0 : i32
    return %arg0, %c0_i32, %c0_i32_0 : i32, i32, i32
  }
  func.func @transform_5(%arg0: i32, %arg1: i32) -> (i32, i32, i32) {
    %c0_i32 = arith.constant 0 : i32
    %c0_i32_0 = arith.constant 0 : i32
    %c0_i32_1 = arith.constant 0 : i32
    %c0_i32_2 = arith.constant 0 : i32
    return %c0_i32, %c0_i32_0, %c0_i32_1 : i32, i32, i32
  }
  func.func @transform_6(%arg0: i32, %arg1: i32) -> (i32, i32) {
    %c0_i32 = arith.constant 0 : i32
    %c0_i32_0 = arith.constant 0 : i32
    %c0_i32_1 = arith.constant 0 : i32
    return %c0_i32, %c0_i32_0 : i32, i32
  }
  func.func @transform_7(%arg0: i32, %arg1: i32) -> (i32, i32, i32, i32) {
    %c0_i32 = arith.constant 0 : i32
    %c0_i32_0 = arith.constant 0 : i32
    %c0_i32_1 = arith.constant 0 : i32
    return %arg0, %arg1, %c0_i32, %c0_i32_0 : i32, i32, i32, i32
  }
  func.func @transform_8(%arg0: i32, %arg1: i32) -> (i32, i32, i32, i32) {
    %c0_i32 = arith.constant 0 : i32
    %c0_i32_0 = arith.constant 0 : i32
    %c0_i32_1 = arith.constant 0 : i32
    return %arg0, %arg1, %c0_i32, %c0_i32_0 : i32, i32, i32, i32
  }
  func.func @transform_9(%arg0: i32, %arg1: i32) -> (i32, i32, i32, i32) {
    %c0_i32 = arith.constant 0 : i32
    %c0_i32_0 = arith.constant 0 : i32
    %c0_i32_1 = arith.constant 0 : i32
    return %arg0, %arg1, %c0_i32, %c0_i32_0 : i32, i32, i32, i32
  }
}

module attributes {stable_mosaic.version = 11 : i64} {
  func.func @_fused_gn_silu_conv_kernel(%arg0: i32, %arg1: i32, %arg2: memref<1x8x16x64xbf16, #tpu.memory_space<vmem>>, %arg3: memref<1x1x16x64xbf16, #tpu.memory_space<vmem>>, %arg4: memref<1x1x16x64xbf16, #tpu.memory_space<vmem>>, %arg5: memref<1x1x64xf32, #tpu.memory_space<vmem>>, %arg6: memref<1x1x64xf32, #tpu.memory_space<vmem>>, %arg7: memref<3x192x64xbf16, #tpu.memory_space<vmem>>, %arg8: memref<1x64xf32, #tpu.memory_space<vmem>>, %arg9: memref<1x8x16x32xbf16, #tpu.memory_space<vmem>>, %arg10: memref<32x64xbf16, #tpu.memory_space<vmem>>, %arg11: memref<1x64xf32, #tpu.memory_space<vmem>>, %arg12: memref<1x8x16x64xf32, #tpu.memory_space<vmem>>) attributes {dimension_semantics = [#tpu.dimension_semantics<parallel>, #tpu.dimension_semantics<parallel>], iteration_bounds = array<i64: 2, 2>, scalar_prefetch = 0 : i64, scratch_operands = 0 : i64, tpu.core_type = #tpu.core_type<tc>, window_params = [{transform_indices = @transform_0, window_bounds = array<i64: 1, 8, 16, 64>}, {transform_indices = @transform_1, window_bounds = array<i64: 1, 1, 16, 64>}, {transform_indices = @transform_2, window_bounds = array<i64: 1, 1, 16, 64>}, {transform_indices = @transform_3, window_bounds = array<i64: 1, 1, 64>}, {transform_indices = @transform_4, window_bounds = array<i64: 1, 1, 64>}, {pipeline_mode = #tpu.pipeline_mode<synchronous>, transform_indices = @transform_5, window_bounds = array<i64: 3, 192, 64>}, {pipeline_mode = #tpu.pipeline_mode<synchronous>, transform_indices = @transform_6, window_bounds = array<i64: 1, 64>}, {transform_indices = @transform_7, window_bounds = array<i64: 1, 8, 16, 32>}, {pipeline_mode = #tpu.pipeline_mode<synchronous>, transform_indices = @transform_8, window_bounds = array<i64: 32, 64>}, {pipeline_mode = #tpu.pipeline_mode<synchronous>, transform_indices = @transform_9, window_bounds = array<i64: 1, 64>}, {transform_indices = @transform_10, window_bounds = array<i64: 1, 8, 16, 64>}]} {
    %c0 = arith.constant 0 : index
    %c0_0 = arith.constant 0 : index
    %c0_1 = arith.constant 0 : index
    %0 = vector.load %arg5[%c0, %c0_0, %c0_1] : memref<1x1x64xf32, #tpu.memory_space<vmem>>, vector<1x1x64xf32>
    %1 = vector.shape_cast %0 : vector<1x1x64xf32> to vector<1x64xf32>
    %c0_2 = arith.constant 0 : index
    %c0_3 = arith.constant 0 : index
    %c0_4 = arith.constant 0 : index
    %2 = vector.load %arg6[%c0_2, %c0_3, %c0_4] : memref<1x1x64xf32, #tpu.memory_space<vmem>>, vector<1x1x64xf32>
    %3 = vector.shape_cast %2 : vector<1x1x64xf32> to vector<1x64xf32>
    %c0_5 = arith.constant 0 : index
    %c0_6 = arith.constant 0 : index
    %c0_7 = arith.constant 0 : index
    %c0_8 = arith.constant 0 : index
    %4 = vector.load %arg2[%c0_5, %c0_6, %c0_7, %c0_8] : memref<1x8x16x64xbf16, #tpu.memory_space<vmem>>, vector<1x8x16x64xbf16>
    %5 = vector.shape_cast %4 : vector<1x8x16x64xbf16> to vector<8x16x64xbf16>
    %6 = arith.extf %5 : vector<8x16x64xbf16> to vector<8x16x64xf32>
    %7 = vector.shape_cast %1 : vector<1x64xf32> to vector<1x1x64xf32>
    %8 = vector.broadcast %7 : vector<1x1x64xf32> to vector<8x16x64xf32>
    %9 = arith.mulf %6, %8 : vector<8x16x64xf32>
    %10 = vector.shape_cast %3 : vector<1x64xf32> to vector<1x1x64xf32>
    %11 = vector.broadcast %10 : vector<1x1x64xf32> to vector<8x16x64xf32>
    %12 = arith.addf %9, %11 : vector<8x16x64xf32>
    %13 = arith.negf %12 : vector<8x16x64xf32>
    %14 = math.exp %13 : vector<8x16x64xf32>
    %cst = arith.constant 1.000000e+00 : f32
    %15 = vector.broadcast %cst : f32 to vector<8x16x64xf32>
    %16 = arith.addf %15, %14 : vector<8x16x64xf32>
    %17 = arith.divf %15, %16 : vector<8x16x64xf32>
    %18 = arith.mulf %12, %17 : vector<8x16x64xf32>
    %19 = arith.truncf %18 : vector<8x16x64xf32> to vector<8x16x64xbf16>
    %c0_i32 = arith.constant 0 : i32
    %20 = arith.cmpi sgt, %arg1, %c0_i32 : i32
    %c0_9 = arith.constant 0 : index
    %c0_10 = arith.constant 0 : index
    %c0_11 = arith.constant 0 : index
    %c0_12 = arith.constant 0 : index
    %21 = vector.load %arg3[%c0_9, %c0_10, %c0_11, %c0_12] : memref<1x1x16x64xbf16, #tpu.memory_space<vmem>>, vector<1x1x16x64xbf16>
    %22 = vector.shape_cast %21 : vector<1x1x16x64xbf16> to vector<1x16x64xbf16>
    %23 = arith.extf %22 : vector<1x16x64xbf16> to vector<1x16x64xf32>
    %24 = vector.shape_cast %1 : vector<1x64xf32> to vector<1x1x64xf32>
    %25 = vector.broadcast %24 : vector<1x1x64xf32> to vector<1x16x64xf32>
    %26 = arith.mulf %23, %25 : vector<1x16x64xf32>
    %27 = vector.shape_cast %3 : vector<1x64xf32> to vector<1x1x64xf32>
    %28 = vector.broadcast %27 : vector<1x1x64xf32> to vector<1x16x64xf32>
    %29 = arith.addf %26, %28 : vector<1x16x64xf32>
    %30 = arith.negf %29 : vector<1x16x64xf32>
    %31 = math.exp %30 : vector<1x16x64xf32>
    %cst_13 = arith.constant 1.000000e+00 : f32
    %32 = vector.broadcast %cst_13 : f32 to vector<1x16x64xf32>
    %33 = arith.addf %32, %31 : vector<1x16x64xf32>
    %34 = arith.divf %32, %33 : vector<1x16x64xf32>
    %35 = arith.mulf %29, %34 : vector<1x16x64xf32>
    %36 = arith.truncf %35 : vector<1x16x64xf32> to vector<1x16x64xbf16>
    %c0_i32_14 = arith.constant 0 : i32
    %37 = vector.broadcast %c0_i32_14 : i32 to vector<1x16x64xi32>
    %38 = arith.extui %20 : i1 to i32
    %39 = vector.broadcast %38 : i32 to vector<1x16x64xi32>
    %40 = arith.addi %37, %39 : vector<1x16x64xi32>
    %c0_i32_15 = arith.constant 0 : i32
    %41 = vector.broadcast %c0_i32_15 : i32 to vector<1x16x64xi32>
    %42 = arith.cmpi sgt, %40, %41 : vector<1x16x64xi32>
    %cst_16 = arith.constant 0.000000e+00 : bf16
    %43 = vector.broadcast %cst_16 : bf16 to vector<1x16x64xbf16>
    %44 = arith.select %42, %36, %43 : vector<1x16x64xi1>, vector<1x16x64xbf16>
    %c1_i32 = arith.constant 1 : i32
    %45 = arith.cmpi slt, %arg1, %c1_i32 : i32
    %c0_17 = arith.constant 0 : index
    %c0_18 = arith.constant 0 : index
    %c0_19 = arith.constant 0 : index
    %c0_20 = arith.constant 0 : index
    %46 = vector.load %arg4[%c0_17, %c0_18, %c0_19, %c0_20] : memref<1x1x16x64xbf16, #tpu.memory_space<vmem>>, vector<1x1x16x64xbf16>
    %47 = vector.shape_cast %46 : vector<1x1x16x64xbf16> to vector<1x16x64xbf16>
    %48 = arith.extf %47 : vector<1x16x64xbf16> to vector<1x16x64xf32>
    %49 = vector.shape_cast %1 : vector<1x64xf32> to vector<1x1x64xf32>
    %50 = vector.broadcast %49 : vector<1x1x64xf32> to vector<1x16x64xf32>
    %51 = arith.mulf %48, %50 : vector<1x16x64xf32>
    %52 = vector.shape_cast %3 : vector<1x64xf32> to vector<1x1x64xf32>
    %53 = vector.broadcast %52 : vector<1x1x64xf32> to vector<1x16x64xf32>
    %54 = arith.addf %51, %53 : vector<1x16x64xf32>
    %55 = arith.negf %54 : vector<1x16x64xf32>
    %56 = math.exp %55 : vector<1x16x64xf32>
    %cst_21 = arith.constant 1.000000e+00 : f32
    %57 = vector.broadcast %cst_21 : f32 to vector<1x16x64xf32>
    %58 = arith.addf %57, %56 : vector<1x16x64xf32>
    %59 = arith.divf %57, %58 : vector<1x16x64xf32>
    %60 = arith.mulf %54, %59 : vector<1x16x64xf32>
    %61 = arith.truncf %60 : vector<1x16x64xf32> to vector<1x16x64xbf16>
    %c0_i32_22 = arith.constant 0 : i32
    %62 = vector.broadcast %c0_i32_22 : i32 to vector<1x16x64xi32>
    %63 = arith.extui %45 : i1 to i32
    %64 = vector.broadcast %63 : i32 to vector<1x16x64xi32>
    %65 = arith.addi %62, %64 : vector<1x16x64xi32>
    %c0_i32_23 = arith.constant 0 : i32
    %66 = vector.broadcast %c0_i32_23 : i32 to vector<1x16x64xi32>
    %67 = arith.cmpi sgt, %65, %66 : vector<1x16x64xi32>
    %cst_24 = arith.constant 0.000000e+00 : bf16
    %68 = vector.broadcast %cst_24 : bf16 to vector<1x16x64xbf16>
    %69 = arith.select %67, %61, %68 : vector<1x16x64xi1>, vector<1x16x64xbf16>
    %70 = tpu.concatenate %44, %19, %69 in 0 : vector<1x16x64xbf16>, vector<8x16x64xbf16>, vector<1x16x64xbf16> -> vector<10x16x64xbf16>
    %cst_25 = arith.constant 0.000000e+00 : bf16
    %71 = vector.broadcast %cst_25 : bf16 to vector<10x1x64xbf16>
    %72 = vector.extract_strided_slice %70 {offsets = [0, 0, 0], sizes = [10, 15, 64], strides = [1, 1, 1]} : vector<10x16x64xbf16> to vector<10x15x64xbf16>
    %73 = tpu.concatenate %71, %72 in 1 : vector<10x1x64xbf16>, vector<10x15x64xbf16> -> vector<10x16x64xbf16>
    %74 = vector.extract_strided_slice %70 {offsets = [0, 1, 0], sizes = [10, 15, 64], strides = [1, 1, 1]} : vector<10x16x64xbf16> to vector<10x15x64xbf16>
    %75 = tpu.concatenate %74, %71 in 1 : vector<10x15x64xbf16>, vector<10x1x64xbf16> -> vector<10x16x64xbf16>
    %cst_26 = arith.constant 0.000000e+00 : f32
    %76 = vector.broadcast %cst_26 : f32 to vector<128x64xf32>
    %77 = tpu.concatenate %73, %70, %75 in 2 : vector<10x16x64xbf16>, vector<10x16x64xbf16>, vector<10x16x64xbf16> -> vector<10x16x192xbf16>
    %78 = vector.extract_strided_slice %77 {offsets = [0, 0, 0], sizes = [8, 16, 192], strides = [1, 1, 1]} : vector<10x16x192xbf16> to vector<8x16x192xbf16>
    %79 = vector.shape_cast %78 : vector<8x16x192xbf16> to vector<128x192xbf16>
    %c0_27 = arith.constant 0 : index
    %c0_28 = arith.constant 0 : index
    %c0_29 = arith.constant 0 : index
    %80 = vector.load %arg7[%c0_27, %c0_28, %c0_29] : memref<3x192x64xbf16, #tpu.memory_space<vmem>>, vector<1x192x64xbf16>
    %81 = vector.shape_cast %80 : vector<1x192x64xbf16> to vector<192x64xbf16>
    %cst_30 = arith.constant dense<0.000000e+00> : vector<128x64xf32>
    %82 = tpu.matmul %79, %81, %cst_30 {dimension_numbers = #tpu.dot_dimension_numbers<[1], [0], [0], [1], [0, 0, 1, 1], [], []>} : vector<128x192xbf16>, vector<192x64xbf16>, vector<128x64xf32> -> vector<128x64xf32>
    %83 = arith.addf %76, %82 : vector<128x64xf32>
    %84 = vector.extract_strided_slice %77 {offsets = [1, 0, 0], sizes = [8, 16, 192], strides = [1, 1, 1]} : vector<10x16x192xbf16> to vector<8x16x192xbf16>
    %85 = vector.shape_cast %84 : vector<8x16x192xbf16> to vector<128x192xbf16>
    %c1 = arith.constant 1 : index
    %c0_31 = arith.constant 0 : index
    %c0_32 = arith.constant 0 : index
    %86 = vector.load %arg7[%c1, %c0_31, %c0_32] : memref<3x192x64xbf16, #tpu.memory_space<vmem>>, vector<1x192x64xbf16>
    %87 = vector.shape_cast %86 : vector<1x192x64xbf16> to vector<192x64xbf16>
    %cst_33 = arith.constant dense<0.000000e+00> : vector<128x64xf32>
    %88 = tpu.matmul %85, %87, %cst_33 {dimension_numbers = #tpu.dot_dimension_numbers<[1], [0], [0], [1], [0, 0, 1, 1], [], []>} : vector<128x192xbf16>, vector<192x64xbf16>, vector<128x64xf32> -> vector<128x64xf32>
    %89 = arith.addf %83, %88 : vector<128x64xf32>
    %90 = vector.extract_strided_slice %77 {offsets = [2, 0, 0], sizes = [8, 16, 192], strides = [1, 1, 1]} : vector<10x16x192xbf16> to vector<8x16x192xbf16>
    %91 = vector.shape_cast %90 : vector<8x16x192xbf16> to vector<128x192xbf16>
    %c2 = arith.constant 2 : index
    %c0_34 = arith.constant 0 : index
    %c0_35 = arith.constant 0 : index
    %92 = vector.load %arg7[%c2, %c0_34, %c0_35] : memref<3x192x64xbf16, #tpu.memory_space<vmem>>, vector<1x192x64xbf16>
    %93 = vector.shape_cast %92 : vector<1x192x64xbf16> to vector<192x64xbf16>
    %cst_36 = arith.constant dense<0.000000e+00> : vector<128x64xf32>
    %94 = tpu.matmul %91, %93, %cst_36 {dimension_numbers = #tpu.dot_dimension_numbers<[1], [0], [0], [1], [0, 0, 1, 1], [], []>} : vector<128x192xbf16>, vector<192x64xbf16>, vector<128x64xf32> -> vector<128x64xf32>
    %95 = arith.addf %89, %94 : vector<128x64xf32>
    %c0_37 = arith.constant 0 : index
    %c0_38 = arith.constant 0 : index
    %96 = vector.load %arg8[%c0_37, %c0_38] : memref<1x64xf32, #tpu.memory_space<vmem>>, vector<1x64xf32>
    %97 = vector.broadcast %96 : vector<1x64xf32> to vector<128x64xf32>
    %98 = arith.addf %95, %97 : vector<128x64xf32>
    %c0_39 = arith.constant 0 : index
    %c0_40 = arith.constant 0 : index
    %c0_41 = arith.constant 0 : index
    %c0_42 = arith.constant 0 : index
    %99 = vector.load %arg9[%c0_39, %c0_40, %c0_41, %c0_42] : memref<1x8x16x32xbf16, #tpu.memory_space<vmem>>, vector<1x8x16x32xbf16>
    %100 = vector.shape_cast %99 : vector<1x8x16x32xbf16> to vector<8x16x32xbf16>
    %101 = vector.shape_cast %100 : vector<8x16x32xbf16> to vector<128x32xbf16>
    %c0_43 = arith.constant 0 : index
    %c0_44 = arith.constant 0 : index
    %102 = vector.load %arg10[%c0_43, %c0_44] : memref<32x64xbf16, #tpu.memory_space<vmem>>, vector<32x64xbf16>
    %cst_45 = arith.constant dense<0.000000e+00> : vector<128x64xf32>
    %103 = tpu.matmul %101, %102, %cst_45 {dimension_numbers = #tpu.dot_dimension_numbers<[1], [0], [0], [1], [0, 0, 1, 1], [], []>} : vector<128x32xbf16>, vector<32x64xbf16>, vector<128x64xf32> -> vector<128x64xf32>
    %104 = arith.addf %98, %103 : vector<128x64xf32>
    %c0_46 = arith.constant 0 : index
    %c0_47 = arith.constant 0 : index
    %105 = vector.load %arg11[%c0_46, %c0_47] : memref<1x64xf32, #tpu.memory_space<vmem>>, vector<1x64xf32>
    %106 = vector.broadcast %105 : vector<1x64xf32> to vector<128x64xf32>
    %107 = arith.addf %104, %106 : vector<128x64xf32>
    %108 = vector.shape_cast %107 : vector<128x64xf32> to vector<8x16x64xf32>
    %c0_48 = arith.constant 0 : index
    %c0_49 = arith.constant 0 : index
    %c0_50 = arith.constant 0 : index
    %c0_51 = arith.constant 0 : index
    %109 = vector.load %arg12[%c0_48, %c0_49, %c0_50, %c0_51] : memref<1x8x16x64xf32, #tpu.memory_space<vmem>>, vector<1x8x16x64xf32>
    %110 = vector.shape_cast %109 : vector<1x8x16x64xf32> to vector<8x16x64xf32>
    %111 = vector.shape_cast %108 : vector<8x16x64xf32> to vector<1x8x16x64xf32>
    tpu.vector_store %arg12[%c0_48, %c0_49, %c0_50, %c0_51], %111 {strides = array<i32>} : memref<1x8x16x64xf32, #tpu.memory_space<vmem>>, vector<1x8x16x64xf32>,
    return
  }
  func.func @transform_0(%arg0: i32, %arg1: i32) -> (i32, i32, i32, i32) {
    %c0_i32 = arith.constant 0 : i32
    %c0_i32_0 = arith.constant 0 : i32
    %c0_i32_1 = arith.constant 0 : i32
    return %arg0, %arg1, %c0_i32, %c0_i32_0 : i32, i32, i32, i32
  }
  func.func @transform_1(%arg0: i32, %arg1: i32) -> (i32, i32, i32, i32) {
    %c8_i32 = arith.constant 8 : i32
    %0 = arith.muli %arg1, %c8_i32 : i32
    %c1_i32 = arith.constant 1 : i32
    %1 = arith.subi %0, %c1_i32 : i32
    %c0_i32 = arith.constant 0 : i32
    %2 = arith.maxsi %1, %c0_i32 : i32
    %c0_i32_0 = arith.constant 0 : i32
    %c0_i32_1 = arith.constant 0 : i32
    %c0_i32_2 = arith.constant 0 : i32
    return %arg0, %2, %c0_i32_0, %c0_i32_1 : i32, i32, i32, i32
  }
  func.func @transform_2(%arg0: i32, %arg1: i32) -> (i32, i32, i32, i32) {
    %c1_i32 = arith.constant 1 : i32
    %0 = arith.addi %arg1, %c1_i32 : i32
    %c8_i32 = arith.constant 8 : i32
    %1 = arith.muli %0, %c8_i32 : i32
    %c15_i32 = arith.constant 15 : i32
    %2 = arith.minsi %1, %c15_i32 : i32
    %c0_i32 = arith.constant 0 : i32
    %c0_i32_0 = arith.constant 0 : i32
    %c0_i32_1 = arith.constant 0 : i32
    return %arg0, %2, %c0_i32, %c0_i32_0 : i32, i32, i32, i32
  }
  func.func @transform_3(%arg0: i32, %arg1: i32) -> (i32, i32, i32) {
    %c0_i32 = arith.constant 0 : i32
    %c0_i32_0 = arith.constant 0 : i32
    %c0_i32_1 = arith.constant 0 : i32
    return %arg0, %c0_i32, %c0_i32_0 : i32, i32, i32
  }
  func.func @transform_4(%arg0: i32, %arg1: i32) -> (i32, i32, i32) {
    %c0_i32 = arith.constant 0 : i32
    %c0_i32_0 = arith.constant 0 : i32
    %c0_i32_1 = arith.constant 0 : i32
    return %arg0, %c0_i32, %c0_i32_0 : i32, i32, i32
  }
  func.func @transform_5(%arg0: i32, %arg1: i32) -> (i32, i32, i32) {
    %c0_i32 = arith.constant 0 : i32
    %c0_i32_0 = arith.constant 0 : i32
    %c0_i32_1 = arith.constant 0 : i32
    %c0_i32_2 = arith.constant 0 : i32
    return %c0_i32, %c0_i32_0, %c0_i32_1 : i32, i32, i32
  }
  func.func @transform_6(%arg0: i32, %arg1: i32) -> (i32, i32) {
    %c0_i32 = arith.constant 0 : i32
    %c0_i32_0 = arith.constant 0 : i32
    %c0_i32_1 = arith.constant 0 : i32
    return %c0_i32, %c0_i32_0 : i32, i32
  }
  func.func @transform_7(%arg0: i32, %arg1: i32) -> (i32, i32, i32, i32) {
    %c0_i32 = arith.constant 0 : i32
    %c0_i32_0 = arith.constant 0 : i32
    %c0_i32_1 = arith.constant 0 : i32
    return %arg0, %arg1, %c0_i32, %c0_i32_0 : i32, i32, i32, i32
  }
  func.func @transform_8(%arg0: i32, %arg1: i32) -> (i32, i32) {
    %c0_i32 = arith.constant 0 : i32
    %c0_i32_0 = arith.constant 0 : i32
    %c0_i32_1 = arith.constant 0 : i32
    return %c0_i32, %c0_i32_0 : i32, i32
  }
  func.func @transform_9(%arg0: i32, %arg1: i32) -> (i32, i32) {
    %c0_i32 = arith.constant 0 : i32
    %c0_i32_0 = arith.constant 0 : i32
    %c0_i32_1 = arith.constant 0 : i32
    return %c0_i32, %c0_i32_0 : i32, i32
  }
  func.func @transform_10(%arg0: i32, %arg1: i32) -> (i32, i32, i32, i32) {
    %c0_i32 = arith.constant 0 : i32
    %c0_i32_0 = arith.constant 0 : i32
    %c0_i32_1 = arith.constant 0 : i32
    return %arg0, %arg1, %c0_i32, %c0_i32_0 : i32, i32, i32, i32
  }
}

</mosaic_0001>

<llo_original>
// kernel: _lambda_.3
$region0: #{_lambda_.3}
  #allocation0 [shape = 'u32[]', space=smem, size = 0x4, offset = 0x4, fixed_abs, tag = 'smem constant byte address 0x4 - core index']
  #allocation1 [shape = 'u32[144,128]{1,0:T(1,128)}', space=vmem, size = 0x12000, scoped, tag = 'internal scratch']
  %s0 = inlined_call_operand.vmem [shape: bf16[2,16,16,32], index: 0, kind: input, shape index: {}]
  %s1 = inlined_call_operand.vmem [shape: f32[2,1,32], index: 1, kind: output, shape index: {0}]
  %s2 = inlined_call_operand.vmem [shape: f32[2,1,32], index: 2, kind: output, shape index: {1}]
  %3 = xla_tuple %s1, %s2
  %s4 = sld [smem:[#allocation0]]
  $region49: #{_lambda_.3} parent=0
    _
  %s6 = ssub.s32 1, %s4
  %s7 = scalar_select 0, %s6, %s4
  loop: start=0, step=1, limit=4
  $region2: #{_lambda_.3} parent=0 // loop_pre_header
    _
  $region3: #{_lambda_.3} parent=0 // loop_header
    %s9 = sphi 0, %s13
    %p10 = scmp.ge.s32.totalorder %s9, 4
    %s16 = sphi 0, %s28
    %s17 = sphi 0, %s24
    %s18 = sphi 0, %s16
    %s19 = sphi 0, %s17
    %s20 = sphi 0, %s18
    %s21 = sphi 0, %s19
    %s33 = sphi 0, %s35
    %s36 = sphi 0, %s33
    %s37 = sphi 0, %s36
    %s53 = sphi 0, %s37
    %s59 = sphi 0, %s61
    %s62 = sphi 0, %s59
    %s63 = sphi 0, %s62
    %s79 = sphi 0, %s63
    %s85 = sphi 0, %s87
    %s88 = sphi 0, %s85
    %s89 = sphi 0, %s88
    %s105 = sphi 0, %s89
  $region4: #{_lambda_.3} parent=0 // loop_header_branch
    %12 = sbr.rel (%p10) target = $region8
  $region5: #{_lambda_.3} parent=0 // loop_body
    %s14 = ssub.s32 %s9, 1
    %s15 = ssub.s32 %s9, 2
    %s22 = sadd.s32 1, %s17
    %p23 = scmp.ge.s32.totalorder %s22, 1
    %s24 = scalar_select %p23, 0, %s22
    %s25 = sadd.s32 1, %s16
    %s26 = scalar_select %p23, %s25, %s16
    %p27 = scmp.ge.s32.totalorder %s26, 2
    %s28 = scalar_select %p27, 0, %s26
    %s29 = ssub.s32 %s16, %s28
    %s30 = ssub.s32 %s17, %s24
    %s31 = sor.u32 %s29, %s30
    %p32 = scmp.eq.s32.totalorder %s31, 0
    %s34 = sadd.s32 %s33, 1
    %s35 = scalar_select %p32, %s33, %s34
    %p38 = pneg %p32
    %p39 = scmp.eq.s32.totalorder %s9, 1
    %p40 = por %p38, %p39
    %p41 = scmp.ne.s32.totalorder %s33, %s36
    %p42 = scmp.eq.s32.totalorder %s9, 0
    %p43 = por %p41, %p42
    %p44 = scmp.ne.s32.totalorder %s33, %s36
    %p45 = scmp.eq.s32.totalorder %s14, 1
    %p46 = por %p44, %p45
    %p47 = scmp.ne.s32.totalorder %s36, %s37
    %p48 = scmp.eq.s32.totalorder %s14, 0
    %p49 = por %p47, %p48
    %p50 = scmp.ne.s32.totalorder %s36, %s37
    %p51 = scmp.eq.s32.totalorder %s15, 1
    %p52 = por %p50, %p51
    %p54 = scmp.ne.s32.totalorder %s37, %s53
    %p55 = scmp.eq.s32.totalorder %s15, 0
    %p56 = por %p54, %p55
    %s57 = ssub.s32 %s16, %s28
    %p58 = scmp.eq.s32.totalorder %s57, 0
    %s60 = sadd.s32 %s59, 1
    %s61 = scalar_select %p58, %s59, %s60
    %p64 = pneg %p58
    %p65 = scmp.eq.s32.totalorder %s9, 1
    %p66 = por %p64, %p65
    %p67 = scmp.ne.s32.totalorder %s59, %s62
    %p68 = scmp.eq.s32.totalorder %s9, 0
    %p69 = por %p67, %p68
    %p70 = scmp.ne.s32.totalorder %s59, %s62
    %p71 = scmp.eq.s32.totalorder %s14, 1
    %p72 = por %p70, %p71
    %p73 = scmp.ne.s32.totalorder %s62, %s63
    %p74 = scmp.eq.s32.totalorder %s14, 0
    %p75 = por %p73, %p74
    %p76 = scmp.ne.s32.totalorder %s62, %s63
    %p77 = scmp.eq.s32.totalorder %s15, 1
    %p78 = por %p76, %p77
    %p80 = scmp.ne.s32.totalorder %s63, %s79
    %p81 = scmp.eq.s32.totalorder %s15, 0
    %p82 = por %p80, %p81
    %s83 = ssub.s32 %s16, %s28
    %p84 = scmp.eq.s32.totalorder %s83, 0
    %s86 = sadd.s32 %s85, 1
    %s87 = scalar_select %p84, %s85, %s86
    %p90 = pneg %p84
    %p91 = scmp.eq.s32.totalorder %s9, 1
    %p92 = por %p90, %p91
    %p93 = scmp.ne.s32.totalorder %s85, %s88
    %p94 = scmp.eq.s32.totalorder %s9, 0
    %p95 = por %p93, %p94
    %p96 = scmp.ne.s32.totalorder %s85, %s88
    %p97 = scmp.eq.s32.totalorder %s14, 1
    %p98 = por %p96, %p97
    %p99 = scmp.ne.s32.totalorder %s88, %s89
    %p100 = scmp.eq.s32.totalorder %s14, 0
    %p101 = por %p99, %p100
    %p102 = scmp.ne.s32.totalorder %s88, %s89
    %p103 = scmp.eq.s32.totalorder %s15, 1
    %p104 = por %p102, %p103
    %p106 = scmp.ne.s32.totalorder %s89, %s105
    %p107 = scmp.eq.s32.totalorder %s15, 0
    %p108 = por %p106, %p107
    %p109 = scmp.le.s32.totalorder 1, %s9
    %p110 = scmp.lt.s32.totalorder %s9, 3
    %p111 = pnand %p109, %p110
    %p112 = pneg %p111
    // Predicated region
    $region9: #{_lambda_.3} parent=5 // pred_check
      _
    $region10: #{_lambda_.3} parent=5 // pred_check_branch
      %114 = sbr.rel (%p111) target = $region12
    $region11: #{_lambda_.3} parent=5 // pred_region
      %s115 = ssub.s32 %s9, 1
    $region12: #{_lambda_.3} parent=5 // pred_fallthru
      _
    %p116 = scmp.lt.s32.totalorder %s9, 2
    // Predicated region
    $region13: #{_lambda_.3} parent=5 // pred_check
      %p117 = pneg %p116
    $region14: #{_lambda_.3} parent=5 // pred_check_branch
      %119 = sbr.rel (%p117) target = $region16
    $region15: #{_lambda_.3} parent=5 // pred_region
      // Predicated region
      $region17: #{_lambda_.3} parent=15 // pred_check
        %p120 = pneg %p43
      $region18: #{_lambda_.3} parent=15 // pred_check_branch
        %122 = sbr.rel (%p120) target = $region20
      $region19: #{_lambda_.3} parent=15 // pred_region
        %s123 = smul.u32 16, %s17
        %p124 = scmp.lt.s32.totalorder %s16, 1
        %s125 = scalar_select %p124, %s16, 1
        %p126 = scmp.lt.s32.totalorder %s123, 15
        %s127 = scalar_select %p126, %s123, 15
        %s128 = smul.addr %s127, 2
        %s129 = smul.addr %s125, 32
        %s130 = sadd.s32 %s128, %s129
        %s131 = smul.addr %s130, 4
        %s132 = scalar_lea.vmem %s0, %s131
        %s133 = smul.u32 16, %s17
      $region20: #{_lambda_.3} parent=15 // pred_fallthru
        _
    $region16: #{_lambda_.3} parent=5 // pred_fallthru
      _
    %p134 = scmp.le.s32.totalorder 1, %s9
    %p135 = scmp.lt.s32.totalorder %s9, 3
    %p136 = pnand %p134, %p135
    %p137 = pneg %p136
    // Predicated region
    $region21: #{_lambda_.3} parent=5 // pred_check
      _
    $region22: #{_lambda_.3} parent=5 // pred_check_branch
      %139 = sbr.rel (%p136) target = $region24
    $region23: #{_lambda_.3} parent=5 // pred_region
      %s140 = ssub.s32 %s9, 1
      %s141 = smul.u32 16, %s19
      %p142 = scmp.lt.s32.totalorder %s18, 1
      %s143 = scalar_select %p142, %s18, 1
      %p144 = scmp.lt.s32.totalorder %s141, 15
      %s145 = scalar_select %p144, %s141, 15
      %s146 = smul.addr %s145, 2
      %s147 = smul.addr %s143, 32
      %s148 = sadd.s32 %s146, %s147
      %s149 = smul.addr %s148, 4
      %s150 = scalar_lea.vmem %s0, %s149
      %p151 = pneg %p49
      %p152 = pneg %p46
      %p153 = pneg %p75
      %p154 = pneg %p72
      %p155 = scmp.lt.s32.totalorder %s18, 1
      %s156 = scalar_select %p155, %s18, 1
      %s157 = scalar_lea.vmem %s1, %s156
      %p158 = pneg %p101
      %p159 = pneg %p98
      %p160 = scmp.lt.s32.totalorder %s18, 1
      %s161 = scalar_select %p160, %s18, 1
      %s162 = scalar_lea.vmem %s2, %s161
      %s163 = smul.u32 16, %s19
      %p164 = scmp.lt.s32.totalorder %s18, 1
      %s165 = scalar_select %p164, %s18, 1
      %p166 = scmp.lt.s32.totalorder %s163, 15
      %s167 = scalar_select %p166, %s163, 15
      %s168 = smul.addr %s167, 2
      %s169 = smul.addr %s165, 32
      %s170 = sadd.s32 %s168, %s169
      %s171 = smul.addr %s170, 4
      %s172 = scalar_lea.vmem %s0, %s171
      %s173 = smul.u32 16, %s19
      %p174 = scmp.lt.s32.totalorder %s18, 1
      %s175 = scalar_select %p174, %s18, 1
      %s176 = scalar_lea.vmem %s1, %s175
      %p177 = scmp.lt.s32.totalorder %s18, 1
      %s178 = scalar_select %p177, %s18, 1
      %s179 = scalar_lea.vmem %s2, %s178
      %p180 = scmp.eq.s32.totalorder %s19, 0
      // Predicated region
      $region25: #{_lambda_.3} parent=23 // pred_check
        %p181 = pneg %p180
      $region26: #{_lambda_.3} parent=23 // pred_check_branch
        %183 = sbr.rel (%p181) target = $region28
      $region27: #{_lambda_.3} parent=23 // pred_region
        %vm184 = vcmask 253952
        %185 = vst.msk [vmem:[%s176] sm:$0x1] %vm184, 0.0
        %186 = vst.msk [vmem:[%s179] sm:$0x1] %vm184, 0.0
      $region28: #{_lambda_.3} parent=23 // pred_fallthru
        _
      %v187 = vld [vmem:[%s172] sm:$0xf]
      %v188 = vld [vmem:[%s172 + $0x4] sm:$0xf]
      %v189 = vld [vmem:[%s172 + $0x8] sm:$0xf]
      %v190 = vld [vmem:[%s172 + $0xc] sm:$0xf]
      %v191 = vld [vmem:[%s172 + $0x10] sm:$0xf]
      %v192 = vld [vmem:[%s172 + $0x14] sm:$0xf]
      %v193 = vld [vmem:[%s172 + $0x18] sm:$0xf]
      %v194 = vld [vmem:[%s172 + $0x1c] sm:$0xf]
      %v195 = vld [vmem:[%s172 + $0x20] sm:$0xf]
      %v196 = vld [vmem:[%s172 + $0x24] sm:$0xf]
      %v197 = vld [vmem:[%s172 + $0x28] sm:$0xf]
      %v198 = vld [vmem:[%s172 + $0x2c] sm:$0xf]
      %v199 = vld [vmem:[%s172 + $0x30] sm:$0xf]
      %v200 = vld [vmem:[%s172 + $0x34] sm:$0xf]
      %v201 = vld [vmem:[%s172 + $0x38] sm:$0xf]
      %v202 = vld [vmem:[%s172 + $0x3c] sm:$0xf]
      %v203 = vld [vmem:[%s172 + $0x40] sm:$0xf]
      %v204 = vld [vmem:[%s172 + $0x44] sm:$0xf]
      %v205 = vld [vmem:[%s172 + $0x48] sm:$0xf]
      %v206 = vld [vmem:[%s172 + $0x4c] sm:$0xf]
      %v207 = vld [vmem:[%s172 + $0x50] sm:$0xf]
      %v208 = vld [vmem:[%s172 + $0x54] sm:$0xf]
      %v209 = vld [vmem:[%s172 + $0x58] sm:$0xf]
      %v210 = vld [vmem:[%s172 + $0x5c] sm:$0xf]
      %v211 = vld [vmem:[%s172 + $0x60] sm:$0xf]
      %v212 = vld [vmem:[%s172 + $0x64] sm:$0xf]
      %v213 = vld [vmem:[%s172 + $0x68] sm:$0xf]
      %v214 = vld [vmem:[%s172 + $0x6c] sm:$0xf]
      %v215 = vld [vmem:[%s172 + $0x70] sm:$0xf]
      %v216 = vld [vmem:[%s172 + $0x74] sm:$0xf]
      %v217 = vld [vmem:[%s172 + $0x78] sm:$0xf]
      %v218 = vld [vmem:[%s172 + $0x7c] sm:$0xf]
      %v219 = vunpack.c.l.bf16 %v187
      %v220 = vunpack.c.l.bf16 %v188
      %v221 = vunpack.c.l.bf16 %v189
      %v222 = vunpack.c.l.bf16 %v190
      %v223 = vunpack.c.l.bf16 %v191
      %v224 = vunpack.c.l.bf16 %v192
      %v225 = vunpack.c.l.bf16 %v193
      %v226 = vunpack.c.l.bf16 %v194
      %v227 = vunpack.c.l.bf16 %v195
      %v228 = vunpack.c.l.bf16 %v196
      %v229 = vunpack.c.l.bf16 %v197
      %v230 = vunpack.c.l.bf16 %v198
      %v231 = vunpack.c.l.bf16 %v199
      %v232 = vunpack.c.l.bf16 %v200
      %v233 = vunpack.c.l.bf16 %v201
      %v234 = vunpack.c.l.bf16 %v202
      %v235 = vunpack.c.l.bf16 %v203
      %v236 = vunpack.c.l.bf16 %v204
      %v237 = vunpack.c.l.bf16 %v205
      %v238 = vunpack.c.l.bf16 %v206
      %v239 = vunpack.c.l.bf16 %v207
      %v240 = vunpack.c.l.bf16 %v208
      %v241 = vunpack.c.l.bf16 %v209
      %v242 = vunpack.c.l.bf16 %v210
      %v243 = vunpack.c.l.bf16 %v211
      %v244 = vunpack.c.l.bf16 %v212
      %v245 = vunpack.c.l.bf16 %v213
      %v246 = vunpack.c.l.bf16 %v214
      %v247 = vunpack.c.l.bf16 %v215
      %v248 = vunpack.c.l.bf16 %v216
      %v249 = vunpack.c.l.bf16 %v217
      %v250 = vunpack.c.l.bf16 %v218
      %v251 = vld [vmem:[%s176] sm:$0x1]
      %vm252 = vcmask 261120
      %v253 = vsel %vm252, %v219, 0.0
      %v254 = vsel %vm252, %v220, 0.0
      %v255 = vadd.f32 %v253, %v254
      %v256 = vsel %vm252, %v221, 0.0
      %v257 = vadd.f32 %v255, %v256
      %v258 = vsel %vm252, %v222, 0.0
      %v259 = vadd.f32 %v257, %v258
      %v260 = vsel %vm252, %v223, 0.0
      %v261 = vadd.f32 %v259, %v260
      %v262 = vsel %vm252, %v224, 0.0
      %v263 = vadd.f32 %v261, %v262
      %v264 = vsel %vm252, %v225, 0.0
      %v265 = vadd.f32 %v263, %v264
      %v266 = vsel %vm252, %v226, 0.0
      %v267 = vadd.f32 %v265, %v266
      %v268 = vsel %vm252, %v227, 0.0
      %v269 = vadd.f32 %v267, %v268
      %v270 = vsel %vm252, %v228, 0.0
      %v271 = vadd.f32 %v269, %v270
      %v272 = vsel %vm252, %v229, 0.0
      %v273 = vadd.f32 %v271, %v272
      %v274 = vsel %vm252, %v230, 0.0
      %v275 = vadd.f32 %v273, %v274
      %v276 = vsel %vm252, %v231, 0.0
      %v277 = vadd.f32 %v275, %v276
      %v278 = vsel %vm252, %v232, 0.0
      %v279 = vadd.f32 %v277, %v278
      %v280 = vsel %vm252, %v233, 0.0
      %v281 = vadd.f32 %v279, %v280
      %v282 = vsel %vm252, %v234, 0.0
      %v283 = vadd.f32 %v281, %v282
      %v284 = vsel %vm252, %v235, 0.0
      %v285 = vadd.f32 %v283, %v284
      %v286 = vsel %vm252, %v236, 0.0
      %v287 = vadd.f32 %v285, %v286
      %v288 = vsel %vm252, %v237, 0.0
      %v289 = vadd.f32 %v287, %v288
      %v290 = vsel %vm252, %v238, 0.0
      %v291 = vadd.f32 %v289, %v290
      %v292 = vsel %vm252, %v239, 0.0
      %v293 = vadd.f32 %v291, %v292
      %v294 = vsel %vm252, %v240, 0.0
      %v295 = vadd.f32 %v293, %v294
      %v296 = vsel %vm252, %v241, 0.0
      %v297 = vadd.f32 %v295, %v296
      %v298 = vsel %vm252, %v242, 0.0
      %v299 = vadd.f32 %v297, %v298
      %v300 = vsel %vm252, %v243, 0.0
      %v301 = vadd.f32 %v299, %v300
      %v302 = vsel %vm252, %v244, 0.0
      %v303 = vadd.f32 %v301, %v302
      %v304 = vsel %vm252, %v245, 0.0
      %v305 = vadd.f32 %v303, %v304
      %v306 = vsel %vm252, %v246, 0.0
      %v307 = vadd.f32 %v305, %v306
      %v308 = vsel %vm252, %v247, 0.0
      %v309 = vadd.f32 %v307, %v308
      %v310 = vsel %vm252, %v248, 0.0
      %v311 = vadd.f32 %v309, %v310
      %v312 = vsel %vm252, %v249, 0.0
      %v313 = vadd.f32 %v311, %v312
      %v314 = vsel %vm252, %v250, 0.0
      %v315 = vadd.f32 %v313, %v314
      %v316 = vrot.slane %v315, 4
      %v317 = vadd.f32 %v315, %v316
      %v318 = vrot.slane %v317, 2
      %v319 = vadd.f32 %v317, %v318
      %v320 = vrot.slane %v319, 1
      %v321 = vadd.f32 %v319, %v320
      %v322 = vadd.f32 %v251, %v321
      %vm323 = vcmask 253952
      %324 = vst.msk [vmem:[%s176] sm:$0x1] %vm323, %v322
      %v325 = vld [vmem:[%s179] sm:$0x1]
      %v326 = vmul.f32 %v219, %v219
      %v327 = vmul.f32 %v220, %v220
      %v328 = vmul.f32 %v221, %v221
      %v329 = vmul.f32 %v222, %v222
      %v330 = vmul.f32 %v223, %v223
      %v331 = vmul.f32 %v224, %v224
      %v332 = vmul.f32 %v225, %v225
      %v333 = vmul.f32 %v226, %v226
      %v334 = vmul.f32 %v227, %v227
      %v335 = vmul.f32 %v228, %v228
      %v336 = vmul.f32 %v229, %v229
      %v337 = vmul.f32 %v230, %v230
      %v338 = vmul.f32 %v231, %v231
      %v339 = vmul.f32 %v232, %v232
      %v340 = vmul.f32 %v233, %v233
      %v341 = vmul.f32 %v234, %v234
      %v342 = vmul.f32 %v235, %v235
      %v343 = vmul.f32 %v236, %v236
      %v344 = vmul.f32 %v237, %v237
      %v345 = vmul.f32 %v238, %v238
      %v346 = vmul.f32 %v239, %v239
      %v347 = vmul.f32 %v240, %v240
      %v348 = vmul.f32 %v241, %v241
      %v349 = vmul.f32 %v242, %v242
      %v350 = vmul.f32 %v243, %v243
      %v351 = vmul.f32 %v244, %v244
      %v352 = vmul.f32 %v245, %v245
      %v353 = vmul.f32 %v246, %v246
      %v354 = vmul.f32 %v247, %v247
      %v355 = vmul.f32 %v248, %v248
      %v356 = vmul.f32 %v249, %v249
      %v357 = vmul.f32 %v250, %v250
      %v358 = vsel %vm252, %v326, 0.0
      %v359 = vsel %vm252, %v327, 0.0
      %v360 = vadd.f32 %v358, %v359
      %v361 = vsel %vm252, %v328, 0.0
      %v362 = vadd.f32 %v360, %v361
      %v363 = vsel %vm252, %v329, 0.0
      %v364 = vadd.f32 %v362, %v363
      %v365 = vsel %vm252, %v330, 0.0
      %v366 = vadd.f32 %v364, %v365
      %v367 = vsel %vm252, %v331, 0.0
      %v368 = vadd.f32 %v366, %v367
      %v369 = vsel %vm252, %v332, 0.0
      %v370 = vadd.f32 %v368, %v369
      %v371 = vsel %vm252, %v333, 0.0
      %v372 = vadd.f32 %v370, %v371
      %v373 = vsel %vm252, %v334, 0.0
      %v374 = vadd.f32 %v372, %v373
      %v375 = vsel %vm252, %v335, 0.0
      %v376 = vadd.f32 %v374, %v375
      %v377 = vsel %vm252, %v336, 0.0
      %v378 = vadd.f32 %v376, %v377
      %v379 = vsel %vm252, %v337, 0.0
      %v380 = vadd.f32 %v378, %v379
      %v381 = vsel %vm252, %v338, 0.0
      %v382 = vadd.f32 %v380, %v381
      %v383 = vsel %vm252, %v339, 0.0
      %v384 = vadd.f32 %v382, %v383
      %v385 = vsel %vm252, %v340, 0.0
      %v386 = vadd.f32 %v384, %v385
      %v387 = vsel %vm252, %v341, 0.0
      %v388 = vadd.f32 %v386, %v387
      %v389 = vsel %vm252, %v342, 0.0
      %v390 = vadd.f32 %v388, %v389
      %v391 = vsel %vm252, %v343, 0.0
      %v392 = vadd.f32 %v390, %v391
      %v393 = vsel %vm252, %v344, 0.0
      %v394 = vadd.f32 %v392, %v393
      %v395 = vsel %vm252, %v345, 0.0
      %v396 = vadd.f32 %v394, %v395
      %v397 = vsel %vm252, %v346, 0.0
      %v398 = vadd.f32 %v396, %v397
      %v399 = vsel %vm252, %v347, 0.0
      %v400 = vadd.f32 %v398, %v399
      %v401 = vsel %vm252, %v348, 0.0
      %v402 = vadd.f32 %v400, %v401
      %v403 = vsel %vm252, %v349, 0.0
      %v404 = vadd.f32 %v402, %v403
      %v405 = vsel %vm252, %v350, 0.0
      %v406 = vadd.f32 %v404, %v405
      %v407 = vsel %vm252, %v351, 0.0
      %v408 = vadd.f32 %v406, %v407
      %v409 = vsel %vm252, %v352, 0.0
      %v410 = vadd.f32 %v408, %v409
      %v411 = vsel %vm252, %v353, 0.0
      %v412 = vadd.f32 %v410, %v411
      %v413 = vsel %vm252, %v354, 0.0
      %v414 = vadd.f32 %v412, %v413
      %v415 = vsel %vm252, %v355, 0.0
      %v416 = vadd.f32 %v414, %v415
      %v417 = vsel %vm252, %v356, 0.0
      %v418 = vadd.f32 %v416, %v417
      %v419 = vsel %vm252, %v357, 0.0
      %v420 = vadd.f32 %v418, %v419
      %v421 = vrot.slane %v420, 4
      %v422 = vadd.f32 %v420, %v421
      %v423 = vrot.slane %v422, 2
      %v424 = vadd.f32 %v422, %v423
      %v425 = vrot.slane %v424, 1
      %v426 = vadd.f32 %v424, %v425
      %v427 = vadd.f32 %v325, %v426
      %428 = vst.msk [vmem:[%s179] sm:$0x1] %vm323, %v427
      %p429 = scmp.lt.s32.totalorder %s18, 1
      %s430 = scalar_select %p429, %s18, 1
      %s431 = scalar_lea.vmem %s1, %s430
      %p432 = scmp.lt.s32.totalorder %s18, 1
      %s433 = scalar_select %p432, %s18, 1
      %s434 = scalar_lea.vmem %s2, %s433
      // Predicated region
      $region29: #{_lambda_.3} parent=23 // pred_check
        %p435 = pneg %p72
      $region30: #{_lambda_.3} parent=23 // pred_check_branch
        %437 = sbr.rel (%p435) target = $region32
      $region31: #{_lambda_.3} parent=23 // pred_region
        _
      $region32: #{_lambda_.3} parent=23 // pred_fallthru
        _
      // Predicated region
      $region33: #{_lambda_.3} parent=23 // pred_check
        %p438 = pneg %p98
      $region34: #{_lambda_.3} parent=23 // pred_check_branch
        %440 = sbr.rel (%p438) target = $region36
      $region35: #{_lambda_.3} parent=23 // pred_region
        _
      $region36: #{_lambda_.3} parent=23 // pred_fallthru
        _
    $region24: #{_lambda_.3} parent=5 // pred_fallthru
      _
    %p441 = scmp.le.s32.totalorder 2, %s9
    // Predicated region
    $region37: #{_lambda_.3} parent=5 // pred_check
      %p442 = pneg %p441
    $region38: #{_lambda_.3} parent=5 // pred_check_branch
      %444 = sbr.rel (%p442) target = $region40
    $region39: #{_lambda_.3} parent=5 // pred_region
      %s445 = ssub.s32 %s9, 2
      // Predicated region
      $region41: #{_lambda_.3} parent=39 // pred_check
        %p446 = pneg %p78
      $region42: #{_lambda_.3} parent=39 // pred_check_branch
        %448 = sbr.rel (%p446) target = $region44
      $region43: #{_lambda_.3} parent=39 // pred_region
        %p449 = scmp.lt.s32.totalorder %s20, 1
        %s450 = scalar_select %p449, %s20, 1
        %s451 = scalar_lea.vmem %s1, %s450
      $region44: #{_lambda_.3} parent=39 // pred_fallthru
        _
      // Predicated region
      $region45: #{_lambda_.3} parent=39 // pred_check
        %p452 = pneg %p104
      $region46: #{_lambda_.3} parent=39 // pred_check_branch
        %454 = sbr.rel (%p452) target = $region48
      $region47: #{_lambda_.3} parent=39 // pred_region
        %p455 = scmp.lt.s32.totalorder %s20, 1
        %s456 = scalar_select %p455, %s20, 1
        %s457 = scalar_lea.vmem %s2, %s456
      $region48: #{_lambda_.3} parent=39 // pred_fallthru
        _
    $region40: #{_lambda_.3} parent=5 // pred_fallthru
      _
  $region6: #{_lambda_.3} parent=0 // loop_footer
    %s13 = sadd.s32 1, %s9
  $region7: #{_lambda_.3} parent=0 // loop_footer_branch
    %8 = sbr.rel target = $region3
  $region8: #{_lambda_.3} parent=0 // loop_exit
    _

// kernel: _lambda_.4
$region0: #{_lambda_.4}
  #allocation0 [shape = 'u32[]', space=smem, size = 0x4, offset = 0x4, fixed_abs, tag = 'smem constant byte address 0x4 - core index']
  #allocation1 [shape = 'u32[144,128]{1,0:T(1,128)}', space=vmem, size = 0x12000, scoped, tag = 'internal scratch']
  %s0 = inlined_call_operand.vmem [shape: bf16[2,16,16,32], index: 0, kind: input, shape index: {}, may-alias: {0,1,2}]
  %s1 = inlined_call_operand.vmem [shape: bf16[2,16,16,32], index: 1, kind: input, shape index: {}, may-alias: {0,1,2}]
  %s2 = inlined_call_operand.vmem [shape: bf16[2,16,16,32], index: 2, kind: input, shape index: {}, may-alias: {0,1,2}]
  %s3 = inlined_call_operand.vmem [shape: f32[2,1,32], index: 3, kind: input, shape index: {}]
  %s4 = inlined_call_operand.vmem [shape: f32[2,1,32], index: 4, kind: input, shape index: {}]
  %s5 = inlined_call_operand.vmem [shape: bf16[3,96,64], index: 5, kind: input, shape index: {}]
  %s6 = inlined_call_operand.vmem [shape: f32[1,64], index: 6, kind: input, shape index: {}]
  %s7 = inlined_call_operand.vmem [shape: bf16[2,16,16,64], index: 7, kind: output, shape index: {0}]
  %s8 = inlined_call_operand.vmem [shape: f32[2,2,1,64], index: 8, kind: output, shape index: {1}]
  %s9 = inlined_call_operand.vmem [shape: f32[2,2,1,64], index: 9, kind: output, shape index: {2}]
  %10 = xla_tuple %s7, %s8, %s9
  %s11 = sld [smem:[#allocation0]]
  $region77: #{_lambda_.4} parent=0
    _
  %s13 = ssub.s32 1, %s11
  %s14 = scalar_select 0, %s13, %s11
  loop: start=0, step=1, limit=6
  $region2: #{_lambda_.4} parent=0 // loop_pre_header
    _
  $region3: #{_lambda_.4} parent=0 // loop_header
    %s16 = sphi 0, %s20
    %p17 = scmp.ge.s32.totalorder %s16, 6
    %s23 = sphi 0, %s35
    %s24 = sphi 0, %s31
    %s25 = sphi 0, %s23
    %s26 = sphi 0, %s24
    %s27 = sphi 0, %s25
    %s28 = sphi 0, %s26
    %s40 = sphi 0, %s42
    %s43 = sphi 0, %s40
    %s44 = sphi 0, %s43
    %s60 = sphi 0, %s44
    %s76 = sphi 0, %s78
    %s79 = sphi 0, %s76
    %s80 = sphi 0, %s79
    %s96 = sphi 0, %s80
    %s112 = sphi 0, %s114
    %s115 = sphi 0, %s112
    %s116 = sphi 0, %s115
    %s132 = sphi 0, %s116
    %s138 = sphi 0, %s140
    %s141 = sphi 0, %s138
    %s142 = sphi 0, %s141
    %s158 = sphi 0, %s142
    %s164 = sphi 0, %s166
    %s167 = sphi 0, %s164
    %s168 = sphi 0, %s167
    %s184 = sphi 0, %s168
    %s188 = sphi 0, %s188
    %s190 = sphi 0, %s188
    %s191 = sphi 0, %s190
    %s205 = sphi 0, %s191
    %s209 = sphi 0, %s209
    %s211 = sphi 0, %s209
    %s212 = sphi 0, %s211
    %s226 = sphi 0, %s212
    %s234 = sphi 0, %s236
    %s237 = sphi 0, %s234
    %s238 = sphi 0, %s237
    %s254 = sphi 0, %s238
    %s262 = sphi 0, %s264
    %s265 = sphi 0, %s262
    %s266 = sphi 0, %s265
    %s282 = sphi 0, %s266
    %s290 = sphi 0, %s292
    %s293 = sphi 0, %s290
    %s294 = sphi 0, %s293
    %s310 = sphi 0, %s294
  $region4: #{_lambda_.4} parent=0 // loop_header_branch
    %19 = sbr.rel (%p17) target = $region8
  $region5: #{_lambda_.4} parent=0 // loop_body
    %s21 = ssub.s32 %s16, 1
    %s22 = ssub.s32 %s16, 2
    %s29 = sadd.s32 1, %s24
    %p30 = scmp.ge.s32.totalorder %s29, 2
    %s31 = scalar_select %p30, 0, %s29
    %s32 = sadd.s32 1, %s23
    %s33 = scalar_select %p30, %s32, %s23
    %p34 = scmp.ge.s32.totalorder %s33, 2
    %s35 = scalar_select %p34, 0, %s33
    %s36 = ssub.s32 %s23, %s35
    %s37 = ssub.s32 %s24, %s31
    %s38 = sor.u32 %s36, %s37
    %p39 = scmp.eq.s32.totalorder %s38, 0
    %s41 = sadd.s32 %s40, 1
    %s42 = scalar_select %p39, %s40, %s41
    %p45 = pneg %p39
    %p46 = scmp.eq.s32.totalorder %s16, 3
    %p47 = por %p45, %p46
    %p48 = scmp.ne.s32.totalorder %s40, %s43
    %p49 = scmp.eq.s32.totalorder %s16, 0
    %p50 = por %p48, %p49
    %p51 = scmp.ne.s32.totalorder %s40, %s43
    %p52 = scmp.eq.s32.totalorder %s21, 3
    %p53 = por %p51, %p52
    %p54 = scmp.ne.s32.totalorder %s43, %s44
    %p55 = scmp.eq.s32.totalorder %s21, 0
    %p56 = por %p54, %p55
    %p57 = scmp.ne.s32.totalorder %s43, %s44
    %p58 = scmp.eq.s32.totalorder %s22, 3
    %p59 = por %p57, %p58
    %p61 = scmp.ne.s32.totalorder %s44, %s60
    %p62 = scmp.eq.s32.totalorder %s22, 0
    %p63 = por %p61, %p62
    %s64 = smul.u32 %s24, 8
    %s65 = ssub.s32 %s64, 1
    %p66 = scmp.gt.s32.totalorder %s65, 0
    %s67 = scalar_select %p66, %s65, 0
    %s68 = smul.u32 %s31, 8
    %s69 = ssub.s32 %s68, 1
    %p70 = scmp.gt.s32.totalorder %s69, 0
    %s71 = scalar_select %p70, %s69, 0
    %s72 = ssub.s32 %s23, %s35
    %s73 = ssub.s32 %s67, %s71
    %s74 = sor.u32 %s72, %s73
    %p75 = scmp.eq.s32.totalorder %s74, 0
    %s77 = sadd.s32 %s76, 1
    %s78 = scalar_select %p75, %s76, %s77
    %p81 = pneg %p75
    %p82 = scmp.eq.s32.totalorder %s16, 3
    %p83 = por %p81, %p82
    %p84 = scmp.ne.s32.totalorder %s76, %s79
    %p85 = scmp.eq.s32.totalorder %s16, 0
    %p86 = por %p84, %p85
    %p87 = scmp.ne.s32.totalorder %s76, %s79
    %p88 = scmp.eq.s32.totalorder %s21, 3
    %p89 = por %p87, %p88
    %p90 = scmp.ne.s32.totalorder %s79, %s80
    %p91 = scmp.eq.s32.totalorder %s21, 0
    %p92 = por %p90, %p91
    %p93 = scmp.ne.s32.totalorder %s79, %s80
    %p94 = scmp.eq.s32.totalorder %s22, 3
    %p95 = por %p93, %p94
    %p97 = scmp.ne.s32.totalorder %s80, %s96
    %p98 = scmp.eq.s32.totalorder %s22, 0
    %p99 = por %p97, %p98
    %s100 = sadd.s32 %s24, 1
    %s101 = smul.u32 %s100, 8
    %p102 = scmp.lt.s32.totalorder %s101, 15
    %s103 = scalar_select %p102, %s101, 15
    %s104 = sadd.s32 %s31, 1
    %s105 = smul.u32 %s104, 8
    %p106 = scmp.lt.s32.totalorder %s105, 15
    %s107 = scalar_select %p106, %s105, 15
    %s108 = ssub.s32 %s23, %s35
    %s109 = ssub.s32 %s103, %s107
    %s110 = sor.u32 %s108, %s109
    %p111 = scmp.eq.s32.totalorder %s110, 0
    %s113 = sadd.s32 %s112, 1
    %s114 = scalar_select %p111, %s112, %s113
    %p117 = pneg %p111
    %p118 = scmp.eq.s32.totalorder %s16, 3
    %p119 = por %p117, %p118
    %p120 = scmp.ne.s32.totalorder %s112, %s115
    %p121 = scmp.eq.s32.totalorder %s16, 0
    %p122 = por %p120, %p121
    %p123 = scmp.ne.s32.totalorder %s112, %s115
    %p124 = scmp.eq.s32.totalorder %s21, 3
    %p125 = por %p123, %p124
    %p126 = scmp.ne.s32.totalorder %s115, %s116
    %p127 = scmp.eq.s32.totalorder %s21, 0
    %p128 = por %p126, %p127
    %p129 = scmp.ne.s32.totalorder %s115, %s116
    %p130 = scmp.eq.s32.totalorder %s22, 3
    %p131 = por %p129, %p130
    %p133 = scmp.ne.s32.totalorder %s116, %s132
    %p134 = scmp.eq.s32.totalorder %s22, 0
    %p135 = por %p133, %p134
    %s136 = ssub.s32 %s23, %s35
    %p137 = scmp.eq.s32.totalorder %s136, 0
    %s139 = sadd.s32 %s138, 1
    %s140 = scalar_select %p137, %s138, %s139
    %p143 = pneg %p137
    %p144 = scmp.eq.s32.totalorder %s16, 3
    %p145 = por %p143, %p144
    %p146 = scmp.ne.s32.totalorder %s138, %s141
    %p147 = scmp.eq.s32.totalorder %s16, 0
    %p148 = por %p146, %p147
    %p149 = scmp.ne.s32.totalorder %s138, %s141
    %p150 = scmp.eq.s32.totalorder %s21, 3
    %p151 = por %p149, %p150
    %p152 = scmp.ne.s32.totalorder %s141, %s142
    %p153 = scmp.eq.s32.totalorder %s21, 0
    %p154 = por %p152, %p153
    %p155 = scmp.ne.s32.totalorder %s141, %s142
    %p156 = scmp.eq.s32.totalorder %s22, 3
    %p157 = por %p155, %p156
    %p159 = scmp.ne.s32.totalorder %s142, %s158
    %p160 = scmp.eq.s32.totalorder %s22, 0
    %p161 = por %p159, %p160
    %s162 = ssub.s32 %s23, %s35
    %p163 = scmp.eq.s32.totalorder %s162, 0
    %s165 = sadd.s32 %s164, 1
    %s166 = scalar_select %p163, %s164, %s165
    %p169 = pneg %p163
    %p170 = scmp.eq.s32.totalorder %s16, 3
    %p171 = por %p169, %p170
    %p172 = scmp.ne.s32.totalorder %s164, %s167
    %p173 = scmp.eq.s32.totalorder %s16, 0
    %p174 = por %p172, %p173
    %p175 = scmp.ne.s32.totalorder %s164, %s167
    %p176 = scmp.eq.s32.totalorder %s21, 3
    %p177 = por %p175, %p176
    %p178 = scmp.ne.s32.totalorder %s167, %s168
    %p179 = scmp.eq.s32.totalorder %s21, 0
    %p180 = por %p178, %p179
    %p181 = scmp.ne.s32.totalorder %s167, %s168
    %p182 = scmp.eq.s32.totalorder %s22, 3
    %p183 = por %p181, %p182
    %p185 = scmp.ne.s32.totalorder %s168, %s184
    %p186 = scmp.eq.s32.totalorder %s22, 0
    %p187 = por %p185, %p186
    %s189 = sadd.s32 %s188, 1
    %p192 = scmp.eq.s32.totalorder %s16, 3
    %p193 = scmp.ne.s32.totalorder %s188, %s190
    %p194 = scmp.eq.s32.totalorder %s16, 0
    %p195 = por %p193, %p194
    %p196 = scmp.ne.s32.totalorder %s188, %s190
    %p197 = scmp.eq.s32.totalorder %s21, 3
    %p198 = por %p196, %p197
    %p199 = scmp.ne.s32.totalorder %s190, %s191
    %p200 = scmp.eq.s32.totalorder %s21, 0
    %p201 = por %p199, %p200
    %p202 = scmp.ne.s32.totalorder %s190, %s191
    %p203 = scmp.eq.s32.totalorder %s22, 3
    %p204 = por %p202, %p203
    %p206 = scmp.ne.s32.totalorder %s191, %s205
    %p207 = scmp.eq.s32.totalorder %s22, 0
    %p208 = por %p206, %p207
    %s210 = sadd.s32 %s209, 1
    %p213 = scmp.eq.s32.totalorder %s16, 3
    %p214 = scmp.ne.s32.totalorder %s209, %s211
    %p215 = scmp.eq.s32.totalorder %s16, 0
    %p216 = por %p214, %p215
    %p217 = scmp.ne.s32.totalorder %s209, %s211
    %p218 = scmp.eq.s32.totalorder %s21, 3
    %p219 = por %p217, %p218
    %p220 = scmp.ne.s32.totalorder %s211, %s212
    %p221 = scmp.eq.s32.totalorder %s21, 0
    %p222 = por %p220, %p221
    %p223 = scmp.ne.s32.totalorder %s211, %s212
    %p224 = scmp.eq.s32.totalorder %s22, 3
    %p225 = por %p223, %p224
    %p227 = scmp.ne.s32.totalorder %s212, %s226
    %p228 = scmp.eq.s32.totalorder %s22, 0
    %p229 = por %p227, %p228
    %s230 = ssub.s32 %s23, %s35
    %s231 = ssub.s32 %s24, %s31
    %s232 = sor.u32 %s230, %s231
    %p233 = scmp.eq.s32.totalorder %s232, 0
    %s235 = sadd.s32 %s234, 1
    %s236 = scalar_select %p233, %s234, %s235
    %p239 = pneg %p233
    %p240 = scmp.eq.s32.totalorder %s16, 3
    %p241 = por %p239, %p240
    %p242 = scmp.ne.s32.totalorder %s234, %s237
    %p243 = scmp.eq.s32.totalorder %s16, 0
    %p244 = por %p242, %p243
    %p245 = scmp.ne.s32.totalorder %s234, %s237
    %p246 = scmp.eq.s32.totalorder %s21, 3
    %p247 = por %p245, %p246
    %p248 = scmp.ne.s32.totalorder %s237, %s238
    %p249 = scmp.eq.s32.totalorder %s21, 0
    %p250 = por %p248, %p249
    %p251 = scmp.ne.s32.totalorder %s237, %s238
    %p252 = scmp.eq.s32.totalorder %s22, 3
    %p253 = por %p251, %p252
    %p255 = scmp.ne.s32.totalorder %s238, %s254
    %p256 = scmp.eq.s32.totalorder %s22, 0
    %p257 = por %p255, %p256
    %s258 = ssub.s32 %s23, %s35
    %s259 = ssub.s32 %s24, %s31
    %s260 = sor.u32 %s258, %s259
    %p261 = scmp.eq.s32.totalorder %s260, 0
    %s263 = sadd.s32 %s262, 1
    %s264 = scalar_select %p261, %s262, %s263
    %p267 = pneg %p261
    %p268 = scmp.eq.s32.totalorder %s16, 3
    %p269 = por %p267, %p268
    %p270 = scmp.ne.s32.totalorder %s262, %s265
    %p271 = scmp.eq.s32.totalorder %s16, 0
    %p272 = por %p270, %p271
    %p273 = scmp.ne.s32.totalorder %s262, %s265
    %p274 = scmp.eq.s32.totalorder %s21, 3
    %p275 = por %p273, %p274
    %p276 = scmp.ne.s32.totalorder %s265, %s266
    %p277 = scmp.eq.s32.totalorder %s21, 0
    %p278 = por %p276, %p277
    %p279 = scmp.ne.s32.totalorder %s265, %s266
    %p280 = scmp.eq.s32.totalorder %s22, 3
    %p281 = por %p279, %p280
    %p283 = scmp.ne.s32.totalorder %s266, %s282
    %p284 = scmp.eq.s32.totalorder %s22, 0
    %p285 = por %p283, %p284
    %s286 = ssub.s32 %s23, %s35
    %s287 = ssub.s32 %s24, %s31
    %s288 = sor.u32 %s286, %s287
    %p289 = scmp.eq.s32.totalorder %s288, 0
    %s291 = sadd.s32 %s290, 1
    %s292 = scalar_select %p289, %s290, %s291
    %p295 = pneg %p289
    %p296 = scmp.eq.s32.totalorder %s16, 3
    %p297 = por %p295, %p296
    %p298 = scmp.ne.s32.totalorder %s290, %s293
    %p299 = scmp.eq.s32.totalorder %s16, 0
    %p300 = por %p298, %p299
    %p301 = scmp.ne.s32.totalorder %s290, %s293
    %p302 = scmp.eq.s32.totalorder %s21, 3
    %p303 = por %p301, %p302
    %p304 = scmp.ne.s32.totalorder %s293, %s294
    %p305 = scmp.eq.s32.totalorder %s21, 0
    %p306 = por %p304, %p305
    %p307 = scmp.ne.s32.totalorder %s293, %s294
    %p308 = scmp.eq.s32.totalorder %s22, 3
    %p309 = por %p307, %p308
    %p311 = scmp.ne.s32.totalorder %s294, %s310
    %p312 = scmp.eq.s32.totalorder %s22, 0
    %p313 = por %p311, %p312
    %p314 = scmp.le.s32.totalorder 1, %s16
    %p315 = scmp.lt.s32.totalorder %s16, 5
    %p316 = pnand %p314, %p315
    %p317 = pneg %p316
    // Predicated region
    $region9: #{_lambda_.4} parent=5 // pred_check
      _
    $region10: #{_lambda_.4} parent=5 // pred_check_branch
      %319 = sbr.rel (%p316) target = $region12
    $region11: #{_lambda_.4} parent=5 // pred_region
      %s320 = ssub.s32 %s16, 1
      // Predicated region
      $region13: #{_lambda_.4} parent=11 // pred_check
        %p321 = pneg %p201
      $region14: #{_lambda_.4} parent=11 // pred_check_branch
        %323 = sbr.rel (%p321) target = $region16
      $region15: #{_lambda_.4} parent=11 // pred_region
        _
      $region16: #{_lambda_.4} parent=11 // pred_fallthru
        _
      // Predicated region
      $region17: #{_lambda_.4} parent=11 // pred_check
        %p324 = pneg %p222
      $region18: #{_lambda_.4} parent=11 // pred_check_branch
        %326 = sbr.rel (%p324) target = $region20
      $region19: #{_lambda_.4} parent=11 // pred_region
        _
      $region20: #{_lambda_.4} parent=11 // pred_fallthru
        _
    $region12: #{_lambda_.4} parent=5 // pred_fallthru
      _
    %p327 = scmp.lt.s32.totalorder %s16, 4
    // Predicated region
    $region21: #{_lambda_.4} parent=5 // pred_check
      %p328 = pneg %p327
    $region22: #{_lambda_.4} parent=5 // pred_check_branch
      %330 = sbr.rel (%p328) target = $region24
    $region23: #{_lambda_.4} parent=5 // pred_region
      // Predicated region
      $region25: #{_lambda_.4} parent=23 // pred_check
        %p331 = pneg %p50
      $region26: #{_lambda_.4} parent=23 // pred_check_branch
        %333 = sbr.rel (%p331) target = $region28
      $region27: #{_lambda_.4} parent=23 // pred_region
        %s334 = smul.u32 8, %s24
        %p335 = scmp.lt.s32.totalorder %s23, 1
        %s336 = scalar_select %p335, %s23, 1
        %p337 = scmp.lt.s32.totalorder %s334, 15
        %s338 = scalar_select %p337, %s334, 15
        %s339 = smul.addr %s338, 2
        %s340 = smul.addr %s336, 32
        %s341 = sadd.s32 %s339, %s340
        %s342 = smul.addr %s341, 4
        %s343 = scalar_lea.vmem %s0, %s342
        %s344 = smul.u32 8, %s24
      $region28: #{_lambda_.4} parent=23 // pred_fallthru
        _
      // Predicated region
      $region29: #{_lambda_.4} parent=23 // pred_check
        %p345 = pneg %p86
      $region30: #{_lambda_.4} parent=23 // pred_check_branch
        %347 = sbr.rel (%p345) target = $region32
      $region31: #{_lambda_.4} parent=23 // pred_region
        %s348 = smul.u32 %s24, 8
        %s349 = ssub.s32 %s348, 1
        %p350 = scmp.gt.s32.totalorder %s349, 0
        %s351 = scalar_select %p350, %s349, 0
        %p352 = scmp.lt.s32.totalorder %s23, 1
        %s353 = scalar_select %p352, %s23, 1
        %p354 = scmp.lt.s32.totalorder %s351, 15
        %s355 = scalar_select %p354, %s351, 15
        %s356 = smul.addr %s355, 2
        %s357 = smul.addr %s353, 32
        %s358 = sadd.s32 %s356, %s357
        %s359 = smul.addr %s358, 4
        %s360 = scalar_lea.vmem %s1, %s359
        %s361 = smul.u32 %s24, 8
        %s362 = ssub.s32 %s361, 1
        %p363 = scmp.gt.s32.totalorder %s362, 0
        %s364 = scalar_select %p363, %s362, 0
      $region32: #{_lambda_.4} parent=23 // pred_fallthru
        _
      // Predicated region
      $region33: #{_lambda_.4} parent=23 // pred_check
        %p365 = pneg %p122
      $region34: #{_lambda_.4} parent=23 // pred_check_branch
        %367 = sbr.rel (%p365) target = $region36
      $region35: #{_lambda_.4} parent=23 // pred_region
        %s368 = sadd.s32 %s24, 1
        %s369 = smul.u32 %s368, 8
        %p370 = scmp.lt.s32.totalorder %s369, 15
        %s371 = scalar_select %p370, %s369, 15
        %p372 = scmp.lt.s32.totalorder %s23, 1
        %s373 = scalar_select %p372, %s23, 1
        %p374 = scmp.lt.s32.totalorder %s371, 15
        %s375 = scalar_select %p374, %s371, 15
        %s376 = smul.addr %s375, 2
        %s377 = smul.addr %s373, 32
        %s378 = sadd.s32 %s376, %s377
        %s379 = smul.addr %s378, 4
        %s380 = scalar_lea.vmem %s2, %s379
        %s381 = sadd.s32 %s24, 1
        %s382 = smul.u32 %s381, 8
        %p383 = scmp.lt.s32.totalorder %s382, 15
        %s384 = scalar_select %p383, %s382, 15
      $region36: #{_lambda_.4} parent=23 // pred_fallthru
        _
      // Predicated region
      $region37: #{_lambda_.4} parent=23 // pred_check
        %p385 = pneg %p148
      $region38: #{_lambda_.4} parent=23 // pred_check_branch
        %387 = sbr.rel (%p385) target = $region40
      $region39: #{_lambda_.4} parent=23 // pred_region
        %p388 = scmp.lt.s32.totalorder %s23, 1
        %s389 = scalar_select %p388, %s23, 1
        %s390 = scalar_lea.vmem %s3, %s389
      $region40: #{_lambda_.4} parent=23 // pred_fallthru
        _
      // Predicated region
      $region41: #{_lambda_.4} parent=23 // pred_check
        %p391 = pneg %p174
      $region42: #{_lambda_.4} parent=23 // pred_check_branch
        %393 = sbr.rel (%p391) target = $region44
      $region43: #{_lambda_.4} parent=23 // pred_region
        %p394 = scmp.lt.s32.totalorder %s23, 1
        %s395 = scalar_select %p394, %s23, 1
        %s396 = scalar_lea.vmem %s4, %s395
      $region44: #{_lambda_.4} parent=23 // pred_fallthru
        _
    $region24: #{_lambda_.4} parent=5 // pred_fallthru
      _
    %p397 = scmp.le.s32.totalorder 1, %s16
    %p398 = scmp.lt.s32.totalorder %s16, 5
    %p399 = pnand %p397, %p398
    %p400 = pneg %p399
    // Predicated region
    $region45: #{_lambda_.4} parent=5 // pred_check
      _
    $region46: #{_lambda_.4} parent=5 // pred_check_branch
      %402 = sbr.rel (%p399) target = $region48
    $region47: #{_lambda_.4} parent=5 // pred_region
      %s403 = ssub.s32 %s16, 1
      %s404 = smul.u32 8, %s26
      %p405 = scmp.lt.s32.totalorder %s25, 1
      %s406 = scalar_select %p405, %s25, 1
      %p407 = scmp.lt.s32.totalorder %s404, 15
      %s408 = scalar_select %p407, %s404, 15
      %s409 = smul.addr %s408, 2
      %s410 = smul.addr %s406, 32
      %s411 = sadd.s32 %s409, %s410
      %s412 = smul.addr %s411, 4
      %s413 = scalar_lea.vmem %s0, %s412
      %p414 = pneg %p56
      %p415 = pneg %p53
      %s416 = smul.u32 %s26, 8
      %s417 = ssub.s32 %s416, 1
      %p418 = scmp.gt.s32.totalorder %s417, 0
      %s419 = scalar_select %p418, %s417, 0
      %p420 = scmp.lt.s32.totalorder %s25, 1
      %s421 = scalar_select %p420, %s25, 1
      %p422 = scmp.lt.s32.totalorder %s419, 15
      %s423 = scalar_select %p422, %s419, 15
      %s424 = smul.addr %s423, 2
      %s425 = smul.addr %s421, 32
      %s426 = sadd.s32 %s424, %s425
      %s427 = smul.addr %s426, 4
      %s428 = scalar_lea.vmem %s1, %s427
      %p429 = pneg %p92
      %p430 = pneg %p89
      %s431 = sadd.s32 %s26, 1
      %s432 = smul.u32 %s431, 8
      %p433 = scmp.lt.s32.totalorder %s432, 15
      %s434 = scalar_select %p433, %s432, 15
      %p435 = scmp.lt.s32.totalorder %s25, 1
      %s436 = scalar_select %p435, %s25, 1
      %p437 = scmp.lt.s32.totalorder %s434, 15
      %s438 = scalar_select %p437, %s434, 15
      %s439 = smul.addr %s438, 2
      %s440 = smul.addr %s436, 32
      %s441 = sadd.s32 %s439, %s440
      %s442 = smul.addr %s441, 4
      %s443 = scalar_lea.vmem %s2, %s442
      %p444 = pneg %p128
      %p445 = pneg %p125
      %p446 = scmp.lt.s32.totalorder %s25, 1
      %s447 = scalar_select %p446, %s25, 1
      %s448 = scalar_lea.vmem %s3, %s447
      %p449 = pneg %p154
      %p450 = pneg %p151
      %p451 = scmp.lt.s32.totalorder %s25, 1
      %s452 = scalar_select %p451, %s25, 1
      %s453 = scalar_lea.vmem %s4, %s452
      %p454 = pneg %p180
      %p455 = pneg %p177
      %p456 = pneg %p201
      %p457 = pneg %p198
      %p458 = pneg %p222
      %p459 = pneg %p219
      %p460 = pneg %p250
      %p461 = pneg %p247
      %s462 = smul.u32 8, %s26
      %p463 = scmp.lt.s32.totalorder %s25, 1
      %s464 = scalar_select %p463, %s25, 1
      %p465 = scmp.lt.s32.totalorder %s462, 15
      %s466 = scalar_select %p465, %s462, 15
      %s467 = smul.addr %s466, 2
      %s468 = smul.addr %s464, 32
      %s469 = sadd.s32 %s467, %s468
      %s470 = smul.addr %s469, 4
      %s471 = scalar_lea.vmem %s7, %s470
      %p472 = pneg %p278
      %p473 = pneg %p275
      %p474 = scmp.lt.s32.totalorder %s25, 1
      %s475 = scalar_select %p474, %s25, 1
      %p476 = scmp.lt.s32.totalorder %s26, 1
      %s477 = scalar_select %p476, %s26, 1
      %s478 = smul.addr %s475, 2
      %s479 = sadd.s32 %s477, %s478
      %s480 = scalar_lea.vmem %s8, %s479
      %p481 = pneg %p306
      %p482 = pneg %p303
      %p483 = scmp.lt.s32.totalorder %s25, 1
      %s484 = scalar_select %p483, %s25, 1
      %p485 = scmp.lt.s32.totalorder %s26, 1
      %s486 = scalar_select %p485, %s26, 1
      %s487 = smul.addr %s484, 2
      %s488 = sadd.s32 %s486, %s487
      %s489 = scalar_lea.vmem %s9, %s488
      %s490 = smul.u32 8, %s26
      %p491 = scmp.lt.s32.totalorder %s25, 1
      %s492 = scalar_select %p491, %s25, 1
      %p493 = scmp.lt.s32.totalorder %s490, 15
      %s494 = scalar_select %p493, %s490, 15
      %s495 = smul.addr %s494, 2
      %s496 = smul.addr %s492, 32
      %s497 = sadd.s32 %s495, %s496
      %s498 = smul.addr %s497, 4
      %s499 = scalar_lea.vmem %s0, %s498
      %s500 = smul.u32 8, %s26
      %s501 = smul.u32 %s26, 8
      %s502 = ssub.s32 %s501, 1
      %p503 = scmp.gt.s32.totalorder %s502, 0
      %s504 = scalar_select %p503, %s502, 0
      %p505 = scmp.lt.s32.totalorder %s25, 1
      %s506 = scalar_select %p505, %s25, 1
      %p507 = scmp.lt.s32.totalorder %s504, 15
      %s508 = scalar_select %p507, %s504, 15
      %s509 = smul.addr %s508, 2
      %s510 = smul.addr %s506, 32
      %s511 = sadd.s32 %s509, %s510
      %s512 = smul.addr %s511, 4
      %s513 = scalar_lea.vmem %s1, %s512
      %s514 = smul.u32 %s26, 8
      %s515 = ssub.s32 %s514, 1
      %p516 = scmp.gt.s32.totalorder %s515, 0
      %s517 = scalar_select %p516, %s515, 0
      %s518 = sadd.s32 %s26, 1
      %s519 = smul.u32 %s518, 8
      %p520 = scmp.lt.s32.totalorder %s519, 15
      %s521 = scalar_select %p520, %s519, 15
      %p522 = scmp.lt.s32.totalorder %s25, 1
      %s523 = scalar_select %p522, %s25, 1
      %p524 = scmp.lt.s32.totalorder %s521, 15
      %s525 = scalar_select %p524, %s521, 15
      %s526 = smul.addr %s525, 2
      %s527 = smul.addr %s523, 32
      %s528 = sadd.s32 %s526, %s527
      %s529 = smul.addr %s528, 4
      %s530 = scalar_lea.vmem %s2, %s529
      %s531 = sadd.s32 %s26, 1
      %s532 = smul.u32 %s531, 8
      %p533 = scmp.lt.s32.totalorder %s532, 15
      %s534 = scalar_select %p533, %s532, 15
      %p535 = scmp.lt.s32.totalorder %s25, 1
      %s536 = scalar_select %p535, %s25, 1
      %s537 = scalar_lea.vmem %s3, %s536
      %p538 = scmp.lt.s32.totalorder %s25, 1
      %s539 = scalar_select %p538, %s25, 1
      %s540 = scalar_lea.vmem %s4, %s539
      %s541 = smul.u32 8, %s26
      %p542 = scmp.lt.s32.totalorder %s25, 1
      %s543 = scalar_select %p542, %s25, 1
      %p544 = scmp.lt.s32.totalorder %s541, 15
      %s545 = scalar_select %p544, %s541, 15
      %s546 = smul.addr %s545, 2
      %s547 = smul.addr %s543, 32
      %s548 = sadd.s32 %s546, %s547
      %s549 = smul.addr %s548, 4
      %s550 = scalar_lea.vmem %s7, %s549
      %s551 = smul.u32 8, %s26
      %p552 = scmp.lt.s32.totalorder %s25, 1
      %s553 = scalar_select %p552, %s25, 1
      %p554 = scmp.lt.s32.totalorder %s26, 1
      %s555 = scalar_select %p554, %s26, 1
      %s556 = smul.addr %s553, 2
      %s557 = sadd.s32 %s555, %s556
      %s558 = scalar_lea.vmem %s8, %s557
      %p559 = scmp.lt.s32.totalorder %s25, 1
      %s560 = scalar_select %p559, %s25, 1
      %p561 = scmp.lt.s32.totalorder %s26, 1
      %s562 = scalar_select %p561, %s26, 1
      %s563 = smul.addr %s560, 2
      %s564 = sadd.s32 %s562, %s563
      %s565 = scalar_lea.vmem %s9, %s564
      %v567 = vld [vmem:[%s537] sm:$0x1]
      %v568 = vld [vmem:[%s540] sm:$0x1]
      %v569 = vld [vmem:[%s499] sm:$0xf]
      %v570 = vld [vmem:[%s499 + $0x4] sm:$0xf]
      %v571 = vld [vmem:[%s499 + $0x8] sm:$0xf]
      %v572 = vld [vmem:[%s499 + $0xc] sm:$0xf]
      %v573 = vld [vmem:[%s499 + $0x10] sm:$0xf]
      %v574 = vld [vmem:[%s499 + $0x14] sm:$0xf]
      %v575 = vld [vmem:[%s499 + $0x18] sm:$0xf]
      %v576 = vld [vmem:[%s499 + $0x1c] sm:$0xf]
      %v577 = vld [vmem:[%s499 + $0x20] sm:$0xf]
      %v578 = vld [vmem:[%s499 + $0x24] sm:$0xf]
      %v579 = vld [vmem:[%s499 + $0x28] sm:$0xf]
      %v580 = vld [vmem:[%s499 + $0x2c] sm:$0xf]
      %v581 = vld [vmem:[%s499 + $0x30] sm:$0xf]
      %v582 = vld [vmem:[%s499 + $0x34] sm:$0xf]
      %v583 = vld [vmem:[%s499 + $0x38] sm:$0xf]
      %v584 = vld [vmem:[%s499 + $0x3c] sm:$0xf]
      %v585 = vunpack.c.l.bf16 %v569
      %v586 = vunpack.c.l.bf16 %v570
      %v587 = vunpack.c.l.bf16 %v571
      %v588 = vunpack.c.l.bf16 %v572
      %v589 = vunpack.c.l.bf16 %v573
      %v590 = vunpack.c.l.bf16 %v574
      %v591 = vunpack.c.l.bf16 %v575
      %v592 = vunpack.c.l.bf16 %v576
      %v593 = vunpack.c.l.bf16 %v577
      %v594 = vunpack.c.l.bf16 %v578
      %v595 = vunpack.c.l.bf16 %v579
      %v596 = vunpack.c.l.bf16 %v580
      %v597 = vunpack.c.l.bf16 %v581
      %v598 = vunpack.c.l.bf16 %v582
      %v599 = vunpack.c.l.bf16 %v583
      %v600 = vunpack.c.l.bf16 %v584
      %v602 = vlaneseq
      %v603 = vshrl.u32 %v602, 7
      %v604 = vsub.s32 0, %v603
      %v605 = vrot.slane %v567, %v604
      %v607 = vmul.f32 %v585, %v605
      %v608 = vmul.f32 %v586, %v605
      %v609 = vmul.f32 %v587, %v605
      %v610 = vmul.f32 %v588, %v605
      %v611 = vmul.f32 %v589, %v605
      %v612 = vmul.f32 %v590, %v605
      %v613 = vmul.f32 %v591, %v605
      %v614 = vmul.f32 %v592, %v605
      %v615 = vmul.f32 %v593, %v605
      %v616 = vmul.f32 %v594, %v605
      %v617 = vmul.f32 %v595, %v605
      %v618 = vmul.f32 %v596, %v605
      %v619 = vmul.f32 %v597, %v605
      %v620 = vmul.f32 %v598, %v605
      %v621 = vmul.f32 %v599, %v605
      %v622 = vmul.f32 %v600, %v605
      %v624 = vlaneseq
      %v625 = vshrl.u32 %v624, 7
      %v626 = vsub.s32 0, %v625
      %v627 = vrot.slane %v568, %v626
      %v629 = vadd.f32 %v607, %v627
      %v630 = vadd.f32 %v608, %v627
      %v631 = vadd.f32 %v609, %v627
      %v632 = vadd.f32 %v610, %v627
      %v633 = vadd.f32 %v611, %v627
      %v634 = vadd.f32 %v612, %v627
      %v635 = vadd.f32 %v613, %v627
      %v636 = vadd.f32 %v614, %v627
      %v637 = vadd.f32 %v615, %v627
      %v638 = vadd.f32 %v616, %v627
      %v639 = vadd.f32 %v617, %v627
      %v640 = vadd.f32 %v618, %v627
      %v641 = vadd.f32 %v619, %v627
      %v642 = vadd.f32 %v620, %v627
      %v643 = vadd.f32 %v621, %v627
      %v644 = vadd.f32 %v622, %v627
      %v645 = vxor.u32 %v629, 2147483648
      %v646 = vxor.u32 %v630, 2147483648
      %v647 = vxor.u32 %v631, 2147483648
      %v648 = vxor.u32 %v632, 2147483648
      %v649 = vxor.u32 %v633, 2147483648
      %v650 = vxor.u32 %v634, 2147483648
      %v651 = vxor.u32 %v635, 2147483648
      %v652 = vxor.u32 %v636, 2147483648
      %v653 = vxor.u32 %v637, 2147483648
      %v654 = vxor.u32 %v638, 2147483648
      %v655 = vxor.u32 %v639, 2147483648
      %v656 = vxor.u32 %v640, 2147483648
      %v657 = vxor.u32 %v641, 2147483648
      %v658 = vxor.u32 %v642, 2147483648
      %v659 = vxor.u32 %v643, 2147483648
      %v660 = vxor.u32 %v644, 2147483648
      %v661 = vmul.f32 %v645, 1.442695
      %v662 = vpow.pop %v661
      %v663 = vmul.f32 %v646, 1.442695
      %v664 = vpow.pop %v663
      %v665 = vmul.f32 %v647, 1.442695
      %v666 = vpow.pop %v665
      %v667 = vmul.f32 %v648, 1.442695
      %v668 = vpow.pop %v667
      %v669 = vmul.f32 %v649, 1.442695
      %v670 = vpow.pop %v669
      %v671 = vmul.f32 %v650, 1.442695
      %v672 = vpow.pop %v671
      %v673 = vmul.f32 %v651, 1.442695
      %v674 = vpow.pop %v673
      %v675 = vmul.f32 %v652, 1.442695
      %v676 = vpow.pop %v675
      %v677 = vmul.f32 %v653, 1.442695
      %v678 = vpow.pop %v677
      %v679 = vmul.f32 %v654, 1.442695
      %v680 = vpow.pop %v679
      %v681 = vmul.f32 %v655, 1.442695
      %v682 = vpow.pop %v681
      %v683 = vmul.f32 %v656, 1.442695
      %v684 = vpow.pop %v683
      %v685 = vmul.f32 %v657, 1.442695
      %v686 = vpow.pop %v685
      %v687 = vmul.f32 %v658, 1.442695
      %v688 = vpow.pop %v687
      %v689 = vmul.f32 %v659, 1.442695
      %v690 = vpow.pop %v689
      %v691 = vmul.f32 %v660, 1.442695
      %v692 = vpow.pop %v691
      %v693 = vadd.f32 %v662, 1.0
      %v694 = vadd.f32 %v664, 1.0
      %v695 = vadd.f32 %v666, 1.0
      %v696 = vadd.f32 %v668, 1.0
      %v697 = vadd.f32 %v670, 1.0
      %v698 = vadd.f32 %v672, 1.0
      %v699 = vadd.f32 %v674, 1.0
      %v700 = vadd.f32 %v676, 1.0
      %v701 = vadd.f32 %v678, 1.0
      %v702 = vadd.f32 %v680, 1.0
      %v703 = vadd.f32 %v682, 1.0
      %v704 = vadd.f32 %v684, 1.0
      %v705 = vadd.f32 %v686, 1.0
      %v706 = vadd.f32 %v688, 1.0
      %v707 = vadd.f32 %v690, 1.0
      %v708 = vadd.f32 %v692, 1.0
      %v709 = vrcp.pop %v693
      %v710 = vmul.f32 1.0, %v709
      %v711 = vrcp.pop %v694
      %v712 = vmul.f32 1.0, %v711
      %v713 = vrcp.pop %v695
      %v714 = vmul.f32 1.0, %v713
      %v715 = vrcp.pop %v696
      %v716 = vmul.f32 1.0, %v715
      %v717 = vrcp.pop %v697
      %v718 = vmul.f32 1.0, %v717
      %v719 = vrcp.pop %v698
      %v720 = vmul.f32 1.0, %v719
      %v721 = vrcp.pop %v699
      %v722 = vmul.f32 1.0, %v721
      %v723 = vrcp.pop %v700
      %v724 = vmul.f32 1.0, %v723
      %v725 = vrcp.pop %v701
      %v726 = vmul.f32 1.0, %v725
      %v727 = vrcp.pop %v702
      %v728 = vmul.f32 1.0, %v727
      %v729 = vrcp.pop %v703
      %v730 = vmul.f32 1.0, %v729
      %v731 = vrcp.pop %v704
      %v732 = vmul.f32 1.0, %v731
      %v733 = vrcp.pop %v705
      %v734 = vmul.f32 1.0, %v733
      %v735 = vrcp.pop %v706
      %v736 = vmul.f32 1.0, %v735
      %v737 = vrcp.pop %v707
      %v738 = vmul.f32 1.0, %v737
      %v739 = vrcp.pop %v708
      %v740 = vmul.f32 1.0, %v739
      %v741 = vmul.f32 %v629, %v710
      %v742 = vmul.f32 %v630, %v712
      %v743 = vmul.f32 %v631, %v714
      %v744 = vmul.f32 %v632, %v716
      %v745 = vmul.f32 %v633, %v718
      %v746 = vmul.f32 %v634, %v720
      %v747 = vmul.f32 %v635, %v722
      %v748 = vmul.f32 %v636, %v724
      %v749 = vmul.f32 %v637, %v726
      %v750 = vmul.f32 %v638, %v728
      %v751 = vmul.f32 %v639, %v730
      %v752 = vmul.f32 %v640, %v732
      %v753 = vmul.f32 %v641, %v734
      %v754 = vmul.f32 %v642, %v736
      %v755 = vmul.f32 %v643, %v738
      %v756 = vmul.f32 %v644, %v740
      %v757 = vpack.c.bf16 %v742, %v741
      %v758 = vpack.c.bf16 %v744, %v743
      %v759 = vpack.c.bf16 %v746, %v745
      %v760 = vpack.c.bf16 %v748, %v747
      %v761 = vpack.c.bf16 %v750, %v749
      %v762 = vpack.c.bf16 %v752, %v751
      %v763 = vpack.c.bf16 %v754, %v753
      %v764 = vpack.c.bf16 %v756, %v755
      %p765 = scmp.gt.s32.totalorder %s26, 0
      %v766 = vld [vmem:[%s513] sm:$0xf]
      %v767 = vld [vmem:[%s513 + $0x4] sm:$0xf]
      %v768 = vunpack.c.l.bf16 %v766
      %v769 = vunpack.c.l.bf16 %v767
      %v770 = vmul.f32 %v768, %v605
      %v771 = vmul.f32 %v769, %v605
      %v772 = vadd.f32 %v770, %v627
      %v773 = vadd.f32 %v771, %v627
      %v774 = vxor.u32 %v772, 2147483648
      %v775 = vxor.u32 %v773, 2147483648
      %v776 = vmul.f32 %v774, 1.442695
      %v777 = vpow.pop %v776
      %v778 = vmul.f32 %v775, 1.442695
      %v779 = vpow.pop %v778
      %v780 = vadd.f32 %v777, 1.0
      %v781 = vadd.f32 %v779, 1.0
      %v782 = vrcp.pop %v780
      %v783 = vmul.f32 1.0, %v782
      %v784 = vrcp.pop %v781
      %v785 = vmul.f32 1.0, %v784
      %v786 = vmul.f32 %v772, %v783
      %v787 = vmul.f32 %v773, %v785
      %v788 = vpack.c.bf16 %v787, %v786
      %s789 = scalar_select %p765, 1, 0
      %v790 = vstv %s789
      %vm791 = vcmp.gt.s32.totalorder %v790, 0
      %v792 = vsel %vm791, %v788, 0
      %p793 = scmp.lt.s32.totalorder %s26, 1
      %v794 = vld [vmem:[%s530] sm:$0xf]
      %v795 = vld [vmem:[%s530 + $0x4] sm:$0xf]
      %v796 = vunpack.c.l.bf16 %v794
      %v797 = vunpack.c.l.bf16 %v795
      %v798 = vmul.f32 %v796, %v605
      %v799 = vmul.f32 %v797, %v605
      %v800 = vadd.f32 %v798, %v627
      %v801 = vadd.f32 %v799, %v627
      %v802 = vxor.u32 %v800, 2147483648
      %v803 = vxor.u32 %v801, 2147483648
      %v804 = vmul.f32 %v802, 1.442695
      %v805 = vpow.pop %v804
      %v806 = vmul.f32 %v803, 1.442695
      %v807 = vpow.pop %v806
      %v808 = vadd.f32 %v805, 1.0
      %v809 = vadd.f32 %v807, 1.0
      %v810 = vrcp.pop %v808
      %v811 = vmul.f32 1.0, %v810
      %v812 = vrcp.pop %v809
      %v813 = vmul.f32 1.0, %v812
      %v814 = vmul.f32 %v800, %v811
      %v815 = vmul.f32 %v801, %v813
      %v816 = vpack.c.bf16 %v815, %v814
      %s817 = scalar_select %p793, 1, 0
      %v818 = vstv %s817
      %vm819 = vcmp.gt.s32.totalorder %v818, 0
      %v820 = vsel %vm819, %v816, 0
      %v822 = vshrl.u32 %v792, 16
      %v824 = vrot.slane %v822, 7
      %v825 = vshll.u32 %v792, 16
      %v827 = vor.u32 %v824, %v825
      %v829 = vshrl.u32 %v757, 16
      %v831 = vrot.slane %v829, 7
      %v832 = vshll.u32 %v757, 16
      %v834 = vor.u32 %v831, %v832
      %v836 = vshrl.u32 %v758, 16
      %v838 = vrot.slane %v836, 7
      %v839 = vshll.u32 %v758, 16
      %v841 = vor.u32 %v838, %v839
      %v843 = vshrl.u32 %v759, 16
      %v845 = vrot.slane %v843, 7
      %v846 = vshll.u32 %v759, 16
      %v848 = vor.u32 %v845, %v846
      %v850 = vshrl.u32 %v760, 16
      %v852 = vrot.slane %v850, 7
      %v853 = vshll.u32 %v760, 16
      %v855 = vor.u32 %v852, %v853
      %v857 = vshrl.u32 %v761, 16
      %v859 = vrot.slane %v857, 7
      %v860 = vshll.u32 %v761, 16
      %v862 = vor.u32 %v859, %v860
      %v864 = vshrl.u32 %v762, 16
      %v866 = vrot.slane %v864, 7
      %v867 = vshll.u32 %v762, 16
      %v869 = vor.u32 %v866, %v867
      %v871 = vshrl.u32 %v763, 16
      %v873 = vrot.slane %v871, 7
      %v874 = vshll.u32 %v763, 16
      %v876 = vor.u32 %v873, %v874
      %v878 = vshrl.u32 %v764, 16
      %v880 = vrot.slane %v878, 7
      %v881 = vshll.u32 %v764, 16
      %v883 = vor.u32 %v880, %v881
      %v885 = vshrl.u32 %v820, 16
      %v887 = vrot.slane %v885, 7
      %v888 = vshll.u32 %v820, 16
      %v890 = vor.u32 %v887, %v888
      %vm901 = vcmask 1040384
      %vm902 = vsmask.f32 256
      %vm903 = vmand %vm901, %vm902
      %v904 = vsel %vm903, 0, %v827
      %v905 = vsel %vm903, 0, %v834
      %v906 = vsel %vm903, 0, %v841
      %v907 = vsel %vm903, 0, %v848
      %v908 = vsel %vm903, 0, %v855
      %v909 = vsel %vm903, 0, %v862
      %v910 = vsel %vm903, 0, %v869
      %v911 = vsel %vm903, 0, %v876
      %v912 = vsel %vm903, 0, %v883
      %v913 = vsel %vm903, 0, %v890
      %v914 = vrot.slane %v825, 1
      %v915 = vor.u32 %v822, %v914
      %v916 = vrot.slane %v832, 1
      %v917 = vor.u32 %v829, %v916
      %v918 = vrot.slane %v839, 1
      %v919 = vor.u32 %v836, %v918
      %v920 = vrot.slane %v846, 1
      %v921 = vor.u32 %v843, %v920
      %v922 = vrot.slane %v853, 1
      %v923 = vor.u32 %v850, %v922
      %v924 = vrot.slane %v860, 1
      %v925 = vor.u32 %v857, %v924
      %v926 = vrot.slane %v867, 1
      %v927 = vor.u32 %v864, %v926
      %v928 = vrot.slane %v874, 1
      %v929 = vor.u32 %v871, %v928
      %v930 = vrot.slane %v881, 1
      %v931 = vor.u32 %v878, %v930
      %v932 = vrot.slane %v888, 1
      %v933 = vor.u32 %v885, %v932
      %vm944 = vcmask 1047552
      %vm945 = vsmask.f32 7424
      %vm946 = vmand %vm944, %vm945
      %v947 = vsel %vm946, %v915, 0
      %v948 = vsel %vm946, %v917, 0
      %v949 = vsel %vm946, %v919, 0
      %v950 = vsel %vm946, %v921, 0
      %v951 = vsel %vm946, %v923, 0
      %v952 = vsel %vm946, %v925, 0
      %v953 = vsel %vm946, %v927, 0
      %v954 = vsel %vm946, %v929, 0
      %v955 = vsel %vm946, %v931, 0
      %v956 = vsel %vm946, %v933, 0
      %967 = vrot.lane.b32.xlu0 %v792, 32
      %v968 = vpop.permute.xlu0 %967
      %969 = vrot.lane.b32.xlu0 %v757, 32
      %v970 = vpop.permute.xlu0 %969
      %971 = vrot.lane.b32.xlu0 %v758, 32
      %v972 = vpop.permute.xlu0 %971
      %973 = vrot.lane.b32.xlu0 %v759, 32
      %v974 = vpop.permute.xlu0 %973
      %975 = vrot.lane.b32.xlu0 %v760, 32
      %v976 = vpop.permute.xlu0 %975
      %977 = vrot.lane.b32.xlu0 %v761, 32
      %v978 = vpop.permute.xlu0 %977
      %979 = vrot.lane.b32.xlu0 %v762, 32
      %v980 = vpop.permute.xlu0 %979
      %981 = vrot.lane.b32.xlu0 %v763, 32
      %v982 = vpop.permute.xlu0 %981
      %983 = vrot.lane.b32.xlu0 %v764, 32
      %v984 = vpop.permute.xlu0 %983
      %985 = vrot.lane.b32.xlu0 %v820, 32
      %v986 = vpop.permute.xlu0 %985
      %997 = vrot.lane.b32.xlu0 %v947, 64
      %v998 = vpop.permute.xlu0 %997
      %999 = vrot.lane.b32.xlu0 %v948, 64
      %v1000 = vpop.permute.xlu0 %999
      %1001 = vrot.lane.b32.xlu0 %v949, 64
      %v1002 = vpop.permute.xlu0 %1001
      %1003 = vrot.lane.b32.xlu0 %v950, 64
      %v1004 = vpop.permute.xlu0 %1003
      %1005 = vrot.lane.b32.xlu0 %v951, 64
      %v1006 = vpop.permute.xlu0 %1005
      %1007 = vrot.lane.b32.xlu0 %v952, 64
      %v1008 = vpop.permute.xlu0 %1007
      %1009 = vrot.lane.b32.xlu0 %v953, 64
      %v1010 = vpop.permute.xlu0 %1009
      %1011 = vrot.lane.b32.xlu0 %v954, 64
      %v1012 = vpop.permute.xlu0 %1011
      %1013 = vrot.lane.b32.xlu0 %v955, 64
      %v1014 = vpop.permute.xlu0 %1013
      %1015 = vrot.lane.b32.xlu0 %v956, 64
      %v1016 = vpop.permute.xlu0 %1015
      %vm1017 = vcmask 261120
      %v1020 = vsel %vm1017, %v904, %v968
      %v1023 = vsel %vm1017, %v905, %v970
      %v1026 = vsel %vm1017, %v906, %v972
      %v1029 = vsel %vm1017, %v907, %v974
      %v1032 = vsel %vm1017, %v908, %v976
      %v1035 = vsel %vm1017, %v909, %v978
      %v1038 = vsel %vm1017, %v910, %v980
      %v1041 = vsel %vm1017, %v911, %v982
      %v1044 = vsel %vm1017, %v912, %v984
      %v1047 = vsel %vm1017, %v913, %v986
      %vm1048 = vcmask 523264
      %v1050 = vsel %vm1048, %v1020, %v998
      %v1052 = vsel %vm1048, %v1023, %v1000
      %v1054 = vsel %vm1048, %v1026, %v1002
      %v1056 = vsel %vm1048, %v1029, %v1004
      %v1058 = vsel %vm1048, %v1032, %v1006
      %v1060 = vsel %vm1048, %v1035, %v1008
      %v1062 = vsel %vm1048, %v1038, %v1010
      %v1064 = vsel %vm1048, %v1041, %v1012
      %v1066 = vsel %vm1048, %v1044, %v1014
      %v1068 = vsel %vm1048, %v1047, %v1016
      %v1069 = vld [vmem:[%s5] sm:$0xf]
      %v1070 = vld [vmem:[%s5 + $0x4] sm:$0xf]
      %v1071 = vld [vmem:[%s5 + $0x8] sm:$0xf]
      %v1072 = vld [vmem:[%s5 + $0xc] sm:$0xf]
      %v1073 = vld [vmem:[%s5 + $0x10] sm:$0xf]
      %v1074 = vld [vmem:[%s5 + $0x14] sm:$0xf]
      %v1075 = vld [vmem:[%s5 + $0x18] sm:$0xf]
      %v1076 = vld [vmem:[%s5 + $0x1c] sm:$0xf]
      %v1077 = vld [vmem:[%s5 + $0x20] sm:$0xf]
      %v1078 = vld [vmem:[%s5 + $0x24] sm:$0xf]
      %v1079 = vld [vmem:[%s5 + $0x28] sm:$0xf]
      %v1080 = vld [vmem:[%s5 + $0x2c] sm:$0xf]
      %s1081 = scalar_lea.vmem %s5, 48
      %v1082 = vld [vmem:[%s1081] sm:$0xf]
      %v1083 = vld [vmem:[%s1081 + $0x4] sm:$0xf]
      %v1084 = vld [vmem:[%s1081 + $0x8] sm:$0xf]
      %v1085 = vld [vmem:[%s1081 + $0xc] sm:$0xf]
      %v1086 = vld [vmem:[%s1081 + $0x10] sm:$0xf]
      %v1087 = vld [vmem:[%s1081 + $0x14] sm:$0xf]
      %v1088 = vld [vmem:[%s1081 + $0x18] sm:$0xf]
      %v1089 = vld [vmem:[%s1081 + $0x1c] sm:$0xf]
      %v1090 = vld [vmem:[%s1081 + $0x20] sm:$0xf]
      %v1091 = vld [vmem:[%s1081 + $0x24] sm:$0xf]
      %v1092 = vld [vmem:[%s1081 + $0x28] sm:$0xf]
      %v1093 = vld [vmem:[%s1081 + $0x2c] sm:$0xf]
      %v1106 = vunpack.c.l.b16 %v1082
      %v1107 = vunpack.c.l.b16 %v1083
      %v1108 = vunpack.c.l.b16 %v1084
      %v1109 = vunpack.c.l.b16 %v1085
      %v1110 = vunpack.c.l.b16 %v1086
      %v1111 = vunpack.c.l.b16 %v1087
      %v1112 = vunpack.c.l.b16 %v1088
      %v1113 = vunpack.c.l.b16 %v1089
      %v1114 = vunpack.c.l.b16 %v1090
      %v1115 = vunpack.c.l.b16 %v1091
      %v1116 = vunpack.c.l.b16 %v1092
      %v1117 = vunpack.c.l.b16 %v1093
      %v1118 = vpack.c.b16 %v1107, %v1106
      %v1119 = vpack.c.b16 %v1109, %v1108
      %v1120 = vpack.c.b16 %v1111, %v1110
      %v1121 = vpack.c.b16 %v1113, %v1112
      %v1122 = vpack.c.b16 %v1115, %v1114
      %v1123 = vpack.c.b16 %v1117, %v1116
      %vm1130 = vcmask 785408
      %v1131 = vsel %vm1130, %v1052, 0
      %v1133 = vsel %vm1130, %v1054, 0
      %v1135 = vsel %vm1130, %v1056, 0
      %v1137 = vsel %vm1130, %v1058, 0
      %v1139 = vsel %vm1130, %v1060, 0
      %v1141 = vsel %vm1130, %v1062, 0
      %v1143 = vsel %vm1130, %v1064, 0
      %v1145 = vsel %vm1130, %v1066, 0
      %1147 = vmatprep.subr.bf16.mxu0 0
      %1148 = vmatpush1.bf16.msra.mxu0 0
      %1149 = vmatprep.subr.bf16.mxu0 0
      %1150 = vmatpush1.bf16.msra.mxu0 0
      %1151 = vmatprep.subr.bf16.mxu0 0
      %1152 = vmatpush1.bf16.msra.mxu0 %v1123
      %1153 = vmatprep.subr.bf16.mxu0 0
      %1154 = vmatpush1.bf16.msra.mxu0 %v1122
      %1155 = vmatprep.subr.bf16.mxu0 0
      %1156 = vmatpush1.bf16.msra.mxu0 %v1121
      %1157 = vmatprep.subr.bf16.mxu0 0
      %1158 = vmatpush1.bf16.msra.mxu0 %v1120
      %1159 = vmatprep.subr.bf16.mxu0 0
      %1160 = vmatpush1.bf16.msra.mxu0 %v1119
      %1161 = vmatprep.subr.bf16.mxu0 0
      %1162 = vmatpush1.bf16.msra.mxu0 %v1118
      %1163 = vmatprep.subr.bf16.mxu0 0
      %1164 = vmatpush2.bf16.msra.mxu0 0
      %1165 = vmatprep.subr.bf16.mxu0 0
      %1166 = vmatpush2.bf16.msra.mxu0 0
      %1167 = vmatprep.subr.bf16.mxu0 0
      %1168 = vmatpush2.bf16.msra.mxu0 0
      %1169 = vmatprep.subr.bf16.mxu0 0
      %1170 = vmatpush2.bf16.msra.mxu0 0
      %1171 = vmatprep.subr.bf16.mxu0 0
      %1172 = vmatpush2.bf16.msra.mxu0 0
      %1173 = vmatprep.subr.bf16.mxu0 0
      %1174 = vmatpush2.bf16.msra.mxu0 0
      %1175 = vmatprep.subr.bf16.mxu0 0
      %1176 = vmatpush2.bf16.msra.mxu0 0
      %1177 = vmatprep.subr.bf16.mxu0 0
      %1178 = vmatpush2.bf16.msra.mxu0 0
      %1179 = vmatprep.mubr.bf16.mxu0 0
      %1180 = vmatmul.mubr.bf16.gmra.mxu0 %v1131
      %v1181 = vpop.f32.mrf.mxu0
      %v1182 = vadd.f32 0.0, %v1181
      %v1183 = vpop.f32.mrf.mxu0
      %v1184 = vpop.f32.mrf.mxu0
      %v1185 = vadd.f32 0.0, %v1184
      %v1186 = vpop.f32.mrf.mxu0
      %1187 = vmatprep.mubr.bf16.mxu0 0
      %1188 = vmatmul.mubr.bf16.gmra.mxu0 %v1133
      %v1189 = vpop.f32.mrf.mxu0
      %v1190 = vadd.f32 0.0, %v1189
      %v1191 = vpop.f32.mrf.mxu0
      %v1192 = vpop.f32.mrf.mxu0
      %v1193 = vadd.f32 0.0, %v1192
      %v1194 = vpop.f32.mrf.mxu0
      %1195 = vmatprep.mubr.bf16.mxu0 0
      %1196 = vmatmul.mubr.bf16.gmra.mxu0 %v1135
      %v1197 = vpop.f32.mrf.mxu0
      %v1198 = vadd.f32 0.0, %v1197
      %v1199 = vpop.f32.mrf.mxu0
      %v1200 = vpop.f32.mrf.mxu0
      %v1201 = vadd.f32 0.0, %v1200
      %v1202 = vpop.f32.mrf.mxu0
      %1203 = vmatprep.mubr.bf16.mxu0 0
      %1204 = vmatmul.mubr.bf16.gmra.mxu0 %v1137
      %v1205 = vpop.f32.mrf.mxu0
      %v1206 = vadd.f32 0.0, %v1205
      %v1207 = vpop.f32.mrf.mxu0
      %v1208 = vpop.f32.mrf.mxu0
      %v1209 = vadd.f32 0.0, %v1208
      %v1210 = vpop.f32.mrf.mxu0
      %1211 = vmatprep.mubr.bf16.mxu0 0
      %1212 = vmatmul.mubr.bf16.gmra.mxu0 %v1139
      %v1213 = vpop.f32.mrf.mxu0
      %v1214 = vadd.f32 0.0, %v1213
      %v1215 = vpop.f32.mrf.mxu0
      %v1216 = vpop.f32.mrf.mxu0
      %v1217 = vadd.f32 0.0, %v1216
      %v1218 = vpop.f32.mrf.mxu0
      %1219 = vmatprep.mubr.bf16.mxu0 0
      %1220 = vmatmul.mubr.bf16.gmra.mxu0 %v1141
      %v1221 = vpop.f32.mrf.mxu0
      %v1222 = vadd.f32 0.0, %v1221
      %v1223 = vpop.f32.mrf.mxu0
      %v1224 = vpop.f32.mrf.mxu0
      %v1225 = vadd.f32 0.0, %v1224
      %v1226 = vpop.f32.mrf.mxu0
      %1227 = vmatprep.mubr.bf16.mxu0 0
      %1228 = vmatmul.mubr.bf16.gmra.mxu0 %v1143
      %v1229 = vpop.f32.mrf.mxu0
      %v1230 = vadd.f32 0.0, %v1229
      %v1231 = vpop.f32.mrf.mxu0
      %v1232 = vpop.f32.mrf.mxu0
      %v1233 = vadd.f32 0.0, %v1232
      %v1234 = vpop.f32.mrf.mxu0
      %1235 = vmatprep.mubr.bf16.mxu0 0
      %1236 = vmatmul.mubr.bf16.gmra.mxu0 %v1145
      %v1237 = vpop.f32.mrf.mxu0
      %v1238 = vadd.f32 0.0, %v1237
      %v1239 = vpop.f32.mrf.mxu0
      %v1240 = vpop.f32.mrf.mxu0
      %v1241 = vadd.f32 0.0, %v1240
      %v1242 = vpop.f32.mrf.mxu0
      %1243 = vdwg.mxu0
      %v1256 = vunpack.c.l.b16 %v1069
      %v1257 = vunpack.c.l.b16 %v1070
      %v1258 = vunpack.c.l.b16 %v1071
      %v1259 = vunpack.c.l.b16 %v1072
      %v1260 = vunpack.c.l.b16 %v1073
      %v1261 = vunpack.c.l.b16 %v1074
      %v1262 = vunpack.c.l.b16 %v1075
      %v1263 = vunpack.c.l.b16 %v1076
      %v1264 = vunpack.c.l.b16 %v1077
      %v1265 = vunpack.c.l.b16 %v1078
      %v1266 = vunpack.c.l.b16 %v1079
      %v1267 = vunpack.c.l.b16 %v1080
      %v1268 = vpack.c.b16 %v1257, %v1256
      %v1269 = vpack.c.b16 %v1259, %v1258
      %v1270 = vpack.c.b16 %v1261, %v1260
      %v1271 = vpack.c.b16 %v1263, %v1262
      %v1272 = vpack.c.b16 %v1265, %v1264
      %v1273 = vpack.c.b16 %v1267, %v1266
      %v1280 = vsel %vm1130, %v1050, 0
      %1282 = vmatprep.subr.bf16.mxu0 0
      %1283 = vmatpush1.bf16.msra.mxu0 0
      %1284 = vmatprep.subr.bf16.mxu0 0
      %1285 = vmatpush1.bf16.msra.mxu0 0
      %1286 = vmatprep.subr.bf16.mxu0 0
      %1287 = vmatpush1.bf16.msra.mxu0 %v1273
      %1288 = vmatprep.subr.bf16.mxu0 0
      %1289 = vmatpush1.bf16.msra.mxu0 %v1272
      %1290 = vmatprep.subr.bf16.mxu0 0
      %1291 = vmatpush1.bf16.msra.mxu0 %v1271
      %1292 = vmatprep.subr.bf16.mxu0 0
      %1293 = vmatpush1.bf16.msra.mxu0 %v1270
      %1294 = vmatprep.subr.bf16.mxu0 0
      %1295 = vmatpush1.bf16.msra.mxu0 %v1269
      %1296 = vmatprep.subr.bf16.mxu0 0
      %1297 = vmatpush1.bf16.msra.mxu0 %v1268
      %1298 = vmatprep.subr.bf16.mxu0 0
      %1299 = vmatpush2.bf16.msra.mxu0 0
      %1300 = vmatprep.subr.bf16.mxu0 0
      %1301 = vmatpush2.bf16.msra.mxu0 0
      %1302 = vmatprep.subr.bf16.mxu0 0
      %1303 = vmatpush2.bf16.msra.mxu0 0
      %1304 = vmatprep.subr.bf16.mxu0 0
      %1305 = vmatpush2.bf16.msra.mxu0 0
      %1306 = vmatprep.subr.bf16.mxu0 0
      %1307 = vmatpush2.bf16.msra.mxu0 0
      %1308 = vmatprep.subr.bf16.mxu0 0
      %1309 = vmatpush2.bf16.msra.mxu0 0
      %1310 = vmatprep.subr.bf16.mxu0 0
      %1311 = vmatpush2.bf16.msra.mxu0 0
      %1312 = vmatprep.subr.bf16.mxu0 0
      %1313 = vmatpush2.bf16.msra.mxu0 0
      %1314 = vmatprep.mubr.bf16.mxu0 0
      %1315 = vmatmul.mubr.bf16.gmra.mxu0 %v1280
      %v1316 = vpop.f32.mrf.mxu0
      %v1317 = vadd.f32 %v1182, %v1316
      %v1318 = vpop.f32.mrf.mxu0
      %v1319 = vpop.f32.mrf.mxu0
      %v1320 = vadd.f32 %v1185, %v1319
      %v1321 = vpop.f32.mrf.mxu0
      %1322 = vmatprep.mubr.bf16.mxu0 0
      %1323 = vmatmul.mubr.bf16.gmra.mxu0 %v1131
      %v1324 = vpop.f32.mrf.mxu0
      %v1325 = vadd.f32 %v1190, %v1324
      %v1326 = vpop.f32.mrf.mxu0
      %v1327 = vpop.f32.mrf.mxu0
      %v1328 = vadd.f32 %v1193, %v1327
      %v1329 = vpop.f32.mrf.mxu0
      %1330 = vmatprep.mubr.bf16.mxu0 0
      %1331 = vmatmul.mubr.bf16.gmra.mxu0 %v1133
      %v1332 = vpop.f32.mrf.mxu0
      %v1333 = vadd.f32 %v1198, %v1332
      %v1334 = vpop.f32.mrf.mxu0
      %v1335 = vpop.f32.mrf.mxu0
      %v1336 = vadd.f32 %v1201, %v1335
      %v1337 = vpop.f32.mrf.mxu0
      %1338 = vmatprep.mubr.bf16.mxu0 0
      %1339 = vmatmul.mubr.bf16.gmra.mxu0 %v1135
      %v1340 = vpop.f32.mrf.mxu0
      %v1341 = vadd.f32 %v1206, %v1340
      %v1342 = vpop.f32.mrf.mxu0
      %v1343 = vpop.f32.mrf.mxu0
      %v1344 = vadd.f32 %v1209, %v1343
      %v1345 = vpop.f32.mrf.mxu0
      %1346 = vmatprep.mubr.bf16.mxu0 0
      %1347 = vmatmul.mubr.bf16.gmra.mxu0 %v1137
      %v1348 = vpop.f32.mrf.mxu0
      %v1349 = vadd.f32 %v1214, %v1348
      %v1350 = vpop.f32.mrf.mxu0
      %v1351 = vpop.f32.mrf.mxu0
      %v1352 = vadd.f32 %v1217, %v1351
      %v1353 = vpop.f32.mrf.mxu0
      %1354 = vmatprep.mubr.bf16.mxu0 0
      %1355 = vmatmul.mubr.bf16.gmra.mxu0 %v1139
      %v1356 = vpop.f32.mrf.mxu0
      %v1357 = vadd.f32 %v1222, %v1356
      %v1358 = vpop.f32.mrf.mxu0
      %v1359 = vpop.f32.mrf.mxu0
      %v1360 = vadd.f32 %v1225, %v1359
      %v1361 = vpop.f32.mrf.mxu0
      %1362 = vmatprep.mubr.bf16.mxu0 0
      %1363 = vmatmul.mubr.bf16.gmra.mxu0 %v1141
      %v1364 = vpop.f32.mrf.mxu0
      %v1365 = vadd.f32 %v1230, %v1364
      %v1366 = vpop.f32.mrf.mxu0
      %v1367 = vpop.f32.mrf.mxu0
      %v1368 = vadd.f32 %v1233, %v1367
      %v1369 = vpop.f32.mrf.mxu0
      %1370 = vmatprep.mubr.bf16.mxu0 0
      %1371 = vmatmul.mubr.bf16.gmra.mxu0 %v1143
      %v1372 = vpop.f32.mrf.mxu0
      %v1373 = vadd.f32 %v1238, %v1372
      %v1374 = vpop.f32.mrf.mxu0
      %v1375 = vpop.f32.mrf.mxu0
      %v1376 = vadd.f32 %v1241, %v1375
      %v1377 = vpop.f32.mrf.mxu0
      %1378 = vdwg.mxu0
      %s1379 = scalar_lea.vmem %s5, 96
      %v1380 = vld [vmem:[%s1379] sm:$0xf]
      %v1381 = vld [vmem:[%s1379 + $0x4] sm:$0xf]
      %v1382 = vld [vmem:[%s1379 + $0x8] sm:$0xf]
      %v1383 = vld [vmem:[%s1379 + $0xc] sm:$0xf]
      %v1384 = vld [vmem:[%s1379 + $0x10] sm:$0xf]
      %v1385 = vld [vmem:[%s1379 + $0x14] sm:$0xf]
      %v1386 = vld [vmem:[%s1379 + $0x18] sm:$0xf]
      %v1387 = vld [vmem:[%s1379 + $0x1c] sm:$0xf]
      %v1388 = vld [vmem:[%s1379 + $0x20] sm:$0xf]
      %v1389 = vld [vmem:[%s1379 + $0x24] sm:$0xf]
      %v1390 = vld [vmem:[%s1379 + $0x28] sm:$0xf]
      %v1391 = vld [vmem:[%s1379 + $0x2c] sm:$0xf]
      %v1404 = vunpack.c.l.b16 %v1380
      %v1405 = vunpack.c.l.b16 %v1381
      %v1406 = vunpack.c.l.b16 %v1382
      %v1407 = vunpack.c.l.b16 %v1383
      %v1408 = vunpack.c.l.b16 %v1384
      %v1409 = vunpack.c.l.b16 %v1385
      %v1410 = vunpack.c.l.b16 %v1386
      %v1411 = vunpack.c.l.b16 %v1387
      %v1412 = vunpack.c.l.b16 %v1388
      %v1413 = vunpack.c.l.b16 %v1389
      %v1414 = vunpack.c.l.b16 %v1390
      %v1415 = vunpack.c.l.b16 %v1391
      %v1416 = vpack.c.b16 %v1405, %v1404
      %v1417 = vpack.c.b16 %v1407, %v1406
      %v1418 = vpack.c.b16 %v1409, %v1408
      %v1419 = vpack.c.b16 %v1411, %v1410
      %v1420 = vpack.c.b16 %v1413, %v1412
      %v1421 = vpack.c.b16 %v1415, %v1414
      %v1428 = vsel %vm1130, %v1068, 0
      %1430 = vmatprep.subr.bf16.mxu0 0
      %1431 = vmatpush1.bf16.msra.mxu0 0
      %1432 = vmatprep.subr.bf16.mxu0 0
      %1433 = vmatpush1.bf16.msra.mxu0 0
      %1434 = vmatprep.subr.bf16.mxu0 0
      %1435 = vmatpush1.bf16.msra.mxu0 %v1421
      %1436 = vmatprep.subr.bf16.mxu0 0
      %1437 = vmatpush1.bf16.msra.mxu0 %v1420
      %1438 = vmatprep.subr.bf16.mxu0 0
      %1439 = vmatpush1.bf16.msra.mxu0 %v1419
      %1440 = vmatprep.subr.bf16.mxu0 0
      %1441 = vmatpush1.bf16.msra.mxu0 %v1418
      %1442 = vmatprep.subr.bf16.mxu0 0
      %1443 = vmatpush1.bf16.msra.mxu0 %v1417
      %1444 = vmatprep.subr.bf16.mxu0 0
      %1445 = vmatpush1.bf16.msra.mxu0 %v1416
      %1446 = vmatprep.subr.bf16.mxu0 0
      %1447 = vmatpush2.bf16.msra.mxu0 0
      %1448 = vmatprep.subr.bf16.mxu0 0
      %1449 = vmatpush2.bf16.msra.mxu0 0
      %1450 = vmatprep.subr.bf16.mxu0 0
      %1451 = vmatpush2.bf16.msra.mxu0 0
      %1452 = vmatprep.subr.bf16.mxu0 0
      %1453 = vmatpush2.bf16.msra.mxu0 0
      %1454 = vmatprep.subr.bf16.mxu0 0
      %1455 = vmatpush2.bf16.msra.mxu0 0
      %1456 = vmatprep.subr.bf16.mxu0 0
      %1457 = vmatpush2.bf16.msra.mxu0 0
      %1458 = vmatprep.subr.bf16.mxu0 0
      %1459 = vmatpush2.bf16.msra.mxu0 0
      %1460 = vmatprep.subr.bf16.mxu0 0
      %1461 = vmatpush2.bf16.msra.mxu0 0
      %1462 = vmatprep.mubr.bf16.mxu0 0
      %1463 = vmatmul.mubr.bf16.gmra.mxu0 %v1133
      %v1464 = vpop.f32.mrf.mxu0
      %v1465 = vadd.f32 0.0, %v1464
      %v1466 = vpop.f32.mrf.mxu0
      %v1467 = vpop.f32.mrf.mxu0
      %v1468 = vadd.f32 0.0, %v1467
      %v1469 = vpop.f32.mrf.mxu0
      %1470 = vmatprep.mubr.bf16.mxu0 0
      %1471 = vmatmul.mubr.bf16.gmra.mxu0 %v1135
      %v1472 = vpop.f32.mrf.mxu0
      %v1473 = vadd.f32 0.0, %v1472
      %v1474 = vpop.f32.mrf.mxu0
      %v1475 = vpop.f32.mrf.mxu0
      %v1476 = vadd.f32 0.0, %v1475
      %v1477 = vpop.f32.mrf.mxu0
      %1478 = vmatprep.mubr.bf16.mxu0 0
      %1479 = vmatmul.mubr.bf16.gmra.mxu0 %v1137
      %v1480 = vpop.f32.mrf.mxu0
      %v1481 = vadd.f32 0.0, %v1480
      %v1482 = vpop.f32.mrf.mxu0
      %v1483 = vpop.f32.mrf.mxu0
      %v1484 = vadd.f32 0.0, %v1483
      %v1485 = vpop.f32.mrf.mxu0
      %1486 = vmatprep.mubr.bf16.mxu0 0
      %1487 = vmatmul.mubr.bf16.gmra.mxu0 %v1139
      %v1488 = vpop.f32.mrf.mxu0
      %v1489 = vadd.f32 0.0, %v1488
      %v1490 = vpop.f32.mrf.mxu0
      %v1491 = vpop.f32.mrf.mxu0
      %v1492 = vadd.f32 0.0, %v1491
      %v1493 = vpop.f32.mrf.mxu0
      %1494 = vmatprep.mubr.bf16.mxu0 0
      %1495 = vmatmul.mubr.bf16.gmra.mxu0 %v1141
      %v1496 = vpop.f32.mrf.mxu0
      %v1497 = vadd.f32 0.0, %v1496
      %v1498 = vpop.f32.mrf.mxu0
      %v1499 = vpop.f32.mrf.mxu0
      %v1500 = vadd.f32 0.0, %v1499
      %v1501 = vpop.f32.mrf.mxu0
      %1502 = vmatprep.mubr.bf16.mxu0 0
      %1503 = vmatmul.mubr.bf16.gmra.mxu0 %v1143
      %v1504 = vpop.f32.mrf.mxu0
      %v1505 = vadd.f32 0.0, %v1504
      %v1506 = vpop.f32.mrf.mxu0
      %v1507 = vpop.f32.mrf.mxu0
      %v1508 = vadd.f32 0.0, %v1507
      %v1509 = vpop.f32.mrf.mxu0
      %1510 = vmatprep.mubr.bf16.mxu0 0
      %1511 = vmatmul.mubr.bf16.gmra.mxu0 %v1145
      %v1512 = vpop.f32.mrf.mxu0
      %v1513 = vadd.f32 0.0, %v1512
      %v1514 = vpop.f32.mrf.mxu0
      %v1515 = vpop.f32.mrf.mxu0
      %v1516 = vadd.f32 0.0, %v1515
      %v1517 = vpop.f32.mrf.mxu0
      %1518 = vmatprep.mubr.bf16.mxu0 0
      %1519 = vmatmul.mubr.bf16.gmra.mxu0 %v1428
      %v1520 = vpop.f32.mrf.mxu0
      %v1521 = vadd.f32 0.0, %v1520
      %v1522 = vpop.f32.mrf.mxu0
      %v1523 = vpop.f32.mrf.mxu0
      %v1524 = vadd.f32 0.0, %v1523
      %v1525 = vpop.f32.mrf.mxu0
      %1526 = vdwg.mxu0
      %v1527 = vadd.f32 %v1317, %v1465
      %v1528 = vadd.f32 %v1320, %v1468
      %v1529 = vadd.f32 %v1325, %v1473
      %v1530 = vadd.f32 %v1328, %v1476
      %v1531 = vadd.f32 %v1333, %v1481
      %v1532 = vadd.f32 %v1336, %v1484
      %v1533 = vadd.f32 %v1341, %v1489
      %v1534 = vadd.f32 %v1344, %v1492
      %v1535 = vadd.f32 %v1349, %v1497
      %v1536 = vadd.f32 %v1352, %v1500
      %v1537 = vadd.f32 %v1357, %v1505
      %v1538 = vadd.f32 %v1360, %v1508
      %v1539 = vadd.f32 %v1365, %v1513
      %v1540 = vadd.f32 %v1368, %v1516
      %v1541 = vadd.f32 %v1373, %v1521
      %v1542 = vadd.f32 %v1376, %v1524
      %v1543 = vld [vmem:[%s6] sm:$0x1]
      %v1545 = vlaneseq
      %v1546 = vshrl.u32 %v1545, 7
      %v1547 = vsub.s32 0, %v1546
      %v1548 = vrot.slane %v1543, %v1547
      %v1550 = vadd.f32 %v1527, %v1548
      %v1551 = vadd.f32 %v1528, %v1548
      %v1552 = vadd.f32 %v1529, %v1548
      %v1553 = vadd.f32 %v1530, %v1548
      %v1554 = vadd.f32 %v1531, %v1548
      %v1555 = vadd.f32 %v1532, %v1548
      %v1556 = vadd.f32 %v1533, %v1548
      %v1557 = vadd.f32 %v1534, %v1548
      %v1558 = vadd.f32 %v1535, %v1548
      %v1559 = vadd.f32 %v1536, %v1548
      %v1560 = vadd.f32 %v1537, %v1548
      %v1561 = vadd.f32 %v1538, %v1548
      %v1562 = vadd.f32 %v1539, %v1548
      %v1563 = vadd.f32 %v1540, %v1548
      %v1564 = vadd.f32 %v1541, %v1548
      %v1565 = vadd.f32 %v1542, %v1548
      %v1566 = vpack.c.bf16 %v1551, %v1550
      %v1567 = vpack.c.bf16 %v1553, %v1552
      %v1568 = vpack.c.bf16 %v1555, %v1554
      %v1569 = vpack.c.bf16 %v1557, %v1556
      %v1570 = vpack.c.bf16 %v1559, %v1558
      %v1571 = vpack.c.bf16 %v1561, %v1560
      %v1572 = vpack.c.bf16 %v1563, %v1562
      %v1573 = vpack.c.bf16 %v1565, %v1564
      %v1582 = vunpack.c.l.b16 %v1566
      %v1583 = vunpack.c.h.b16 %v1566
      %v1584 = vunpack.c.l.b16 %v1567
      %v1585 = vunpack.c.h.b16 %v1567
      %v1586 = vunpack.c.l.b16 %v1568
      %v1587 = vunpack.c.h.b16 %v1568
      %v1588 = vunpack.c.l.b16 %v1569
      %v1589 = vunpack.c.h.b16 %v1569
      %v1590 = vunpack.c.l.b16 %v1570
      %v1591 = vunpack.c.h.b16 %v1570
      %v1592 = vunpack.c.l.b16 %v1571
      %v1593 = vunpack.c.h.b16 %v1571
      %v1594 = vunpack.c.l.b16 %v1572
      %v1595 = vunpack.c.h.b16 %v1572
      %v1596 = vunpack.c.l.b16 %v1573
      %v1597 = vunpack.c.h.b16 %v1573
      %v1598 = vpack.c.b16 %v1582, %v1582
      %v1599 = vpack.c.b16 %v1583, %v1583
      %v1600 = vpack.c.b16 %v1584, %v1584
      %v1601 = vpack.c.b16 %v1585, %v1585
      %v1602 = vpack.c.b16 %v1586, %v1586
      %v1603 = vpack.c.b16 %v1587, %v1587
      %v1604 = vpack.c.b16 %v1588, %v1588
      %v1605 = vpack.c.b16 %v1589, %v1589
      %v1606 = vpack.c.b16 %v1590, %v1590
      %v1607 = vpack.c.b16 %v1591, %v1591
      %v1608 = vpack.c.b16 %v1592, %v1592
      %v1609 = vpack.c.b16 %v1593, %v1593
      %v1610 = vpack.c.b16 %v1594, %v1594
      %v1611 = vpack.c.b16 %v1595, %v1595
      %v1612 = vpack.c.b16 %v1596, %v1596
      %v1613 = vpack.c.b16 %v1597, %v1597
      %vm1630 = vcmask 519168
      %1631 = vst.msk [vmem:[%s550] sm:$0xf] %vm1630, %v1598
      %1632 = vst.msk [vmem:[%s550 + $0x4] sm:$0xf] %vm1630, %v1599
      %1633 = vst.msk [vmem:[%s550 + $0x8] sm:$0xf] %vm1630, %v1600
      %1634 = vst.msk [vmem:[%s550 + $0xc] sm:$0xf] %vm1630, %v1601
      %1635 = vst.msk [vmem:[%s550 + $0x10] sm:$0xf] %vm1630, %v1602
      %1636 = vst.msk [vmem:[%s550 + $0x14] sm:$0xf] %vm1630, %v1603
      %1637 = vst.msk [vmem:[%s550 + $0x18] sm:$0xf] %vm1630, %v1604
      %1638 = vst.msk [vmem:[%s550 + $0x1c] sm:$0xf] %vm1630, %v1605
      %1639 = vst.msk [vmem:[%s550 + $0x20] sm:$0xf] %vm1630, %v1606
      %1640 = vst.msk [vmem:[%s550 + $0x24] sm:$0xf] %vm1630, %v1607
      %1641 = vst.msk [vmem:[%s550 + $0x28] sm:$0xf] %vm1630, %v1608
      %1642 = vst.msk [vmem:[%s550 + $0x2c] sm:$0xf] %vm1630, %v1609
      %1643 = vst.msk [vmem:[%s550 + $0x30] sm:$0xf] %vm1630, %v1610
      %1644 = vst.msk [vmem:[%s550 + $0x34] sm:$0xf] %vm1630, %v1611
      %1645 = vst.msk [vmem:[%s550 + $0x38] sm:$0xf] %vm1630, %v1612
      %1646 = vst.msk [vmem:[%s550 + $0x3c] sm:$0xf] %vm1630, %v1613
      %v1647 = vunpack.c.l.bf16 %v1566
      %v1648 = vunpack.c.h.bf16 %v1566
      %v1649 = vunpack.c.l.bf16 %v1567
      %v1650 = vunpack.c.h.bf16 %v1567
      %v1651 = vunpack.c.l.bf16 %v1568
      %v1652 = vunpack.c.h.bf16 %v1568
      %v1653 = vunpack.c.l.bf16 %v1569
      %v1654 = vunpack.c.h.bf16 %v1569
      %v1655 = vunpack.c.l.bf16 %v1570
      %v1656 = vunpack.c.h.bf16 %v1570
      %v1657 = vunpack.c.l.bf16 %v1571
      %v1658 = vunpack.c.h.bf16 %v1571
      %v1659 = vunpack.c.l.bf16 %v1572
      %v1660 = vunpack.c.h.bf16 %v1572
      %v1661 = vunpack.c.l.bf16 %v1573
      %v1662 = vunpack.c.h.bf16 %v1573
      %v1663 = vsel %vm1048, %v1647, 0.0
      %v1664 = vsel %vm1048, %v1648, 0.0
      %v1665 = vadd.f32 %v1663, %v1664
      %v1666 = vsel %vm1048, %v1649, 0.0
      %v1667 = vadd.f32 %v1665, %v1666
      %v1668 = vsel %vm1048, %v1650, 0.0
      %v1669 = vadd.f32 %v1667, %v1668
      %v1670 = vsel %vm1048, %v1651, 0.0
      %v1671 = vadd.f32 %v1669, %v1670
      %v1672 = vsel %vm1048, %v1652, 0.0
      %v1673 = vadd.f32 %v1671, %v1672
      %v1674 = vsel %vm1048, %v1653, 0.0
      %v1675 = vadd.f32 %v1673, %v1674
      %v1676 = vsel %vm1048, %v1654, 0.0
      %v1677 = vadd.f32 %v1675, %v1676
      %v1678 = vsel %vm1048, %v1655, 0.0
      %v1679 = vadd.f32 %v1677, %v1678
      %v1680 = vsel %vm1048, %v1656, 0.0
      %v1681 = vadd.f32 %v1679, %v1680
      %v1682 = vsel %vm1048, %v1657, 0.0
      %v1683 = vadd.f32 %v1681, %v1682
      %v1684 = vsel %vm1048, %v1658, 0.0
      %v1685 = vadd.f32 %v1683, %v1684
      %v1686 = vsel %vm1048, %v1659, 0.0
      %v1687 = vadd.f32 %v1685, %v1686
      %v1688 = vsel %vm1048, %v1660, 0.0
      %v1689 = vadd.f32 %v1687, %v1688
      %v1690 = vsel %vm1048, %v1661, 0.0
      %v1691 = vadd.f32 %v1689, %v1690
      %v1692 = vsel %vm1048, %v1662, 0.0
      %v1693 = vadd.f32 %v1691, %v1692
      %v1694 = vrot.slane %v1693, 4
      %v1695 = vadd.f32 %v1693, %v1694
      %v1696 = vrot.slane %v1695, 2
      %v1697 = vadd.f32 %v1695, %v1696
      %v1698 = vrot.slane %v1697, 1
      %v1699 = vadd.f32 %v1697, %v1698
      %vm1700 = vcmask 516096
      %1701 = vst.msk [vmem:[%s558] sm:$0x1] %vm1700, %v1699
      %v1702 = vmul.f32 %v1647, %v1647
      %v1703 = vmul.f32 %v1648, %v1648
      %v1704 = vmul.f32 %v1649, %v1649
      %v1705 = vmul.f32 %v1650, %v1650
      %v1706 = vmul.f32 %v1651, %v1651
      %v1707 = vmul.f32 %v1652, %v1652
      %v1708 = vmul.f32 %v1653, %v1653
      %v1709 = vmul.f32 %v1654, %v1654
      %v1710 = vmul.f32 %v1655, %v1655
      %v1711 = vmul.f32 %v1656, %v1656
      %v1712 = vmul.f32 %v1657, %v1657
      %v1713 = vmul.f32 %v1658, %v1658
      %v1714 = vmul.f32 %v1659, %v1659
      %v1715 = vmul.f32 %v1660, %v1660
      %v1716 = vmul.f32 %v1661, %v1661
      %v1717 = vmul.f32 %v1662, %v1662
      %v1718 = vsel %vm1048, %v1702, 0.0
      %v1719 = vsel %vm1048, %v1703, 0.0
      %v1720 = vadd.f32 %v1718, %v1719
      %v1721 = vsel %vm1048, %v1704, 0.0
      %v1722 = vadd.f32 %v1720, %v1721
      %v1723 = vsel %vm1048, %v1705, 0.0
      %v1724 = vadd.f32 %v1722, %v1723
      %v1725 = vsel %vm1048, %v1706, 0.0
      %v1726 = vadd.f32 %v1724, %v1725
      %v1727 = vsel %vm1048, %v1707, 0.0
      %v1728 = vadd.f32 %v1726, %v1727
      %v1729 = vsel %vm1048, %v1708, 0.0
      %v1730 = vadd.f32 %v1728, %v1729
      %v1731 = vsel %vm1048, %v1709, 0.0
      %v1732 = vadd.f32 %v1730, %v1731
      %v1733 = vsel %vm1048, %v1710, 0.0
      %v1734 = vadd.f32 %v1732, %v1733
      %v1735 = vsel %vm1048, %v1711, 0.0
      %v1736 = vadd.f32 %v1734, %v1735
      %v1737 = vsel %vm1048, %v1712, 0.0
      %v1738 = vadd.f32 %v1736, %v1737
      %v1739 = vsel %vm1048, %v1713, 0.0
      %v1740 = vadd.f32 %v1738, %v1739
      %v1741 = vsel %vm1048, %v1714, 0.0
      %v1742 = vadd.f32 %v1740, %v1741
      %v1743 = vsel %vm1048, %v1715, 0.0
      %v1744 = vadd.f32 %v1742, %v1743
      %v1745 = vsel %vm1048, %v1716, 0.0
      %v1746 = vadd.f32 %v1744, %v1745
      %v1747 = vsel %vm1048, %v1717, 0.0
      %v1748 = vadd.f32 %v1746, %v1747
      %v1749 = vrot.slane %v1748, 4
      %v1750 = vadd.f32 %v1748, %v1749
      %v1751 = vrot.slane %v1750, 2
      %v1752 = vadd.f32 %v1750, %v1751
      %v1753 = vrot.slane %v1752, 1
      %v1754 = vadd.f32 %v1752, %v1753
      %1755 = vst.msk [vmem:[%s565] sm:$0x1] %vm1700, %v1754
      %s1756 = smul.u32 8, %s26
      %p1757 = scmp.lt.s32.totalorder %s25, 1
      %s1758 = scalar_select %p1757, %s25, 1
      %p1759 = scmp.lt.s32.totalorder %s1756, 15
      %s1760 = scalar_select %p1759, %s1756, 15
      %s1761 = smul.addr %s1760, 2
      %s1762 = smul.addr %s1758, 32
      %s1763 = sadd.s32 %s1761, %s1762
      %s1764 = smul.addr %s1763, 4
      %s1765 = scalar_lea.vmem %s7, %s1764
      %p1766 = scmp.lt.s32.totalorder %s25, 1
      %s1767 = scalar_select %p1766, %s25, 1
      %p1768 = scmp.lt.s32.totalorder %s26, 1
      %s1769 = scalar_select %p1768, %s26, 1
      %s1770 = smul.addr %s1767, 2
      %s1771 = sadd.s32 %s1769, %s1770
      %s1772 = scalar_lea.vmem %s8, %s1771
      %p1773 = scmp.lt.s32.totalorder %s25, 1
      %s1774 = scalar_select %p1773, %s25, 1
      %p1775 = scmp.lt.s32.totalorder %s26, 1
      %s1776 = scalar_select %p1775, %s26, 1
      %s1777 = smul.addr %s1774, 2
      %s1778 = sadd.s32 %s1776, %s1777
      %s1779 = scalar_lea.vmem %s9, %s1778
      // Predicated region
      $region49: #{_lambda_.4} parent=47 // pred_check
        %p1780 = pneg %p247
      $region50: #{_lambda_.4} parent=47 // pred_check_branch
        %1782 = sbr.rel (%p1780) target = $region52
      $region51: #{_lambda_.4} parent=47 // pred_region
        %s1783 = smul.u32 8, %s26
      $region52: #{_lambda_.4} parent=47 // pred_fallthru
        _
      // Predicated region
      $region53: #{_lambda_.4} parent=47 // pred_check
        %p1784 = pneg %p275
      $region54: #{_lambda_.4} parent=47 // pred_check_branch
        %1786 = sbr.rel (%p1784) target = $region56
      $region55: #{_lambda_.4} parent=47 // pred_region
        _
      $region56: #{_lambda_.4} parent=47 // pred_fallthru
        _
      // Predicated region
      $region57: #{_lambda_.4} parent=47 // pred_check
        %p1787 = pneg %p303
      $region58: #{_lambda_.4} parent=47 // pred_check_branch
        %1789 = sbr.rel (%p1787) target = $region60
      $region59: #{_lambda_.4} parent=47 // pred_region
        _
      $region60: #{_lambda_.4} parent=47 // pred_fallthru
        _
    $region48: #{_lambda_.4} parent=5 // pred_fallthru
      _
    %p1790 = scmp.le.s32.totalorder 2, %s16
    // Predicated region
    $region61: #{_lambda_.4} parent=5 // pred_check
      %p1791 = pneg %p1790
    $region62: #{_lambda_.4} parent=5 // pred_check_branch
      %1793 = sbr.rel (%p1791) target = $region64
    $region63: #{_lambda_.4} parent=5 // pred_region
      %s1794 = ssub.s32 %s16, 2
      // Predicated region
      $region65: #{_lambda_.4} parent=63 // pred_check
        %p1795 = pneg %p253
      $region66: #{_lambda_.4} parent=63 // pred_check_branch
        %1797 = sbr.rel (%p1795) target = $region68
      $region67: #{_lambda_.4} parent=63 // pred_region
        %s1798 = smul.u32 8, %s28
        %p1799 = scmp.lt.s32.totalorder %s27, 1
        %s1800 = scalar_select %p1799, %s27, 1
        %p1801 = scmp.lt.s32.totalorder %s1798, 15
        %s1802 = scalar_select %p1801, %s1798, 15
        %s1803 = smul.addr %s1802, 2
        %s1804 = smul.addr %s1800, 32
        %s1805 = sadd.s32 %s1803, %s1804
        %s1806 = smul.addr %s1805, 4
        %s1807 = scalar_lea.vmem %s7, %s1806
      $region68: #{_lambda_.4} parent=63 // pred_fallthru
        _
      // Predicated region
      $region69: #{_lambda_.4} parent=63 // pred_check
        %p1808 = pneg %p281
      $region70: #{_lambda_.4} parent=63 // pred_check_branch
        %1810 = sbr.rel (%p1808) target = $region72
      $region71: #{_lambda_.4} parent=63 // pred_region
        %p1811 = scmp.lt.s32.totalorder %s27, 1
        %s1812 = scalar_select %p1811, %s27, 1
        %p1813 = scmp.lt.s32.totalorder %s28, 1
        %s1814 = scalar_select %p1813, %s28, 1
        %s1815 = smul.addr %s1812, 2
        %s1816 = sadd.s32 %s1814, %s1815
        %s1817 = scalar_lea.vmem %s8, %s1816
      $region72: #{_lambda_.4} parent=63 // pred_fallthru
        _
      // Predicated region
      $region73: #{_lambda_.4} parent=63 // pred_check
        %p1818 = pneg %p309
      $region74: #{_lambda_.4} parent=63 // pred_check_branch
        %1820 = sbr.rel (%p1818) target = $region76
      $region75: #{_lambda_.4} parent=63 // pred_region
        %p1821 = scmp.lt.s32.totalorder %s27, 1
        %s1822 = scalar_select %p1821, %s27, 1
        %p1823 = scmp.lt.s32.totalorder %s28, 1
        %s1824 = scalar_select %p1823, %s28, 1
        %s1825 = smul.addr %s1822, 2
        %s1826 = sadd.s32 %s1824, %s1825
        %s1827 = scalar_lea.vmem %s9, %s1826
      $region76: #{_lambda_.4} parent=63 // pred_fallthru
        _
    $region64: #{_lambda_.4} parent=5 // pred_fallthru
      _
  $region6: #{_lambda_.4} parent=0 // loop_footer
    %s20 = sadd.s32 1, %s16
  $region7: #{_lambda_.4} parent=0 // loop_footer_branch
    %15 = sbr.rel target = $region3
  $region8: #{_lambda_.4} parent=0 // loop_exit
    _

// kernel: _lambda_.5
$region0: #{_lambda_.5}
  #allocation0 [shape = 'u32[]', space=smem, size = 0x4, offset = 0x4, fixed_abs, tag = 'smem constant byte address 0x4 - core index']
  #allocation1 [shape = 'u32[144,128]{1,0:T(1,128)}', space=vmem, size = 0x12000, scoped, tag = 'internal scratch']
  %s0 = inlined_call_operand.vmem [shape: bf16[2,16,16,64], index: 0, kind: input, shape index: {}, may-alias: {0,1,2}]
  %s1 = inlined_call_operand.vmem [shape: bf16[2,16,16,64], index: 1, kind: input, shape index: {}, may-alias: {0,1,2}]
  %s2 = inlined_call_operand.vmem [shape: bf16[2,16,16,64], index: 2, kind: input, shape index: {}, may-alias: {0,1,2}]
  %s3 = inlined_call_operand.vmem [shape: f32[2,1,64], index: 3, kind: input, shape index: {}]
  %s4 = inlined_call_operand.vmem [shape: f32[2,1,64], index: 4, kind: input, shape index: {}]
  %s5 = inlined_call_operand.vmem [shape: bf16[3,192,64], index: 5, kind: input, shape index: {}]
  %s6 = inlined_call_operand.vmem [shape: f32[1,64], index: 6, kind: input, shape index: {}]
  %s7 = inlined_call_operand.vmem [shape: bf16[2,16,16,32], index: 7, kind: input, shape index: {}]
  %s8 = inlined_call_operand.vmem [shape: bf16[32,64], index: 8, kind: input, shape index: {}]
  %s9 = inlined_call_operand.vmem [shape: f32[1,64], index: 9, kind: input, shape index: {}]
  %s10 = inlined_call_operand.hbm [shape: f32[2,16,16,64], index: 10, kind: output, shape index: {}]
  %s11 = sld [smem:[#allocation0]]
  $region73: #{_lambda_.5} parent=0
    _
  %s13 = ssub.s32 1, %s11
  %s14 = scalar_select 0, %s13, %s11
  $region1: #{_lambda_.5} parent=0
    #allocation2 [shape = 'u8[131072]{0}', space=vmem, size = 0x20000, scoped, tag = 'output window, operand 0']
    #allocation3 [shape = 's32[2]{0}', space=sflag, size = 0x8, scoped, tag = 'scoped memory for _lambda_.5']
    %15 = vsyncpa [#allocation3], 0
    %s16 = scalar_lea.sflag [#allocation3], 1
    %17 = vsyncpa %s16, 0
    loop: start=0, step=1, limit=6
    $region2: #{_lambda_.5} parent=1 // loop_pre_header
      _
    $region3: #{_lambda_.5} parent=1 // loop_header
      %s19 = sphi 0, %s23
      %p20 = scmp.ge.s32.totalorder %s19, 6
      %s26 = sphi 0, %s38
      %s27 = sphi 0, %s34
      %s28 = sphi 0, %s26
      %s29 = sphi 0, %s27
      %s30 = sphi 0, %s28
      %s31 = sphi 0, %s29
      %s43 = sphi 0, %s45
      %s46 = sphi 0, %s43
      %s47 = sphi 0, %s46
      %s63 = sphi 0, %s47
      %s79 = sphi 0, %s81
      %s82 = sphi 0, %s79
      %s83 = sphi 0, %s82
      %s99 = sphi 0, %s83
      %s115 = sphi 0, %s117
      %s118 = sphi 0, %s115
      %s119 = sphi 0, %s118
      %s135 = sphi 0, %s119
      %s141 = sphi 0, %s143
      %s144 = sphi 0, %s141
      %s145 = sphi 0, %s144
      %s161 = sphi 0, %s145
      %s167 = sphi 0, %s169
      %s170 = sphi 0, %s167
      %s171 = sphi 0, %s170
      %s187 = sphi 0, %s171
      %s191 = sphi 0, %s191
      %s193 = sphi 0, %s191
      %s194 = sphi 0, %s193
      %s208 = sphi 0, %s194
      %s212 = sphi 0, %s212
      %s214 = sphi 0, %s212
      %s215 = sphi 0, %s214
      %s229 = sphi 0, %s215
      %s237 = sphi 0, %s239
      %s240 = sphi 0, %s237
      %s241 = sphi 0, %s240
      %s257 = sphi 0, %s241
      %s261 = sphi 0, %s261
      %s263 = sphi 0, %s261
      %s264 = sphi 0, %s263
      %s278 = sphi 0, %s264
      %s282 = sphi 0, %s282
      %s284 = sphi 0, %s282
      %s285 = sphi 0, %s284
      %s299 = sphi 0, %s285
      %s307 = sphi 0, %s309
      %s310 = sphi 0, %s307
      %s311 = sphi 0, %s310
      %s327 = sphi 0, %s311
    $region4: #{_lambda_.5} parent=1 // loop_header_branch
      %22 = sbr.rel (%p20) target = $region8
    $region5: #{_lambda_.5} parent=1 // loop_body
      %s24 = ssub.s32 %s19, 1
      %s25 = ssub.s32 %s19, 2
      %s32 = sadd.s32 1, %s27
      %p33 = scmp.ge.s32.totalorder %s32, 2
      %s34 = scalar_select %p33, 0, %s32
      %s35 = sadd.s32 1, %s26
      %s36 = scalar_select %p33, %s35, %s26
      %p37 = scmp.ge.s32.totalorder %s36, 2
      %s38 = scalar_select %p37, 0, %s36
      %s39 = ssub.s32 %s26, %s38
      %s40 = ssub.s32 %s27, %s34
      %s41 = sor.u32 %s39, %s40
      %p42 = scmp.eq.s32.totalorder %s41, 0
      %s44 = sadd.s32 %s43, 1
      %s45 = scalar_select %p42, %s43, %s44
      %p48 = pneg %p42
      %p49 = scmp.eq.s32.totalorder %s19, 3
      %p50 = por %p48, %p49
      %p51 = scmp.ne.s32.totalorder %s43, %s46
      %p52 = scmp.eq.s32.totalorder %s19, 0
      %p53 = por %p51, %p52
      %p54 = scmp.ne.s32.totalorder %s43, %s46
      %p55 = scmp.eq.s32.totalorder %s24, 3
      %p56 = por %p54, %p55
      %p57 = scmp.ne.s32.totalorder %s46, %s47
      %p58 = scmp.eq.s32.totalorder %s24, 0
      %p59 = por %p57, %p58
      %p60 = scmp.ne.s32.totalorder %s46, %s47
      %p61 = scmp.eq.s32.totalorder %s25, 3
      %p62 = por %p60, %p61
      %p64 = scmp.ne.s32.totalorder %s47, %s63
      %p65 = scmp.eq.s32.totalorder %s25, 0
      %p66 = por %p64, %p65
      %s67 = smul.u32 %s27, 8
      %s68 = ssub.s32 %s67, 1
      %p69 = scmp.gt.s32.totalorder %s68, 0
      %s70 = scalar_select %p69, %s68, 0
      %s71 = smul.u32 %s34, 8
      %s72 = ssub.s32 %s71, 1
      %p73 = scmp.gt.s32.totalorder %s72, 0
      %s74 = scalar_select %p73, %s72, 0
      %s75 = ssub.s32 %s26, %s38
      %s76 = ssub.s32 %s70, %s74
      %s77 = sor.u32 %s75, %s76
      %p78 = scmp.eq.s32.totalorder %s77, 0
      %s80 = sadd.s32 %s79, 1
      %s81 = scalar_select %p78, %s79, %s80
      %p84 = pneg %p78
      %p85 = scmp.eq.s32.totalorder %s19, 3
      %p86 = por %p84, %p85
      %p87 = scmp.ne.s32.totalorder %s79, %s82
      %p88 = scmp.eq.s32.totalorder %s19, 0
      %p89 = por %p87, %p88
      %p90 = scmp.ne.s32.totalorder %s79, %s82
      %p91 = scmp.eq.s32.totalorder %s24, 3
      %p92 = por %p90, %p91
      %p93 = scmp.ne.s32.totalorder %s82, %s83
      %p94 = scmp.eq.s32.totalorder %s24, 0
      %p95 = por %p93, %p94
      %p96 = scmp.ne.s32.totalorder %s82, %s83
      %p97 = scmp.eq.s32.totalorder %s25, 3
      %p98 = por %p96, %p97
      %p100 = scmp.ne.s32.totalorder %s83, %s99
      %p101 = scmp.eq.s32.totalorder %s25, 0
      %p102 = por %p100, %p101
      %s103 = sadd.s32 %s27, 1
      %s104 = smul.u32 %s103, 8
      %p105 = scmp.lt.s32.totalorder %s104, 15
      %s106 = scalar_select %p105, %s104, 15
      %s107 = sadd.s32 %s34, 1
      %s108 = smul.u32 %s107, 8
      %p109 = scmp.lt.s32.totalorder %s108, 15
      %s110 = scalar_select %p109, %s108, 15
      %s111 = ssub.s32 %s26, %s38
      %s112 = ssub.s32 %s106, %s110
      %s113 = sor.u32 %s111, %s112
      %p114 = scmp.eq.s32.totalorder %s113, 0
      %s116 = sadd.s32 %s115, 1
      %s117 = scalar_select %p114, %s115, %s116
      %p120 = pneg %p114
      %p121 = scmp.eq.s32.totalorder %s19, 3
      %p122 = por %p120, %p121
      %p123 = scmp.ne.s32.totalorder %s115, %s118
      %p124 = scmp.eq.s32.totalorder %s19, 0
      %p125 = por %p123, %p124
      %p126 = scmp.ne.s32.totalorder %s115, %s118
      %p127 = scmp.eq.s32.totalorder %s24, 3
      %p128 = por %p126, %p127
      %p129 = scmp.ne.s32.totalorder %s118, %s119
      %p130 = scmp.eq.s32.totalorder %s24, 0
      %p131 = por %p129, %p130
      %p132 = scmp.ne.s32.totalorder %s118, %s119
      %p133 = scmp.eq.s32.totalorder %s25, 3
      %p134 = por %p132, %p133
      %p136 = scmp.ne.s32.totalorder %s119, %s135
      %p137 = scmp.eq.s32.totalorder %s25, 0
      %p138 = por %p136, %p137
      %s139 = ssub.s32 %s26, %s38
      %p140 = scmp.eq.s32.totalorder %s139, 0
      %s142 = sadd.s32 %s141, 1
      %s143 = scalar_select %p140, %s141, %s142
      %p146 = pneg %p140
      %p147 = scmp.eq.s32.totalorder %s19, 3
      %p148 = por %p146, %p147
      %p149 = scmp.ne.s32.totalorder %s141, %s144
      %p150 = scmp.eq.s32.totalorder %s19, 0
      %p151 = por %p149, %p150
      %p152 = scmp.ne.s32.totalorder %s141, %s144
      %p153 = scmp.eq.s32.totalorder %s24, 3
      %p154 = por %p152, %p153
      %p155 = scmp.ne.s32.totalorder %s144, %s145
      %p156 = scmp.eq.s32.totalorder %s24, 0
      %p157 = por %p155, %p156
      %p158 = scmp.ne.s32.totalorder %s144, %s145
      %p159 = scmp.eq.s32.totalorder %s25, 3
      %p160 = por %p158, %p159
      %p162 = scmp.ne.s32.totalorder %s145, %s161
      %p163 = scmp.eq.s32.totalorder %s25, 0
      %p164 = por %p162, %p163
      %s165 = ssub.s32 %s26, %s38
      %p166 = scmp.eq.s32.totalorder %s165, 0
      %s168 = sadd.s32 %s167, 1
      %s169 = scalar_select %p166, %s167, %s168
      %p172 = pneg %p166
      %p173 = scmp.eq.s32.totalorder %s19, 3
      %p174 = por %p172, %p173
      %p175 = scmp.ne.s32.totalorder %s167, %s170
      %p176 = scmp.eq.s32.totalorder %s19, 0
      %p177 = por %p175, %p176
      %p178 = scmp.ne.s32.totalorder %s167, %s170
      %p179 = scmp.eq.s32.totalorder %s24, 3
      %p180 = por %p178, %p179
      %p181 = scmp.ne.s32.totalorder %s170, %s171
      %p182 = scmp.eq.s32.totalorder %s24, 0
      %p183 = por %p181, %p182
      %p184 = scmp.ne.s32.totalorder %s170, %s171
      %p185 = scmp.eq.s32.totalorder %s25, 3
      %p186 = por %p184, %p185
      %p188 = scmp.ne.s32.totalorder %s171, %s187
      %p189 = scmp.eq.s32.totalorder %s25, 0
      %p190 = por %p188, %p189
      %s192 = sadd.s32 %s191, 1
      %p195 = scmp.eq.s32.totalorder %s19, 3
      %p196 = scmp.ne.s32.totalorder %s191, %s193
      %p197 = scmp.eq.s32.totalorder %s19, 0
      %p198 = por %p196, %p197
      %p199 = scmp.ne.s32.totalorder %s191, %s193
      %p200 = scmp.eq.s32.totalorder %s24, 3
      %p201 = por %p199, %p200
      %p202 = scmp.ne.s32.totalorder %s193, %s194
      %p203 = scmp.eq.s32.totalorder %s24, 0
      %p204 = por %p202, %p203
      %p205 = scmp.ne.s32.totalorder %s193, %s194
      %p206 = scmp.eq.s32.totalorder %s25, 3
      %p207 = por %p205, %p206
      %p209 = scmp.ne.s32.totalorder %s194, %s208
      %p210 = scmp.eq.s32.totalorder %s25, 0
      %p211 = por %p209, %p210
      %s213 = sadd.s32 %s212, 1
      %p216 = scmp.eq.s32.totalorder %s19, 3
      %p217 = scmp.ne.s32.totalorder %s212, %s214
      %p218 = scmp.eq.s32.totalorder %s19, 0
      %p219 = por %p217, %p218
      %p220 = scmp.ne.s32.totalorder %s212, %s214
      %p221 = scmp.eq.s32.totalorder %s24, 3
      %p222 = por %p220, %p221
      %p223 = scmp.ne.s32.totalorder %s214, %s215
      %p224 = scmp.eq.s32.totalorder %s24, 0
      %p225 = por %p223, %p224
      %p226 = scmp.ne.s32.totalorder %s214, %s215
      %p227 = scmp.eq.s32.totalorder %s25, 3
      %p228 = por %p226, %p227
      %p230 = scmp.ne.s32.totalorder %s215, %s229
      %p231 = scmp.eq.s32.totalorder %s25, 0
      %p232 = por %p230, %p231
      %s233 = ssub.s32 %s26, %s38
      %s234 = ssub.s32 %s27, %s34
      %s235 = sor.u32 %s233, %s234
      %p236 = scmp.eq.s32.totalorder %s235, 0
      %s238 = sadd.s32 %s237, 1
      %s239 = scalar_select %p236, %s237, %s238
      %p242 = pneg %p236
      %p243 = scmp.eq.s32.totalorder %s19, 3
      %p244 = por %p242, %p243
      %p245 = scmp.ne.s32.totalorder %s237, %s240
      %p246 = scmp.eq.s32.totalorder %s19, 0
      %p247 = por %p245, %p246
      %p248 = scmp.ne.s32.totalorder %s237, %s240
      %p249 = scmp.eq.s32.totalorder %s24, 3
      %p250 = por %p248, %p249
      %p251 = scmp.ne.s32.totalorder %s240, %s241
      %p252 = scmp.eq.s32.totalorder %s24, 0
      %p253 = por %p251, %p252
      %p254 = scmp.ne.s32.totalorder %s240, %s241
      %p255 = scmp.eq.s32.totalorder %s25, 3
      %p256 = por %p254, %p255
      %p258 = scmp.ne.s32.totalorder %s241, %s257
      %p259 = scmp.eq.s32.totalorder %s25, 0
      %p260 = por %p258, %p259
      %s262 = sadd.s32 %s261, 1
      %p265 = scmp.eq.s32.totalorder %s19, 3
      %p266 = scmp.ne.s32.totalorder %s261, %s263
      %p267 = scmp.eq.s32.totalorder %s19, 0
      %p268 = por %p266, %p267
      %p269 = scmp.ne.s32.totalorder %s261, %s263
      %p270 = scmp.eq.s32.totalorder %s24, 3
      %p271 = por %p269, %p270
      %p272 = scmp.ne.s32.totalorder %s263, %s264
      %p273 = scmp.eq.s32.totalorder %s24, 0
      %p274 = por %p272, %p273
      %p275 = scmp.ne.s32.totalorder %s263, %s264
      %p276 = scmp.eq.s32.totalorder %s25, 3
      %p277 = por %p275, %p276
      %p279 = scmp.ne.s32.totalorder %s264, %s278
      %p280 = scmp.eq.s32.totalorder %s25, 0
      %p281 = por %p279, %p280
      %s283 = sadd.s32 %s282, 1
      %p286 = scmp.eq.s32.totalorder %s19, 3
      %p287 = scmp.ne.s32.totalorder %s282, %s284
      %p288 = scmp.eq.s32.totalorder %s19, 0
      %p289 = por %p287, %p288
      %p290 = scmp.ne.s32.totalorder %s282, %s284
      %p291 = scmp.eq.s32.totalorder %s24, 3
      %p292 = por %p290, %p291
      %p293 = scmp.ne.s32.totalorder %s284, %s285
      %p294 = scmp.eq.s32.totalorder %s24, 0
      %p295 = por %p293, %p294
      %p296 = scmp.ne.s32.totalorder %s284, %s285
      %p297 = scmp.eq.s32.totalorder %s25, 3
      %p298 = por %p296, %p297
      %p300 = scmp.ne.s32.totalorder %s285, %s299
      %p301 = scmp.eq.s32.totalorder %s25, 0
      %p302 = por %p300, %p301
      %s303 = ssub.s32 %s26, %s38
      %s304 = ssub.s32 %s27, %s34
      %s305 = sor.u32 %s303, %s304
      %p306 = scmp.eq.s32.totalorder %s305, 0
      %s308 = sadd.s32 %s307, 1
      %s309 = scalar_select %p306, %s307, %s308
      %p312 = pneg %p306
      %p313 = scmp.eq.s32.totalorder %s19, 3
      %p314 = por %p312, %p313
      %p315 = scmp.ne.s32.totalorder %s307, %s310
      %p316 = scmp.eq.s32.totalorder %s19, 0
      %p317 = por %p315, %p316
      %p318 = scmp.ne.s32.totalorder %s307, %s310
      %p319 = scmp.eq.s32.totalorder %s24, 3
      %p320 = por %p318, %p319
      %p321 = scmp.ne.s32.totalorder %s310, %s311
      %p322 = scmp.eq.s32.totalorder %s24, 0
      %p323 = por %p321, %p322
      %p324 = scmp.ne.s32.totalorder %s310, %s311
      %p325 = scmp.eq.s32.totalorder %s25, 3
      %p326 = por %p324, %p325
      %p328 = scmp.ne.s32.totalorder %s311, %s327
      %p329 = scmp.eq.s32.totalorder %s25, 0
      %p330 = por %p328, %p329
      %p331 = scmp.le.s32.totalorder 1, %s19
      %p332 = scmp.lt.s32.totalorder %s19, 5
      %p333 = pnand %p331, %p332
      %p334 = pneg %p333
      // Predicated region
      $region9: #{_lambda_.5} parent=5 // pred_check
        _
      $region10: #{_lambda_.5} parent=5 // pred_check_branch
        %336 = sbr.rel (%p333) target = $region12
      $region11: #{_lambda_.5} parent=5 // pred_region
        %s337 = ssub.s32 %s19, 1
        // Predicated region
        $region13: #{_lambda_.5} parent=11 // pred_check
          %p338 = pneg %p204
        $region14: #{_lambda_.5} parent=11 // pred_check_branch
          %340 = sbr.rel (%p338) target = $region16
        $region15: #{_lambda_.5} parent=11 // pred_region
          _
        $region16: #{_lambda_.5} parent=11 // pred_fallthru
          _
        // Predicated region
        $region17: #{_lambda_.5} parent=11 // pred_check
          %p341 = pneg %p225
        $region18: #{_lambda_.5} parent=11 // pred_check_branch
          %343 = sbr.rel (%p341) target = $region20
        $region19: #{_lambda_.5} parent=11 // pred_region
          _
        $region20: #{_lambda_.5} parent=11 // pred_fallthru
          _
        // Predicated region
        $region21: #{_lambda_.5} parent=11 // pred_check
          %p344 = pneg %p274
        $region22: #{_lambda_.5} parent=11 // pred_check_branch
          %346 = sbr.rel (%p344) target = $region24
        $region23: #{_lambda_.5} parent=11 // pred_region
          _
        $region24: #{_lambda_.5} parent=11 // pred_fallthru
          _
        // Predicated region
        $region25: #{_lambda_.5} parent=11 // pred_check
          %p347 = pneg %p295
        $region26: #{_lambda_.5} parent=11 // pred_check_branch
          %349 = sbr.rel (%p347) target = $region28
        $region27: #{_lambda_.5} parent=11 // pred_region
          _
        $region28: #{_lambda_.5} parent=11 // pred_fallthru
          _
      $region12: #{_lambda_.5} parent=5 // pred_fallthru
        _
      %p350 = scmp.lt.s32.totalorder %s19, 4
      // Predicated region
      $region29: #{_lambda_.5} parent=5 // pred_check
        %p351 = pneg %p350
      $region30: #{_lambda_.5} parent=5 // pred_check_branch
        %353 = sbr.rel (%p351) target = $region32
      $region31: #{_lambda_.5} parent=5 // pred_region
        // Predicated region
        $region33: #{_lambda_.5} parent=31 // pred_check
          %p354 = pneg %p53
        $region34: #{_lambda_.5} parent=31 // pred_check_branch
          %356 = sbr.rel (%p354) target = $region36
        $region35: #{_lambda_.5} parent=31 // pred_region
          %s357 = smul.u32 8, %s27
          %p358 = scmp.lt.s32.totalorder %s26, 1
          %s359 = scalar_select %p358, %s26, 1
          %p360 = scmp.lt.s32.totalorder %s357, 15
          %s361 = scalar_select %p360, %s357, 15
          %s362 = smul.addr %s361, 2
          %s363 = smul.addr %s359, 32
          %s364 = sadd.s32 %s362, %s363
          %s365 = smul.addr %s364, 4
          %s366 = scalar_lea.vmem %s0, %s365
          %s367 = smul.u32 8, %s27
        $region36: #{_lambda_.5} parent=31 // pred_fallthru
          _
        // Predicated region
        $region37: #{_lambda_.5} parent=31 // pred_check
          %p368 = pneg %p89
        $region38: #{_lambda_.5} parent=31 // pred_check_branch
          %370 = sbr.rel (%p368) target = $region40
        $region39: #{_lambda_.5} parent=31 // pred_region
          %s371 = smul.u32 %s27, 8
          %s372 = ssub.s32 %s371, 1
          %p373 = scmp.gt.s32.totalorder %s372, 0
          %s374 = scalar_select %p373, %s372, 0
          %p375 = scmp.lt.s32.totalorder %s26, 1
          %s376 = scalar_select %p375, %s26, 1
          %p377 = scmp.lt.s32.totalorder %s374, 15
          %s378 = scalar_select %p377, %s374, 15
          %s379 = smul.addr %s378, 2
          %s380 = smul.addr %s376, 32
          %s381 = sadd.s32 %s379, %s380
          %s382 = smul.addr %s381, 4
          %s383 = scalar_lea.vmem %s1, %s382
          %s384 = smul.u32 %s27, 8
          %s385 = ssub.s32 %s384, 1
          %p386 = scmp.gt.s32.totalorder %s385, 0
          %s387 = scalar_select %p386, %s385, 0
        $region40: #{_lambda_.5} parent=31 // pred_fallthru
          _
        // Predicated region
        $region41: #{_lambda_.5} parent=31 // pred_check
          %p388 = pneg %p125
        $region42: #{_lambda_.5} parent=31 // pred_check_branch
          %390 = sbr.rel (%p388) target = $region44
        $region43: #{_lambda_.5} parent=31 // pred_region
          %s391 = sadd.s32 %s27, 1
          %s392 = smul.u32 %s391, 8
          %p393 = scmp.lt.s32.totalorder %s392, 15
          %s394 = scalar_select %p393, %s392, 15
          %p395 = scmp.lt.s32.totalorder %s26, 1
          %s396 = scalar_select %p395, %s26, 1
          %p397 = scmp.lt.s32.totalorder %s394, 15
          %s398 = scalar_select %p397, %s394, 15
          %s399 = smul.addr %s398, 2
          %s400 = smul.addr %s396, 32
          %s401 = sadd.s32 %s399, %s400
          %s402 = smul.addr %s401, 4
          %s403 = scalar_lea.vmem %s2, %s402
          %s404 = sadd.s32 %s27, 1
          %s405 = smul.u32 %s404, 8
          %p406 = scmp.lt.s32.totalorder %s405, 15
          %s407 = scalar_select %p406, %s405, 15
        $region44: #{_lambda_.5} parent=31 // pred_fallthru
          _
        // Predicated region
        $region45: #{_lambda_.5} parent=31 // pred_check
          %p408 = pneg %p151
        $region46: #{_lambda_.5} parent=31 // pred_check_branch
          %410 = sbr.rel (%p408) target = $region48
        $region47: #{_lambda_.5} parent=31 // pred_region
          %p411 = scmp.lt.s32.totalorder %s26, 1
          %s412 = scalar_select %p411, %s26, 1
          %s413 = scalar_lea.vmem %s3, %s412
        $region48: #{_lambda_.5} parent=31 // pred_fallthru
          _
        // Predicated region
        $region49: #{_lambda_.5} parent=31 // pred_check
          %p414 = pneg %p177
        $region50: #{_lambda_.5} parent=31 // pred_check_branch
          %416 = sbr.rel (%p414) target = $region52
        $region51: #{_lambda_.5} parent=31 // pred_region
          %p417 = scmp.lt.s32.totalorder %s26, 1
          %s418 = scalar_select %p417, %s26, 1
          %s419 = scalar_lea.vmem %s4, %s418
        $region52: #{_lambda_.5} parent=31 // pred_fallthru
          _
        // Predicated region
        $region53: #{_lambda_.5} parent=31 // pred_check
          %p420 = pneg %p247
        $region54: #{_lambda_.5} parent=31 // pred_check_branch
          %422 = sbr.rel (%p420) target = $region56
        $region55: #{_lambda_.5} parent=31 // pred_region
          %s423 = smul.u32 8, %s27
          %p424 = scmp.lt.s32.totalorder %s26, 1
          %s425 = scalar_select %p424, %s26, 1
          %p426 = scmp.lt.s32.totalorder %s423, 15
          %s427 = scalar_select %p426, %s423, 15
          %s428 = smul.addr %s427, 2
          %s429 = smul.addr %s425, 32
          %s430 = sadd.s32 %s428, %s429
          %s431 = smul.addr %s430, 4
          %s432 = scalar_lea.vmem %s7, %s431
          %s433 = smul.u32 8, %s27
        $region56: #{_lambda_.5} parent=31 // pred_fallthru
          _
      $region32: #{_lambda_.5} parent=5 // pred_fallthru
        _
      %p434 = scmp.le.s32.totalorder 1, %s19
      %p435 = scmp.lt.s32.totalorder %s19, 5
      %p436 = pnand %p434, %p435
      %p437 = pneg %p436
      // Predicated region
      $region57: #{_lambda_.5} parent=5 // pred_check
        _
      $region58: #{_lambda_.5} parent=5 // pred_check_branch
        %439 = sbr.rel (%p436) target = $region60
      $region59: #{_lambda_.5} parent=5 // pred_region
        %s440 = ssub.s32 %s19, 1
        %s441 = smul.u32 8, %s29
        %p442 = scmp.lt.s32.totalorder %s28, 1
        %s443 = scalar_select %p442, %s28, 1
        %p444 = scmp.lt.s32.totalorder %s441, 15
        %s445 = scalar_select %p444, %s441, 15
        %s446 = smul.addr %s445, 2
        %s447 = smul.addr %s443, 32
        %s448 = sadd.s32 %s446, %s447
        %s449 = smul.addr %s448, 4
        %s450 = scalar_lea.vmem %s0, %s449
        %p451 = pneg %p59
        %p452 = pneg %p56
        %s453 = smul.u32 %s29, 8
        %s454 = ssub.s32 %s453, 1
        %p455 = scmp.gt.s32.totalorder %s454, 0
        %s456 = scalar_select %p455, %s454, 0
        %p457 = scmp.lt.s32.totalorder %s28, 1
        %s458 = scalar_select %p457, %s28, 1
        %p459 = scmp.lt.s32.totalorder %s456, 15
        %s460 = scalar_select %p459, %s456, 15
        %s461 = smul.addr %s460, 2
        %s462 = smul.addr %s458, 32
        %s463 = sadd.s32 %s461, %s462
        %s464 = smul.addr %s463, 4
        %s465 = scalar_lea.vmem %s1, %s464
        %p466 = pneg %p95
        %p467 = pneg %p92
        %s468 = sadd.s32 %s29, 1
        %s469 = smul.u32 %s468, 8
        %p470 = scmp.lt.s32.totalorder %s469, 15
        %s471 = scalar_select %p470, %s469, 15
        %p472 = scmp.lt.s32.totalorder %s28, 1
        %s473 = scalar_select %p472, %s28, 1
        %p474 = scmp.lt.s32.totalorder %s471, 15
        %s475 = scalar_select %p474, %s471, 15
        %s476 = smul.addr %s475, 2
        %s477 = smul.addr %s473, 32
        %s478 = sadd.s32 %s476, %s477
        %s479 = smul.addr %s478, 4
        %s480 = scalar_lea.vmem %s2, %s479
        %p481 = pneg %p131
        %p482 = pneg %p128
        %p483 = scmp.lt.s32.totalorder %s28, 1
        %s484 = scalar_select %p483, %s28, 1
        %s485 = scalar_lea.vmem %s3, %s484
        %p486 = pneg %p157
        %p487 = pneg %p154
        %p488 = scmp.lt.s32.totalorder %s28, 1
        %s489 = scalar_select %p488, %s28, 1
        %s490 = scalar_lea.vmem %s4, %s489
        %p491 = pneg %p183
        %p492 = pneg %p180
        %p493 = pneg %p204
        %p494 = pneg %p201
        %p495 = pneg %p225
        %p496 = pneg %p222
        %s497 = smul.u32 8, %s29
        %p498 = scmp.lt.s32.totalorder %s28, 1
        %s499 = scalar_select %p498, %s28, 1
        %p500 = scmp.lt.s32.totalorder %s497, 15
        %s501 = scalar_select %p500, %s497, 15
        %s502 = smul.addr %s501, 2
        %s503 = smul.addr %s499, 32
        %s504 = sadd.s32 %s502, %s503
        %s505 = smul.addr %s504, 4
        %s506 = scalar_lea.vmem %s7, %s505
        %p507 = pneg %p253
        %p508 = pneg %p250
        %p509 = pneg %p274
        %p510 = pneg %p271
        %p511 = pneg %p295
        %p512 = pneg %p292
        %p513 = pneg %p323
        %p514 = pneg %p320
        %s515 = sand.u32 %s310, 1
        %s516 = scalar_lea.sflag [#allocation3], %s515
        %s517 = sand.u32 %s310, 1
        %s518 = smul.addr %s517, 128
        %s519 = scalar_lea.vmem [#allocation2], %s518
        %s520 = smul.u32 8, %s29
        %p521 = scmp.lt.s32.totalorder %s28, 1
        %s522 = scalar_select %p521, %s28, 1
        %p523 = scmp.lt.s32.totalorder %s520, 15
        %s524 = scalar_select %p523, %s520, 15
        %s525 = smul.addr %s524, 2
        %s526 = smul.addr %s522, 32
        %s527 = sadd.s32 %s525, %s526
        %s528 = smul.addr %s527, 4
        %s529 = scalar_lea.vmem %s0, %s528
        %s530 = smul.u32 8, %s29
        %s531 = smul.u32 %s29, 8
        %s532 = ssub.s32 %s531, 1
        %p533 = scmp.gt.s32.totalorder %s532, 0
        %s534 = scalar_select %p533, %s532, 0
        %p535 = scmp.lt.s32.totalorder %s28, 1
        %s536 = scalar_select %p535, %s28, 1
        %p537 = scmp.lt.s32.totalorder %s534, 15
        %s538 = scalar_select %p537, %s534, 15
        %s539 = smul.addr %s538, 2
        %s540 = smul.addr %s536, 32
        %s541 = sadd.s32 %s539, %s540
        %s542 = smul.addr %s541, 4
        %s543 = scalar_lea.vmem %s1, %s542
        %s544 = smul.u32 %s29, 8
        %s545 = ssub.s32 %s544, 1
        %p546 = scmp.gt.s32.totalorder %s545, 0
        %s547 = scalar_select %p546, %s545, 0
        %s548 = sadd.s32 %s29, 1
        %s549 = smul.u32 %s548, 8
        %p550 = scmp.lt.s32.totalorder %s549, 15
        %s551 = scalar_select %p550, %s549, 15
        %p552 = scmp.lt.s32.totalorder %s28, 1
        %s553 = scalar_select %p552, %s28, 1
        %p554 = scmp.lt.s32.totalorder %s551, 15
        %s555 = scalar_select %p554, %s551, 15
        %s556 = smul.addr %s555, 2
        %s557 = smul.addr %s553, 32
        %s558 = sadd.s32 %s556, %s557
        %s559 = smul.addr %s558, 4
        %s560 = scalar_lea.vmem %s2, %s559
        %s561 = sadd.s32 %s29, 1
        %s562 = smul.u32 %s561, 8
        %p563 = scmp.lt.s32.totalorder %s562, 15
        %s564 = scalar_select %p563, %s562, 15
        %p565 = scmp.lt.s32.totalorder %s28, 1
        %s566 = scalar_select %p565, %s28, 1
        %s567 = scalar_lea.vmem %s3, %s566
        %p568 = scmp.lt.s32.totalorder %s28, 1
        %s569 = scalar_select %p568, %s28, 1
        %s570 = scalar_lea.vmem %s4, %s569
        %s571 = smul.u32 8, %s29
        %p572 = scmp.lt.s32.totalorder %s28, 1
        %s573 = scalar_select %p572, %s28, 1
        %p574 = scmp.lt.s32.totalorder %s571, 15
        %s575 = scalar_select %p574, %s571, 15
        %s576 = smul.addr %s575, 2
        %s577 = smul.addr %s573, 32
        %s578 = sadd.s32 %s576, %s577
        %s579 = smul.addr %s578, 4
        %s580 = scalar_lea.vmem %s7, %s579
        %s581 = smul.u32 8, %s29
        %s582 = smul.u32 8, %s29
        %v584 = vld [vmem:[%s567] sm:$0x1]
        %v585 = vld [vmem:[%s570] sm:$0x1]
        %v586 = vld [vmem:[%s529] sm:$0xf]
        %v587 = vld [vmem:[%s529 + $0x4] sm:$0xf]
        %v588 = vld [vmem:[%s529 + $0x8] sm:$0xf]
        %v589 = vld [vmem:[%s529 + $0xc] sm:$0xf]
        %v590 = vld [vmem:[%s529 + $0x10] sm:$0xf]
        %v591 = vld [vmem:[%s529 + $0x14] sm:$0xf]
        %v592 = vld [vmem:[%s529 + $0x18] sm:$0xf]
        %v593 = vld [vmem:[%s529 + $0x1c] sm:$0xf]
        %v594 = vld [vmem:[%s529 + $0x20] sm:$0xf]
        %v595 = vld [vmem:[%s529 + $0x24] sm:$0xf]
        %v596 = vld [vmem:[%s529 + $0x28] sm:$0xf]
        %v597 = vld [vmem:[%s529 + $0x2c] sm:$0xf]
        %v598 = vld [vmem:[%s529 + $0x30] sm:$0xf]
        %v599 = vld [vmem:[%s529 + $0x34] sm:$0xf]
        %v600 = vld [vmem:[%s529 + $0x38] sm:$0xf]
        %v601 = vld [vmem:[%s529 + $0x3c] sm:$0xf]
        %v602 = vunpack.c.l.bf16 %v586
        %v603 = vunpack.c.l.bf16 %v587
        %v604 = vunpack.c.l.bf16 %v588
        %v605 = vunpack.c.l.bf16 %v589
        %v606 = vunpack.c.l.bf16 %v590
        %v607 = vunpack.c.l.bf16 %v591
        %v608 = vunpack.c.l.bf16 %v592
        %v609 = vunpack.c.l.bf16 %v593
        %v610 = vunpack.c.l.bf16 %v594
        %v611 = vunpack.c.l.bf16 %v595
        %v612 = vunpack.c.l.bf16 %v596
        %v613 = vunpack.c.l.bf16 %v597
        %v614 = vunpack.c.l.bf16 %v598
        %v615 = vunpack.c.l.bf16 %v599
        %v616 = vunpack.c.l.bf16 %v600
        %v617 = vunpack.c.l.bf16 %v601
        %v619 = vlaneseq
        %v620 = vshrl.u32 %v619, 7
        %v621 = vsub.s32 0, %v620
        %v622 = vrot.slane %v584, %v621
        %v624 = vmul.f32 %v602, %v622
        %v625 = vmul.f32 %v603, %v622
        %v626 = vmul.f32 %v604, %v622
        %v627 = vmul.f32 %v605, %v622
        %v628 = vmul.f32 %v606, %v622
        %v629 = vmul.f32 %v607, %v622
        %v630 = vmul.f32 %v608, %v622
        %v631 = vmul.f32 %v609, %v622
        %v632 = vmul.f32 %v610, %v622
        %v633 = vmul.f32 %v611, %v622
        %v634 = vmul.f32 %v612, %v622
        %v635 = vmul.f32 %v613, %v622
        %v636 = vmul.f32 %v614, %v622
        %v637 = vmul.f32 %v615, %v622
        %v638 = vmul.f32 %v616, %v622
        %v639 = vmul.f32 %v617, %v622
        %v641 = vlaneseq
        %v642 = vshrl.u32 %v641, 7
        %v643 = vsub.s32 0, %v642
        %v644 = vrot.slane %v585, %v643
        %v646 = vadd.f32 %v624, %v644
        %v647 = vadd.f32 %v625, %v644
        %v648 = vadd.f32 %v626, %v644
        %v649 = vadd.f32 %v627, %v644
        %v650 = vadd.f32 %v628, %v644
        %v651 = vadd.f32 %v629, %v644
        %v652 = vadd.f32 %v630, %v644
        %v653 = vadd.f32 %v631, %v644
        %v654 = vadd.f32 %v632, %v644
        %v655 = vadd.f32 %v633, %v644
        %v656 = vadd.f32 %v634, %v644
        %v657 = vadd.f32 %v635, %v644
        %v658 = vadd.f32 %v636, %v644
        %v659 = vadd.f32 %v637, %v644
        %v660 = vadd.f32 %v638, %v644
        %v661 = vadd.f32 %v639, %v644
        %v662 = vxor.u32 %v646, 2147483648
        %v663 = vxor.u32 %v647, 2147483648
        %v664 = vxor.u32 %v648, 2147483648
        %v665 = vxor.u32 %v649, 2147483648
        %v666 = vxor.u32 %v650, 2147483648
        %v667 = vxor.u32 %v651, 2147483648
        %v668 = vxor.u32 %v652, 2147483648
        %v669 = vxor.u32 %v653, 2147483648
        %v670 = vxor.u32 %v654, 2147483648
        %v671 = vxor.u32 %v655, 2147483648
        %v672 = vxor.u32 %v656, 2147483648
        %v673 = vxor.u32 %v657, 2147483648
        %v674 = vxor.u32 %v658, 2147483648
        %v675 = vxor.u32 %v659, 2147483648
        %v676 = vxor.u32 %v660, 2147483648
        %v677 = vxor.u32 %v661, 2147483648
        %v678 = vmul.f32 %v662, 1.442695
        %v679 = vpow.pop %v678
        %v680 = vmul.f32 %v663, 1.442695
        %v681 = vpow.pop %v680
        %v682 = vmul.f32 %v664, 1.442695
        %v683 = vpow.pop %v682
        %v684 = vmul.f32 %v665, 1.442695
        %v685 = vpow.pop %v684
        %v686 = vmul.f32 %v666, 1.442695
        %v687 = vpow.pop %v686
        %v688 = vmul.f32 %v667, 1.442695
        %v689 = vpow.pop %v688
        %v690 = vmul.f32 %v668, 1.442695
        %v691 = vpow.pop %v690
        %v692 = vmul.f32 %v669, 1.442695
        %v693 = vpow.pop %v692
        %v694 = vmul.f32 %v670, 1.442695
        %v695 = vpow.pop %v694
        %v696 = vmul.f32 %v671, 1.442695
        %v697 = vpow.pop %v696
        %v698 = vmul.f32 %v672, 1.442695
        %v699 = vpow.pop %v698
        %v700 = vmul.f32 %v673, 1.442695
        %v701 = vpow.pop %v700
        %v702 = vmul.f32 %v674, 1.442695
        %v703 = vpow.pop %v702
        %v704 = vmul.f32 %v675, 1.442695
        %v705 = vpow.pop %v704
        %v706 = vmul.f32 %v676, 1.442695
        %v707 = vpow.pop %v706
        %v708 = vmul.f32 %v677, 1.442695
        %v709 = vpow.pop %v708
        %v710 = vadd.f32 %v679, 1.0
        %v711 = vadd.f32 %v681, 1.0
        %v712 = vadd.f32 %v683, 1.0
        %v713 = vadd.f32 %v685, 1.0
        %v714 = vadd.f32 %v687, 1.0
        %v715 = vadd.f32 %v689, 1.0
        %v716 = vadd.f32 %v691, 1.0
        %v717 = vadd.f32 %v693, 1.0
        %v718 = vadd.f32 %v695, 1.0
        %v719 = vadd.f32 %v697, 1.0
        %v720 = vadd.f32 %v699, 1.0
        %v721 = vadd.f32 %v701, 1.0
        %v722 = vadd.f32 %v703, 1.0
        %v723 = vadd.f32 %v705, 1.0
        %v724 = vadd.f32 %v707, 1.0
        %v725 = vadd.f32 %v709, 1.0
        %v726 = vrcp.pop %v710
        %v727 = vmul.f32 1.0, %v726
        %v728 = vrcp.pop %v711
        %v729 = vmul.f32 1.0, %v728
        %v730 = vrcp.pop %v712
        %v731 = vmul.f32 1.0, %v730
        %v732 = vrcp.pop %v713
        %v733 = vmul.f32 1.0, %v732
        %v734 = vrcp.pop %v714
        %v735 = vmul.f32 1.0, %v734
        %v736 = vrcp.pop %v715
        %v737 = vmul.f32 1.0, %v736
        %v738 = vrcp.pop %v716
        %v739 = vmul.f32 1.0, %v738
        %v740 = vrcp.pop %v717
        %v741 = vmul.f32 1.0, %v740
        %v742 = vrcp.pop %v718
        %v743 = vmul.f32 1.0, %v742
        %v744 = vrcp.pop %v719
        %v745 = vmul.f32 1.0, %v744
        %v746 = vrcp.pop %v720
        %v747 = vmul.f32 1.0, %v746
        %v748 = vrcp.pop %v721
        %v749 = vmul.f32 1.0, %v748
        %v750 = vrcp.pop %v722
        %v751 = vmul.f32 1.0, %v750
        %v752 = vrcp.pop %v723
        %v753 = vmul.f32 1.0, %v752
        %v754 = vrcp.pop %v724
        %v755 = vmul.f32 1.0, %v754
        %v756 = vrcp.pop %v725
        %v757 = vmul.f32 1.0, %v756
        %v758 = vmul.f32 %v646, %v727
        %v759 = vmul.f32 %v647, %v729
        %v760 = vmul.f32 %v648, %v731
        %v761 = vmul.f32 %v649, %v733
        %v762 = vmul.f32 %v650, %v735
        %v763 = vmul.f32 %v651, %v737
        %v764 = vmul.f32 %v652, %v739
        %v765 = vmul.f32 %v653, %v741
        %v766 = vmul.f32 %v654, %v743
        %v767 = vmul.f32 %v655, %v745
        %v768 = vmul.f32 %v656, %v747
        %v769 = vmul.f32 %v657, %v749
        %v770 = vmul.f32 %v658, %v751
        %v771 = vmul.f32 %v659, %v753
        %v772 = vmul.f32 %v660, %v755
        %v773 = vmul.f32 %v661, %v757
        %v774 = vpack.c.bf16 %v759, %v758
        %v775 = vpack.c.bf16 %v761, %v760
        %v776 = vpack.c.bf16 %v763, %v762
        %v777 = vpack.c.bf16 %v765, %v764
        %v778 = vpack.c.bf16 %v767, %v766
        %v779 = vpack.c.bf16 %v769, %v768
        %v780 = vpack.c.bf16 %v771, %v770
        %v781 = vpack.c.bf16 %v773, %v772
        %p782 = scmp.gt.s32.totalorder %s29, 0
        %v783 = vld [vmem:[%s543] sm:$0xf]
        %v784 = vld [vmem:[%s543 + $0x4] sm:$0xf]
        %v785 = vunpack.c.l.bf16 %v783
        %v786 = vunpack.c.l.bf16 %v784
        %v787 = vmul.f32 %v785, %v622
        %v788 = vmul.f32 %v786, %v622
        %v789 = vadd.f32 %v787, %v644
        %v790 = vadd.f32 %v788, %v644
        %v791 = vxor.u32 %v789, 2147483648
        %v792 = vxor.u32 %v790, 2147483648
        %v793 = vmul.f32 %v791, 1.442695
        %v794 = vpow.pop %v793
        %v795 = vmul.f32 %v792, 1.442695
        %v796 = vpow.pop %v795
        %v797 = vadd.f32 %v794, 1.0
        %v798 = vadd.f32 %v796, 1.0
        %v799 = vrcp.pop %v797
        %v800 = vmul.f32 1.0, %v799
        %v801 = vrcp.pop %v798
        %v802 = vmul.f32 1.0, %v801
        %v803 = vmul.f32 %v789, %v800
        %v804 = vmul.f32 %v790, %v802
        %v805 = vpack.c.bf16 %v804, %v803
        %s806 = scalar_select %p782, 1, 0
        %v807 = vstv %s806
        %vm808 = vcmp.gt.s32.totalorder %v807, 0
        %v809 = vsel %vm808, %v805, 0
        %p810 = scmp.lt.s32.totalorder %s29, 1
        %v811 = vld [vmem:[%s560] sm:$0xf]
        %v812 = vld [vmem:[%s560 + $0x4] sm:$0xf]
        %v813 = vunpack.c.l.bf16 %v811
        %v814 = vunpack.c.l.bf16 %v812
        %v815 = vmul.f32 %v813, %v622
        %v816 = vmul.f32 %v814, %v622
        %v817 = vadd.f32 %v815, %v644
        %v818 = vadd.f32 %v816, %v644
        %v819 = vxor.u32 %v817, 2147483648
        %v820 = vxor.u32 %v818, 2147483648
        %v821 = vmul.f32 %v819, 1.442695
        %v822 = vpow.pop %v821
        %v823 = vmul.f32 %v820, 1.442695
        %v824 = vpow.pop %v823
        %v825 = vadd.f32 %v822, 1.0
        %v826 = vadd.f32 %v824, 1.0
        %v827 = vrcp.pop %v825
        %v828 = vmul.f32 1.0, %v827
        %v829 = vrcp.pop %v826
        %v830 = vmul.f32 1.0, %v829
        %v831 = vmul.f32 %v817, %v828
        %v832 = vmul.f32 %v818, %v830
        %v833 = vpack.c.bf16 %v832, %v831
        %s834 = scalar_select %p810, 1, 0
        %v835 = vstv %s834
        %vm836 = vcmp.gt.s32.totalorder %v835, 0
        %v837 = vsel %vm836, %v833, 0
        %v839 = vshrl.u32 %v809, 16
        %v841 = vrot.slane %v839, 7
        %v842 = vshll.u32 %v809, 16
        %v844 = vor.u32 %v841, %v842
        %v846 = vshrl.u32 %v774, 16
        %v848 = vrot.slane %v846, 7
        %v849 = vshll.u32 %v774, 16
        %v851 = vor.u32 %v848, %v849
        %v853 = vshrl.u32 %v775, 16
        %v855 = vrot.slane %v853, 7
        %v856 = vshll.u32 %v775, 16
        %v858 = vor.u32 %v855, %v856
        %v860 = vshrl.u32 %v776, 16
        %v862 = vrot.slane %v860, 7
        %v863 = vshll.u32 %v776, 16
        %v865 = vor.u32 %v862, %v863
        %v867 = vshrl.u32 %v777, 16
        %v869 = vrot.slane %v867, 7
        %v870 = vshll.u32 %v777, 16
        %v872 = vor.u32 %v869, %v870
        %v874 = vshrl.u32 %v778, 16
        %v876 = vrot.slane %v874, 7
        %v877 = vshll.u32 %v778, 16
        %v879 = vor.u32 %v876, %v877
        %v881 = vshrl.u32 %v779, 16
        %v883 = vrot.slane %v881, 7
        %v884 = vshll.u32 %v779, 16
        %v886 = vor.u32 %v883, %v884
        %v888 = vshrl.u32 %v780, 16
        %v890 = vrot.slane %v888, 7
        %v891 = vshll.u32 %v780, 16
        %v893 = vor.u32 %v890, %v891
        %v895 = vshrl.u32 %v781, 16
        %v897 = vrot.slane %v895, 7
        %v898 = vshll.u32 %v781, 16
        %v900 = vor.u32 %v897, %v898
        %v902 = vshrl.u32 %v837, 16
        %v904 = vrot.slane %v902, 7
        %v905 = vshll.u32 %v837, 16
        %v907 = vor.u32 %v904, %v905
        %vm918 = vcmask 1040384
        %vm919 = vsmask.f32 256
        %vm920 = vmand %vm918, %vm919
        %v921 = vsel %vm920, 0, %v844
        %v922 = vsel %vm920, 0, %v851
        %v923 = vsel %vm920, 0, %v858
        %v924 = vsel %vm920, 0, %v865
        %v925 = vsel %vm920, 0, %v872
        %v926 = vsel %vm920, 0, %v879
        %v927 = vsel %vm920, 0, %v886
        %v928 = vsel %vm920, 0, %v893
        %v929 = vsel %vm920, 0, %v900
        %v930 = vsel %vm920, 0, %v907
        %v931 = vrot.slane %v842, 1
        %v932 = vor.u32 %v839, %v931
        %v933 = vrot.slane %v849, 1
        %v934 = vor.u32 %v846, %v933
        %v935 = vrot.slane %v856, 1
        %v936 = vor.u32 %v853, %v935
        %v937 = vrot.slane %v863, 1
        %v938 = vor.u32 %v860, %v937
        %v939 = vrot.slane %v870, 1
        %v940 = vor.u32 %v867, %v939
        %v941 = vrot.slane %v877, 1
        %v942 = vor.u32 %v874, %v941
        %v943 = vrot.slane %v884, 1
        %v944 = vor.u32 %v881, %v943
        %v945 = vrot.slane %v891, 1
        %v946 = vor.u32 %v888, %v945
        %v947 = vrot.slane %v898, 1
        %v948 = vor.u32 %v895, %v947
        %v949 = vrot.slane %v905, 1
        %v950 = vor.u32 %v902, %v949
        %vm961 = vcmask 1047552
        %vm962 = vsmask.f32 7424
        %vm963 = vmand %vm961, %vm962
        %v964 = vsel %vm963, %v932, 0
        %v965 = vsel %vm963, %v934, 0
        %v966 = vsel %vm963, %v936, 0
        %v967 = vsel %vm963, %v938, 0
        %v968 = vsel %vm963, %v940, 0
        %v969 = vsel %vm963, %v942, 0
        %v970 = vsel %vm963, %v944, 0
        %v971 = vsel %vm963, %v946, 0
        %v972 = vsel %vm963, %v948, 0
        %v973 = vsel %vm963, %v950, 0
        %984 = vrot.lane.b32.xlu0 %v809, 64
        %v985 = vpop.permute.xlu0 %984
        %986 = vrot.lane.b32.xlu0 %v774, 64
        %v987 = vpop.permute.xlu0 %986
        %988 = vrot.lane.b32.xlu0 %v775, 64
        %v989 = vpop.permute.xlu0 %988
        %990 = vrot.lane.b32.xlu0 %v776, 64
        %v991 = vpop.permute.xlu0 %990
        %992 = vrot.lane.b32.xlu0 %v777, 64
        %v993 = vpop.permute.xlu0 %992
        %994 = vrot.lane.b32.xlu0 %v778, 64
        %v995 = vpop.permute.xlu0 %994
        %996 = vrot.lane.b32.xlu0 %v779, 64
        %v997 = vpop.permute.xlu0 %996
        %998 = vrot.lane.b32.xlu0 %v780, 64
        %v999 = vpop.permute.xlu0 %998
        %1000 = vrot.lane.b32.xlu0 %v781, 64
        %v1001 = vpop.permute.xlu0 %1000
        %1002 = vrot.lane.b32.xlu0 %v837, 64
        %v1003 = vpop.permute.xlu0 %1002
        %vm1004 = vcmask 523264
        %v1007 = vsel %vm1004, %v921, %v985
        %v1011 = vsel %vm1004, %v922, %v987
        %v1015 = vsel %vm1004, %v923, %v989
        %v1019 = vsel %vm1004, %v924, %v991
        %v1023 = vsel %vm1004, %v925, %v993
        %v1027 = vsel %vm1004, %v926, %v995
        %v1031 = vsel %vm1004, %v927, %v997
        %v1035 = vsel %vm1004, %v928, %v999
        %v1039 = vsel %vm1004, %v929, %v1001
        %v1043 = vsel %vm1004, %v930, %v1003
        %v1045 = vld [vmem:[%s5] sm:$0xf]
        %v1046 = vld [vmem:[%s5 + $0x4] sm:$0xf]
        %v1047 = vld [vmem:[%s5 + $0x8] sm:$0xf]
        %v1048 = vld [vmem:[%s5 + $0xc] sm:$0xf]
        %v1049 = vld [vmem:[%s5 + $0x10] sm:$0xf]
        %v1050 = vld [vmem:[%s5 + $0x14] sm:$0xf]
        %v1051 = vld [vmem:[%s5 + $0x18] sm:$0xf]
        %v1052 = vld [vmem:[%s5 + $0x1c] sm:$0xf]
        %v1053 = vld [vmem:[%s5 + $0x20] sm:$0xf]
        %v1054 = vld [vmem:[%s5 + $0x24] sm:$0xf]
        %v1055 = vld [vmem:[%s5 + $0x28] sm:$0xf]
        %v1056 = vld [vmem:[%s5 + $0x2c] sm:$0xf]
        %v1057 = vld [vmem:[%s5 + $0x30] sm:$0xf]
        %v1058 = vld [vmem:[%s5 + $0x34] sm:$0xf]
        %v1059 = vld [vmem:[%s5 + $0x38] sm:$0xf]
        %v1060 = vld [vmem:[%s5 + $0x3c] sm:$0xf]
        %v1061 = vld [vmem:[%s5 + $0x40] sm:$0xf]
        %v1062 = vld [vmem:[%s5 + $0x44] sm:$0xf]
        %v1063 = vld [vmem:[%s5 + $0x48] sm:$0xf]
        %v1064 = vld [vmem:[%s5 + $0x4c] sm:$0xf]
        %v1065 = vld [vmem:[%s5 + $0x50] sm:$0xf]
        %v1066 = vld [vmem:[%s5 + $0x54] sm:$0xf]
        %v1067 = vld [vmem:[%s5 + $0x58] sm:$0xf]
        %v1068 = vld [vmem:[%s5 + $0x5c] sm:$0xf]
        %s1069 = scalar_lea.vmem %s5, 96
        %v1070 = vld [vmem:[%s1069] sm:$0xf]
        %v1071 = vld [vmem:[%s1069 + $0x4] sm:$0xf]
        %v1072 = vld [vmem:[%s1069 + $0x8] sm:$0xf]
        %v1073 = vld [vmem:[%s1069 + $0xc] sm:$0xf]
        %v1074 = vld [vmem:[%s1069 + $0x10] sm:$0xf]
        %v1075 = vld [vmem:[%s1069 + $0x14] sm:$0xf]
        %v1076 = vld [vmem:[%s1069 + $0x18] sm:$0xf]
        %v1077 = vld [vmem:[%s1069 + $0x1c] sm:$0xf]
        %v1078 = vld [vmem:[%s1069 + $0x20] sm:$0xf]
        %v1079 = vld [vmem:[%s1069 + $0x24] sm:$0xf]
        %v1080 = vld [vmem:[%s1069 + $0x28] sm:$0xf]
        %v1081 = vld [vmem:[%s1069 + $0x2c] sm:$0xf]
        %v1082 = vld [vmem:[%s1069 + $0x30] sm:$0xf]
        %v1083 = vld [vmem:[%s1069 + $0x34] sm:$0xf]
        %v1084 = vld [vmem:[%s1069 + $0x38] sm:$0xf]
        %v1085 = vld [vmem:[%s1069 + $0x3c] sm:$0xf]
        %v1086 = vld [vmem:[%s1069 + $0x40] sm:$0xf]
        %v1087 = vld [vmem:[%s1069 + $0x44] sm:$0xf]
        %v1088 = vld [vmem:[%s1069 + $0x48] sm:$0xf]
        %v1089 = vld [vmem:[%s1069 + $0x4c] sm:$0xf]
        %v1090 = vld [vmem:[%s1069 + $0x50] sm:$0xf]
        %v1091 = vld [vmem:[%s1069 + $0x54] sm:$0xf]
        %v1092 = vld [vmem:[%s1069 + $0x58] sm:$0xf]
        %v1093 = vld [vmem:[%s1069 + $0x5c] sm:$0xf]
        %v1118 = vunpack.c.l.b16 %v1070
        %v1119 = vunpack.c.l.b16 %v1071
        %v1120 = vunpack.c.l.b16 %v1072
        %v1121 = vunpack.c.l.b16 %v1073
        %v1122 = vunpack.c.l.b16 %v1074
        %v1123 = vunpack.c.l.b16 %v1075
        %v1124 = vunpack.c.l.b16 %v1076
        %v1125 = vunpack.c.l.b16 %v1077
        %v1126 = vunpack.c.l.b16 %v1078
        %v1127 = vunpack.c.l.b16 %v1079
        %v1128 = vunpack.c.l.b16 %v1080
        %v1129 = vunpack.c.l.b16 %v1081
        %v1130 = vunpack.c.l.b16 %v1082
        %v1131 = vunpack.c.l.b16 %v1083
        %v1132 = vunpack.c.l.b16 %v1084
        %v1133 = vunpack.c.l.b16 %v1085
        %v1134 = vunpack.c.l.b16 %v1086
        %v1135 = vunpack.c.l.b16 %v1087
        %v1136 = vunpack.c.l.b16 %v1088
        %v1137 = vunpack.c.l.b16 %v1089
        %v1138 = vunpack.c.l.b16 %v1090
        %v1139 = vunpack.c.l.b16 %v1091
        %v1140 = vunpack.c.l.b16 %v1092
        %v1141 = vunpack.c.l.b16 %v1093
        %v1142 = vpack.c.b16 %v1119, %v1118
        %v1143 = vpack.c.b16 %v1121, %v1120
        %v1144 = vpack.c.b16 %v1123, %v1122
        %v1145 = vpack.c.b16 %v1125, %v1124
        %v1146 = vpack.c.b16 %v1127, %v1126
        %v1147 = vpack.c.b16 %v1129, %v1128
        %v1148 = vpack.c.b16 %v1131, %v1130
        %v1149 = vpack.c.b16 %v1133, %v1132
        %v1150 = vpack.c.b16 %v1135, %v1134
        %v1151 = vpack.c.b16 %v1137, %v1136
        %v1152 = vpack.c.b16 %v1139, %v1138
        %v1153 = vpack.c.b16 %v1141, %v1140
        %v1167 = vsel %vm1004, %v965, 0
        %v1170 = vsel %vm1004, %v966, 0
        %v1173 = vsel %vm1004, %v967, 0
        %v1176 = vsel %vm1004, %v968, 0
        %v1179 = vsel %vm1004, %v969, 0
        %v1182 = vsel %vm1004, %v970, 0
        %v1185 = vsel %vm1004, %v971, 0
        %v1188 = vsel %vm1004, %v972, 0
        %1190 = vmatprep.subr.bf16.mxu0 0
        %1191 = vmatpush1.bf16.msra.mxu0 %v1149
        %1192 = vmatprep.subr.bf16.mxu0 0
        %1193 = vmatpush1.bf16.msra.mxu0 %v1148
        %1194 = vmatprep.subr.bf16.mxu0 0
        %1195 = vmatpush1.bf16.msra.mxu0 %v1147
        %1196 = vmatprep.subr.bf16.mxu0 0
        %1197 = vmatpush1.bf16.msra.mxu0 %v1146
        %1198 = vmatprep.subr.bf16.mxu0 0
        %1199 = vmatpush1.bf16.msra.mxu0 %v1145
        %1200 = vmatprep.subr.bf16.mxu0 0
        %1201 = vmatpush1.bf16.msra.mxu0 %v1144
        %1202 = vmatprep.subr.bf16.mxu0 0
        %1203 = vmatpush1.bf16.msra.mxu0 %v1143
        %1204 = vmatprep.subr.bf16.mxu0 0
        %1205 = vmatpush1.bf16.msra.mxu0 %v1142
        %1206 = vmatprep.subr.bf16.mxu0 0
        %1207 = vmatpush2.bf16.msra.mxu0 0
        %1208 = vmatprep.subr.bf16.mxu0 0
        %1209 = vmatpush2.bf16.msra.mxu0 0
        %1210 = vmatprep.subr.bf16.mxu0 0
        %1211 = vmatpush2.bf16.msra.mxu0 0
        %1212 = vmatprep.subr.bf16.mxu0 0
        %1213 = vmatpush2.bf16.msra.mxu0 0
        %1214 = vmatprep.subr.bf16.mxu0 0
        %1215 = vmatpush2.bf16.msra.mxu0 %v1153
        %1216 = vmatprep.subr.bf16.mxu0 0
        %1217 = vmatpush2.bf16.msra.mxu0 %v1152
        %1218 = vmatprep.subr.bf16.mxu0 0
        %1219 = vmatpush2.bf16.msra.mxu0 %v1151
        %1220 = vmatprep.subr.bf16.mxu0 0
        %1221 = vmatpush2.bf16.msra.mxu0 %v1150
        %1222 = vmatprep.mubr.bf16.mxu0 %v1167
        %1223 = vmatmul.mubr.bf16.gmra.mxu0 %v1011
        %v1224 = vpop.f32.mrf.mxu0
        %v1225 = vadd.f32 0.0, %v1224
        %v1226 = vpop.f32.mrf.mxu0
        %v1227 = vpop.f32.mrf.mxu0
        %v1228 = vadd.f32 0.0, %v1227
        %v1229 = vpop.f32.mrf.mxu0
        %1230 = vmatprep.mubr.bf16.mxu0 %v1170
        %1231 = vmatmul.mubr.bf16.gmra.mxu0 %v1015
        %v1232 = vpop.f32.mrf.mxu0
        %v1233 = vadd.f32 0.0, %v1232
        %v1234 = vpop.f32.mrf.mxu0
        %v1235 = vpop.f32.mrf.mxu0
        %v1236 = vadd.f32 0.0, %v1235
        %v1237 = vpop.f32.mrf.mxu0
        %1238 = vmatprep.mubr.bf16.mxu0 %v1173
        %1239 = vmatmul.mubr.bf16.gmra.mxu0 %v1019
        %v1240 = vpop.f32.mrf.mxu0
        %v1241 = vadd.f32 0.0, %v1240
        %v1242 = vpop.f32.mrf.mxu0
        %v1243 = vpop.f32.mrf.mxu0
        %v1244 = vadd.f32 0.0, %v1243
        %v1245 = vpop.f32.mrf.mxu0
        %1246 = vmatprep.mubr.bf16.mxu0 %v1176
        %1247 = vmatmul.mubr.bf16.gmra.mxu0 %v1023
        %v1248 = vpop.f32.mrf.mxu0
        %v1249 = vadd.f32 0.0, %v1248
        %v1250 = vpop.f32.mrf.mxu0
        %v1251 = vpop.f32.mrf.mxu0
        %v1252 = vadd.f32 0.0, %v1251
        %v1253 = vpop.f32.mrf.mxu0
        %1254 = vmatprep.mubr.bf16.mxu0 %v1179
        %1255 = vmatmul.mubr.bf16.gmra.mxu0 %v1027
        %v1256 = vpop.f32.mrf.mxu0
        %v1257 = vadd.f32 0.0, %v1256
        %v1258 = vpop.f32.mrf.mxu0
        %v1259 = vpop.f32.mrf.mxu0
        %v1260 = vadd.f32 0.0, %v1259
        %v1261 = vpop.f32.mrf.mxu0
        %1262 = vmatprep.mubr.bf16.mxu0 %v1182
        %1263 = vmatmul.mubr.bf16.gmra.mxu0 %v1031
        %v1264 = vpop.f32.mrf.mxu0
        %v1265 = vadd.f32 0.0, %v1264
        %v1266 = vpop.f32.mrf.mxu0
        %v1267 = vpop.f32.mrf.mxu0
        %v1268 = vadd.f32 0.0, %v1267
        %v1269 = vpop.f32.mrf.mxu0
        %1270 = vmatprep.mubr.bf16.mxu0 %v1185
        %1271 = vmatmul.mubr.bf16.gmra.mxu0 %v1035
        %v1272 = vpop.f32.mrf.mxu0
        %v1273 = vadd.f32 0.0, %v1272
        %v1274 = vpop.f32.mrf.mxu0
        %v1275 = vpop.f32.mrf.mxu0
        %v1276 = vadd.f32 0.0, %v1275
        %v1277 = vpop.f32.mrf.mxu0
        %1278 = vmatprep.mubr.bf16.mxu0 %v1188
        %1279 = vmatmul.mubr.bf16.gmra.mxu0 %v1039
        %v1280 = vpop.f32.mrf.mxu0
        %v1281 = vadd.f32 0.0, %v1280
        %v1282 = vpop.f32.mrf.mxu0
        %v1283 = vpop.f32.mrf.mxu0
        %v1284 = vadd.f32 0.0, %v1283
        %v1285 = vpop.f32.mrf.mxu0
        %1286 = vdwg.mxu0
        %v1311 = vunpack.c.l.b16 %v1045
        %v1312 = vunpack.c.l.b16 %v1046
        %v1313 = vunpack.c.l.b16 %v1047
        %v1314 = vunpack.c.l.b16 %v1048
        %v1315 = vunpack.c.l.b16 %v1049
        %v1316 = vunpack.c.l.b16 %v1050
        %v1317 = vunpack.c.l.b16 %v1051
        %v1318 = vunpack.c.l.b16 %v1052
        %v1319 = vunpack.c.l.b16 %v1053
        %v1320 = vunpack.c.l.b16 %v1054
        %v1321 = vunpack.c.l.b16 %v1055
        %v1322 = vunpack.c.l.b16 %v1056
        %v1323 = vunpack.c.l.b16 %v1057
        %v1324 = vunpack.c.l.b16 %v1058
        %v1325 = vunpack.c.l.b16 %v1059
        %v1326 = vunpack.c.l.b16 %v1060
        %v1327 = vunpack.c.l.b16 %v1061
        %v1328 = vunpack.c.l.b16 %v1062
        %v1329 = vunpack.c.l.b16 %v1063
        %v1330 = vunpack.c.l.b16 %v1064
        %v1331 = vunpack.c.l.b16 %v1065
        %v1332 = vunpack.c.l.b16 %v1066
        %v1333 = vunpack.c.l.b16 %v1067
        %v1334 = vunpack.c.l.b16 %v1068
        %v1335 = vpack.c.b16 %v1312, %v1311
        %v1336 = vpack.c.b16 %v1314, %v1313
        %v1337 = vpack.c.b16 %v1316, %v1315
        %v1338 = vpack.c.b16 %v1318, %v1317
        %v1339 = vpack.c.b16 %v1320, %v1319
        %v1340 = vpack.c.b16 %v1322, %v1321
        %v1341 = vpack.c.b16 %v1324, %v1323
        %v1342 = vpack.c.b16 %v1326, %v1325
        %v1343 = vpack.c.b16 %v1328, %v1327
        %v1344 = vpack.c.b16 %v1330, %v1329
        %v1345 = vpack.c.b16 %v1332, %v1331
        %v1346 = vpack.c.b16 %v1334, %v1333
        %v1360 = vsel %vm1004, %v964, 0
        %1362 = vmatprep.subr.bf16.mxu0 0
        %1363 = vmatpush1.bf16.msra.mxu0 %v1342
        %1364 = vmatprep.subr.bf16.mxu0 0
        %1365 = vmatpush1.bf16.msra.mxu0 %v1341
        %1366 = vmatprep.subr.bf16.mxu0 0
        %1367 = vmatpush1.bf16.msra.mxu0 %v1340
        %1368 = vmatprep.subr.bf16.mxu0 0
        %1369 = vmatpush1.bf16.msra.mxu0 %v1339
        %1370 = vmatprep.subr.bf16.mxu0 0
        %1371 = vmatpush1.bf16.msra.mxu0 %v1338
        %1372 = vmatprep.subr.bf16.mxu0 0
        %1373 = vmatpush1.bf16.msra.mxu0 %v1337
        %1374 = vmatprep.subr.bf16.mxu0 0
        %1375 = vmatpush1.bf16.msra.mxu0 %v1336
        %1376 = vmatprep.subr.bf16.mxu0 0
        %1377 = vmatpush1.bf16.msra.mxu0 %v1335
        %1378 = vmatprep.subr.bf16.mxu0 0
        %1379 = vmatpush2.bf16.msra.mxu0 0
        %1380 = vmatprep.subr.bf16.mxu0 0
        %1381 = vmatpush2.bf16.msra.mxu0 0
        %1382 = vmatprep.subr.bf16.mxu0 0
        %1383 = vmatpush2.bf16.msra.mxu0 0
        %1384 = vmatprep.subr.bf16.mxu0 0
        %1385 = vmatpush2.bf16.msra.mxu0 0
        %1386 = vmatprep.subr.bf16.mxu0 0
        %1387 = vmatpush2.bf16.msra.mxu0 %v1346
        %1388 = vmatprep.subr.bf16.mxu0 0
        %1389 = vmatpush2.bf16.msra.mxu0 %v1345
        %1390 = vmatprep.subr.bf16.mxu0 0
        %1391 = vmatpush2.bf16.msra.mxu0 %v1344
        %1392 = vmatprep.subr.bf16.mxu0 0
        %1393 = vmatpush2.bf16.msra.mxu0 %v1343
        %1394 = vmatprep.mubr.bf16.mxu0 %v1360
        %1395 = vmatmul.mubr.bf16.gmra.mxu0 %v1007
        %v1396 = vpop.f32.mrf.mxu0
        %v1397 = vadd.f32 %v1225, %v1396
        %v1398 = vpop.f32.mrf.mxu0
        %v1399 = vpop.f32.mrf.mxu0
        %v1400 = vadd.f32 %v1228, %v1399
        %v1401 = vpop.f32.mrf.mxu0
        %1402 = vmatprep.mubr.bf16.mxu0 %v1167
        %1403 = vmatmul.mubr.bf16.gmra.mxu0 %v1011
        %v1404 = vpop.f32.mrf.mxu0
        %v1405 = vadd.f32 %v1233, %v1404
        %v1406 = vpop.f32.mrf.mxu0
        %v1407 = vpop.f32.mrf.mxu0
        %v1408 = vadd.f32 %v1236, %v1407
        %v1409 = vpop.f32.mrf.mxu0
        %1410 = vmatprep.mubr.bf16.mxu0 %v1170
        %1411 = vmatmul.mubr.bf16.gmra.mxu0 %v1015
        %v1412 = vpop.f32.mrf.mxu0
        %v1413 = vadd.f32 %v1241, %v1412
        %v1414 = vpop.f32.mrf.mxu0
        %v1415 = vpop.f32.mrf.mxu0
        %v1416 = vadd.f32 %v1244, %v1415
        %v1417 = vpop.f32.mrf.mxu0
        %1418 = vmatprep.mubr.bf16.mxu0 %v1173
        %1419 = vmatmul.mubr.bf16.gmra.mxu0 %v1019
        %v1420 = vpop.f32.mrf.mxu0
        %v1421 = vadd.f32 %v1249, %v1420
        %v1422 = vpop.f32.mrf.mxu0
        %v1423 = vpop.f32.mrf.mxu0
        %v1424 = vadd.f32 %v1252, %v1423
        %v1425 = vpop.f32.mrf.mxu0
        %1426 = vmatprep.mubr.bf16.mxu0 %v1176
        %1427 = vmatmul.mubr.bf16.gmra.mxu0 %v1023
        %v1428 = vpop.f32.mrf.mxu0
        %v1429 = vadd.f32 %v1257, %v1428
        %v1430 = vpop.f32.mrf.mxu0
        %v1431 = vpop.f32.mrf.mxu0
        %v1432 = vadd.f32 %v1260, %v1431
        %v1433 = vpop.f32.mrf.mxu0
        %1434 = vmatprep.mubr.bf16.mxu0 %v1179
        %1435 = vmatmul.mubr.bf16.gmra.mxu0 %v1027
        %v1436 = vpop.f32.mrf.mxu0
        %v1437 = vadd.f32 %v1265, %v1436
        %v1438 = vpop.f32.mrf.mxu0
        %v1439 = vpop.f32.mrf.mxu0
        %v1440 = vadd.f32 %v1268, %v1439
        %v1441 = vpop.f32.mrf.mxu0
        %1442 = vmatprep.mubr.bf16.mxu0 %v1182
        %1443 = vmatmul.mubr.bf16.gmra.mxu0 %v1031
        %v1444 = vpop.f32.mrf.mxu0
        %v1445 = vadd.f32 %v1273, %v1444
        %v1446 = vpop.f32.mrf.mxu0
        %v1447 = vpop.f32.mrf.mxu0
        %v1448 = vadd.f32 %v1276, %v1447
        %v1449 = vpop.f32.mrf.mxu0
        %1450 = vmatprep.mubr.bf16.mxu0 %v1185
        %1451 = vmatmul.mubr.bf16.gmra.mxu0 %v1035
        %v1452 = vpop.f32.mrf.mxu0
        %v1453 = vadd.f32 %v1281, %v1452
        %v1454 = vpop.f32.mrf.mxu0
        %v1455 = vpop.f32.mrf.mxu0
        %v1456 = vadd.f32 %v1284, %v1455
        %v1457 = vpop.f32.mrf.mxu0
        %1458 = vdwg.mxu0
        %s1459 = scalar_lea.vmem %s5, 192
        %v1460 = vld [vmem:[%s1459] sm:$0xf]
        %v1461 = vld [vmem:[%s1459 + $0x4] sm:$0xf]
        %v1462 = vld [vmem:[%s1459 + $0x8] sm:$0xf]
        %v1463 = vld [vmem:[%s1459 + $0xc] sm:$0xf]
        %v1464 = vld [vmem:[%s1459 + $0x10] sm:$0xf]
        %v1465 = vld [vmem:[%s1459 + $0x14] sm:$0xf]
        %v1466 = vld [vmem:[%s1459 + $0x18] sm:$0xf]
        %v1467 = vld [vmem:[%s1459 + $0x1c] sm:$0xf]
        %v1468 = vld [vmem:[%s1459 + $0x20] sm:$0xf]
        %v1469 = vld [vmem:[%s1459 + $0x24] sm:$0xf]
        %v1470 = vld [vmem:[%s1459 + $0x28] sm:$0xf]
        %v1471 = vld [vmem:[%s1459 + $0x2c] sm:$0xf]
        %v1472 = vld [vmem:[%s1459 + $0x30] sm:$0xf]
        %v1473 = vld [vmem:[%s1459 + $0x34] sm:$0xf]
        %v1474 = vld [vmem:[%s1459 + $0x38] sm:$0xf]
        %v1475 = vld [vmem:[%s1459 + $0x3c] sm:$0xf]
        %v1476 = vld [vmem:[%s1459 + $0x40] sm:$0xf]
        %v1477 = vld [vmem:[%s1459 + $0x44] sm:$0xf]
        %v1478 = vld [vmem:[%s1459 + $0x48] sm:$0xf]
        %v1479 = vld [vmem:[%s1459 + $0x4c] sm:$0xf]
        %v1480 = vld [vmem:[%s1459 + $0x50] sm:$0xf]
        %v1481 = vld [vmem:[%s1459 + $0x54] sm:$0xf]
        %v1482 = vld [vmem:[%s1459 + $0x58] sm:$0xf]
        %v1483 = vld [vmem:[%s1459 + $0x5c] sm:$0xf]
        %v1508 = vunpack.c.l.b16 %v1460
        %v1509 = vunpack.c.l.b16 %v1461
        %v1510 = vunpack.c.l.b16 %v1462
        %v1511 = vunpack.c.l.b16 %v1463
        %v1512 = vunpack.c.l.b16 %v1464
        %v1513 = vunpack.c.l.b16 %v1465
        %v1514 = vunpack.c.l.b16 %v1466
        %v1515 = vunpack.c.l.b16 %v1467
        %v1516 = vunpack.c.l.b16 %v1468
        %v1517 = vunpack.c.l.b16 %v1469
        %v1518 = vunpack.c.l.b16 %v1470
        %v1519 = vunpack.c.l.b16 %v1471
        %v1520 = vunpack.c.l.b16 %v1472
        %v1521 = vunpack.c.l.b16 %v1473
        %v1522 = vunpack.c.l.b16 %v1474
        %v1523 = vunpack.c.l.b16 %v1475
        %v1524 = vunpack.c.l.b16 %v1476
        %v1525 = vunpack.c.l.b16 %v1477
        %v1526 = vunpack.c.l.b16 %v1478
        %v1527 = vunpack.c.l.b16 %v1479
        %v1528 = vunpack.c.l.b16 %v1480
        %v1529 = vunpack.c.l.b16 %v1481
        %v1530 = vunpack.c.l.b16 %v1482
        %v1531 = vunpack.c.l.b16 %v1483
        %v1532 = vpack.c.b16 %v1509, %v1508
        %v1533 = vpack.c.b16 %v1511, %v1510
        %v1534 = vpack.c.b16 %v1513, %v1512
        %v1535 = vpack.c.b16 %v1515, %v1514
        %v1536 = vpack.c.b16 %v1517, %v1516
        %v1537 = vpack.c.b16 %v1519, %v1518
        %v1538 = vpack.c.b16 %v1521, %v1520
        %v1539 = vpack.c.b16 %v1523, %v1522
        %v1540 = vpack.c.b16 %v1525, %v1524
        %v1541 = vpack.c.b16 %v1527, %v1526
        %v1542 = vpack.c.b16 %v1529, %v1528
        %v1543 = vpack.c.b16 %v1531, %v1530
        %v1557 = vsel %vm1004, %v973, 0
        %1559 = vmatprep.subr.bf16.mxu0 0
        %1560 = vmatpush1.bf16.msra.mxu0 %v1539
        %1561 = vmatprep.subr.bf16.mxu0 0
        %1562 = vmatpush1.bf16.msra.mxu0 %v1538
        %1563 = vmatprep.subr.bf16.mxu0 0
        %1564 = vmatpush1.bf16.msra.mxu0 %v1537
        %1565 = vmatprep.subr.bf16.mxu0 0
        %1566 = vmatpush1.bf16.msra.mxu0 %v1536
        %1567 = vmatprep.subr.bf16.mxu0 0
        %1568 = vmatpush1.bf16.msra.mxu0 %v1535
        %1569 = vmatprep.subr.bf16.mxu0 0
        %1570 = vmatpush1.bf16.msra.mxu0 %v1534
        %1571 = vmatprep.subr.bf16.mxu0 0
        %1572 = vmatpush1.bf16.msra.mxu0 %v1533
        %1573 = vmatprep.subr.bf16.mxu0 0
        %1574 = vmatpush1.bf16.msra.mxu0 %v1532
        %1575 = vmatprep.subr.bf16.mxu0 0
        %1576 = vmatpush2.bf16.msra.mxu0 0
        %1577 = vmatprep.subr.bf16.mxu0 0
        %1578 = vmatpush2.bf16.msra.mxu0 0
        %1579 = vmatprep.subr.bf16.mxu0 0
        %1580 = vmatpush2.bf16.msra.mxu0 0
        %1581 = vmatprep.subr.bf16.mxu0 0
        %1582 = vmatpush2.bf16.msra.mxu0 0
        %1583 = vmatprep.subr.bf16.mxu0 0
        %1584 = vmatpush2.bf16.msra.mxu0 %v1543
        %1585 = vmatprep.subr.bf16.mxu0 0
        %1586 = vmatpush2.bf16.msra.mxu0 %v1542
        %1587 = vmatprep.subr.bf16.mxu0 0
        %1588 = vmatpush2.bf16.msra.mxu0 %v1541
        %1589 = vmatprep.subr.bf16.mxu0 0
        %1590 = vmatpush2.bf16.msra.mxu0 %v1540
        %1591 = vmatprep.mubr.bf16.mxu0 %v1170
        %1592 = vmatmul.mubr.bf16.gmra.mxu0 %v1015
        %v1593 = vpop.f32.mrf.mxu0
        %v1594 = vadd.f32 0.0, %v1593
        %v1595 = vpop.f32.mrf.mxu0
        %v1596 = vpop.f32.mrf.mxu0
        %v1597 = vadd.f32 0.0, %v1596
        %v1598 = vpop.f32.mrf.mxu0
        %1599 = vmatprep.mubr.bf16.mxu0 %v1173
        %1600 = vmatmul.mubr.bf16.gmra.mxu0 %v1019
        %v1601 = vpop.f32.mrf.mxu0
        %v1602 = vadd.f32 0.0, %v1601
        %v1603 = vpop.f32.mrf.mxu0
        %v1604 = vpop.f32.mrf.mxu0
        %v1605 = vadd.f32 0.0, %v1604
        %v1606 = vpop.f32.mrf.mxu0
        %1607 = vmatprep.mubr.bf16.mxu0 %v1176
        %1608 = vmatmul.mubr.bf16.gmra.mxu0 %v1023
        %v1609 = vpop.f32.mrf.mxu0
        %v1610 = vadd.f32 0.0, %v1609
        %v1611 = vpop.f32.mrf.mxu0
        %v1612 = vpop.f32.mrf.mxu0
        %v1613 = vadd.f32 0.0, %v1612
        %v1614 = vpop.f32.mrf.mxu0
        %1615 = vmatprep.mubr.bf16.mxu0 %v1179
        %1616 = vmatmul.mubr.bf16.gmra.mxu0 %v1027
        %v1617 = vpop.f32.mrf.mxu0
        %v1618 = vadd.f32 0.0, %v1617
        %v1619 = vpop.f32.mrf.mxu0
        %v1620 = vpop.f32.mrf.mxu0
        %v1621 = vadd.f32 0.0, %v1620
        %v1622 = vpop.f32.mrf.mxu0
        %1623 = vmatprep.mubr.bf16.mxu0 %v1182
        %1624 = vmatmul.mubr.bf16.gmra.mxu0 %v1031
        %v1625 = vpop.f32.mrf.mxu0
        %v1626 = vadd.f32 0.0, %v1625
        %v1627 = vpop.f32.mrf.mxu0
        %v1628 = vpop.f32.mrf.mxu0
        %v1629 = vadd.f32 0.0, %v1628
        %v1630 = vpop.f32.mrf.mxu0
        %1631 = vmatprep.mubr.bf16.mxu0 %v1185
        %1632 = vmatmul.mubr.bf16.gmra.mxu0 %v1035
        %v1633 = vpop.f32.mrf.mxu0
        %v1634 = vadd.f32 0.0, %v1633
        %v1635 = vpop.f32.mrf.mxu0
        %v1636 = vpop.f32.mrf.mxu0
        %v1637 = vadd.f32 0.0, %v1636
        %v1638 = vpop.f32.mrf.mxu0
        %1639 = vmatprep.mubr.bf16.mxu0 %v1188
        %1640 = vmatmul.mubr.bf16.gmra.mxu0 %v1039
        %v1641 = vpop.f32.mrf.mxu0
        %v1642 = vadd.f32 0.0, %v1641
        %v1643 = vpop.f32.mrf.mxu0
        %v1644 = vpop.f32.mrf.mxu0
        %v1645 = vadd.f32 0.0, %v1644
        %v1646 = vpop.f32.mrf.mxu0
        %1647 = vmatprep.mubr.bf16.mxu0 %v1557
        %1648 = vmatmul.mubr.bf16.gmra.mxu0 %v1043
        %v1649 = vpop.f32.mrf.mxu0
        %v1650 = vadd.f32 0.0, %v1649
        %v1651 = vpop.f32.mrf.mxu0
        %v1652 = vpop.f32.mrf.mxu0
        %v1653 = vadd.f32 0.0, %v1652
        %v1654 = vpop.f32.mrf.mxu0
        %1655 = vdwg.mxu0
        %v1656 = vadd.f32 %v1397, %v1594
        %v1657 = vadd.f32 %v1400, %v1597
        %v1658 = vadd.f32 %v1405, %v1602
        %v1659 = vadd.f32 %v1408, %v1605
        %v1660 = vadd.f32 %v1413, %v1610
        %v1661 = vadd.f32 %v1416, %v1613
        %v1662 = vadd.f32 %v1421, %v1618
        %v1663 = vadd.f32 %v1424, %v1621
        %v1664 = vadd.f32 %v1429, %v1626
        %v1665 = vadd.f32 %v1432, %v1629
        %v1666 = vadd.f32 %v1437, %v1634
        %v1667 = vadd.f32 %v1440, %v1637
        %v1668 = vadd.f32 %v1445, %v1642
        %v1669 = vadd.f32 %v1448, %v1645
        %v1670 = vadd.f32 %v1453, %v1650
        %v1671 = vadd.f32 %v1456, %v1653
        %v1672 = vld [vmem:[%s6] sm:$0x1]
        %v1674 = vlaneseq
        %v1675 = vshrl.u32 %v1674, 7
        %v1676 = vsub.s32 0, %v1675
        %v1677 = vrot.slane %v1672, %v1676
        %v1679 = vadd.f32 %v1656, %v1677
        %v1680 = vadd.f32 %v1657, %v1677
        %v1681 = vadd.f32 %v1658, %v1677
        %v1682 = vadd.f32 %v1659, %v1677
        %v1683 = vadd.f32 %v1660, %v1677
        %v1684 = vadd.f32 %v1661, %v1677
        %v1685 = vadd.f32 %v1662, %v1677
        %v1686 = vadd.f32 %v1663, %v1677
        %v1687 = vadd.f32 %v1664, %v1677
        %v1688 = vadd.f32 %v1665, %v1677
        %v1689 = vadd.f32 %v1666, %v1677
        %v1690 = vadd.f32 %v1667, %v1677
        %v1691 = vadd.f32 %v1668, %v1677
        %v1692 = vadd.f32 %v1669, %v1677
        %v1693 = vadd.f32 %v1670, %v1677
        %v1694 = vadd.f32 %v1671, %v1677
        %v1695 = vld [vmem:[%s580] sm:$0xf]
        %v1696 = vld [vmem:[%s580 + $0x4] sm:$0xf]
        %v1697 = vld [vmem:[%s580 + $0x8] sm:$0xf]
        %v1698 = vld [vmem:[%s580 + $0xc] sm:$0xf]
        %v1699 = vld [vmem:[%s580 + $0x10] sm:$0xf]
        %v1700 = vld [vmem:[%s580 + $0x14] sm:$0xf]
        %v1701 = vld [vmem:[%s580 + $0x18] sm:$0xf]
        %v1702 = vld [vmem:[%s580 + $0x1c] sm:$0xf]
        %v1703 = vld [vmem:[%s580 + $0x20] sm:$0xf]
        %v1704 = vld [vmem:[%s580 + $0x24] sm:$0xf]
        %v1705 = vld [vmem:[%s580 + $0x28] sm:$0xf]
        %v1706 = vld [vmem:[%s580 + $0x2c] sm:$0xf]
        %v1707 = vld [vmem:[%s580 + $0x30] sm:$0xf]
        %v1708 = vld [vmem:[%s580 + $0x34] sm:$0xf]
        %v1709 = vld [vmem:[%s580 + $0x38] sm:$0xf]
        %v1710 = vld [vmem:[%s580 + $0x3c] sm:$0xf]
        %v1711 = vld [vmem:[%s8] sm:$0xf]
        %v1712 = vld [vmem:[%s8 + $0x4] sm:$0xf]
        %v1713 = vld [vmem:[%s8 + $0x8] sm:$0xf]
        %v1714 = vld [vmem:[%s8 + $0xc] sm:$0xf]
        %v1731 = vunpack.c.l.b16 %v1695
        %v1732 = vunpack.c.l.b16 %v1696
        %v1733 = vunpack.c.l.b16 %v1697
        %v1734 = vunpack.c.l.b16 %v1698
        %v1735 = vunpack.c.l.b16 %v1699
        %v1736 = vunpack.c.l.b16 %v1700
        %v1737 = vunpack.c.l.b16 %v1701
        %v1738 = vunpack.c.l.b16 %v1702
        %v1739 = vunpack.c.l.b16 %v1703
        %v1740 = vunpack.c.l.b16 %v1704
        %v1741 = vunpack.c.l.b16 %v1705
        %v1742 = vunpack.c.l.b16 %v1706
        %v1743 = vunpack.c.l.b16 %v1707
        %v1744 = vunpack.c.l.b16 %v1708
        %v1745 = vunpack.c.l.b16 %v1709
        %v1746 = vunpack.c.l.b16 %v1710
        %v1747 = vpack.c.b16 %v1732, %v1731
        %v1748 = vpack.c.b16 %v1734, %v1733
        %v1749 = vpack.c.b16 %v1736, %v1735
        %v1750 = vpack.c.b16 %v1738, %v1737
        %v1751 = vpack.c.b16 %v1740, %v1739
        %v1752 = vpack.c.b16 %v1742, %v1741
        %v1753 = vpack.c.b16 %v1744, %v1743
        %v1754 = vpack.c.b16 %v1746, %v1745
        %v1759 = vunpack.c.l.b16 %v1711
        %v1760 = vunpack.c.l.b16 %v1712
        %v1761 = vunpack.c.l.b16 %v1713
        %v1762 = vunpack.c.l.b16 %v1714
        %v1763 = vpack.c.b16 %v1760, %v1759
        %v1764 = vpack.c.b16 %v1762, %v1761
        %vm1767 = vcmask 261120
        %v1769 = vsel %vm1767, %v1747, 0
        %v1772 = vsel %vm1767, %v1748, 0
        %v1775 = vsel %vm1767, %v1749, 0
        %v1778 = vsel %vm1767, %v1750, 0
        %v1781 = vsel %vm1767, %v1751, 0
        %v1784 = vsel %vm1767, %v1752, 0
        %v1787 = vsel %vm1767, %v1753, 0
        %v1790 = vsel %vm1767, %v1754, 0
        %1792 = vmatprep.subr.bf16.mxu0 0
        %1793 = vmatpush1.bf16.msra.mxu0 0
        %1794 = vmatprep.subr.bf16.mxu0 0
        %1795 = vmatpush1.bf16.msra.mxu0 0
        %1796 = vmatprep.subr.bf16.mxu0 0
        %1797 = vmatpush1.bf16.msra.mxu0 0
        %1798 = vmatprep.subr.bf16.mxu0 0
        %1799 = vmatpush1.bf16.msra.mxu0 0
        %1800 = vmatprep.subr.bf16.mxu0 0
        %1801 = vmatpush1.bf16.msra.mxu0 0
        %1802 = vmatprep.subr.bf16.mxu0 0
        %1803 = vmatpush1.bf16.msra.mxu0 0
        %1804 = vmatprep.subr.bf16.mxu0 0
        %1805 = vmatpush1.bf16.msra.mxu0 %v1764
        %1806 = vmatprep.subr.bf16.mxu0 0
        %1807 = vmatpush1.bf16.msra.mxu0 %v1763
        %1808 = vmatprep.subr.bf16.mxu0 0
        %1809 = vmatpush2.bf16.msra.mxu0 0
        %1810 = vmatprep.subr.bf16.mxu0 0
        %1811 = vmatpush2.bf16.msra.mxu0 0
        %1812 = vmatprep.subr.bf16.mxu0 0
        %1813 = vmatpush2.bf16.msra.mxu0 0
        %1814 = vmatprep.subr.bf16.mxu0 0
        %1815 = vmatpush2.bf16.msra.mxu0 0
        %1816 = vmatprep.subr.bf16.mxu0 0
        %1817 = vmatpush2.bf16.msra.mxu0 0
        %1818 = vmatprep.subr.bf16.mxu0 0
        %1819 = vmatpush2.bf16.msra.mxu0 0
        %1820 = vmatprep.subr.bf16.mxu0 0
        %1821 = vmatpush2.bf16.msra.mxu0 0
        %1822 = vmatprep.subr.bf16.mxu0 0
        %1823 = vmatpush2.bf16.msra.mxu0 0
        %1824 = vmatprep.mubr.bf16.mxu0 0
        %1825 = vmatmul.mubr.bf16.gmra.mxu0 %v1769
        %v1826 = vpop.f32.mrf.mxu0
        %v1827 = vadd.f32 0.0, %v1826
        %v1828 = vpop.f32.mrf.mxu0
        %v1829 = vpop.f32.mrf.mxu0
        %v1830 = vadd.f32 0.0, %v1829
        %v1831 = vpop.f32.mrf.mxu0
        %1832 = vmatprep.mubr.bf16.mxu0 0
        %1833 = vmatmul.mubr.bf16.gmra.mxu0 %v1772
        %v1834 = vpop.f32.mrf.mxu0
        %v1835 = vadd.f32 0.0, %v1834
        %v1836 = vpop.f32.mrf.mxu0
        %v1837 = vpop.f32.mrf.mxu0
        %v1838 = vadd.f32 0.0, %v1837
        %v1839 = vpop.f32.mrf.mxu0
        %1840 = vmatprep.mubr.bf16.mxu0 0
        %1841 = vmatmul.mubr.bf16.gmra.mxu0 %v1775
        %v1842 = vpop.f32.mrf.mxu0
        %v1843 = vadd.f32 0.0, %v1842
        %v1844 = vpop.f32.mrf.mxu0
        %v1845 = vpop.f32.mrf.mxu0
        %v1846 = vadd.f32 0.0, %v1845
        %v1847 = vpop.f32.mrf.mxu0
        %1848 = vmatprep.mubr.bf16.mxu0 0
        %1849 = vmatmul.mubr.bf16.gmra.mxu0 %v1778
        %v1850 = vpop.f32.mrf.mxu0
        %v1851 = vadd.f32 0.0, %v1850
        %v1852 = vpop.f32.mrf.mxu0
        %v1853 = vpop.f32.mrf.mxu0
        %v1854 = vadd.f32 0.0, %v1853
        %v1855 = vpop.f32.mrf.mxu0
        %1856 = vmatprep.mubr.bf16.mxu0 0
        %1857 = vmatmul.mubr.bf16.gmra.mxu0 %v1781
        %v1858 = vpop.f32.mrf.mxu0
        %v1859 = vadd.f32 0.0, %v1858
        %v1860 = vpop.f32.mrf.mxu0
        %v1861 = vpop.f32.mrf.mxu0
        %v1862 = vadd.f32 0.0, %v1861
        %v1863 = vpop.f32.mrf.mxu0
        %1864 = vmatprep.mubr.bf16.mxu0 0
        %1865 = vmatmul.mubr.bf16.gmra.mxu0 %v1784
        %v1866 = vpop.f32.mrf.mxu0
        %v1867 = vadd.f32 0.0, %v1866
        %v1868 = vpop.f32.mrf.mxu0
        %v1869 = vpop.f32.mrf.mxu0
        %v1870 = vadd.f32 0.0, %v1869
        %v1871 = vpop.f32.mrf.mxu0
        %1872 = vmatprep.mubr.bf16.mxu0 0
        %1873 = vmatmul.mubr.bf16.gmra.mxu0 %v1787
        %v1874 = vpop.f32.mrf.mxu0
        %v1875 = vadd.f32 0.0, %v1874
        %v1876 = vpop.f32.mrf.mxu0
        %v1877 = vpop.f32.mrf.mxu0
        %v1878 = vadd.f32 0.0, %v1877
        %v1879 = vpop.f32.mrf.mxu0
        %1880 = vmatprep.mubr.bf16.mxu0 0
        %1881 = vmatmul.mubr.bf16.gmra.mxu0 %v1790
        %v1882 = vpop.f32.mrf.mxu0
        %v1883 = vadd.f32 0.0, %v1882
        %v1884 = vpop.f32.mrf.mxu0
        %v1885 = vpop.f32.mrf.mxu0
        %v1886 = vadd.f32 0.0, %v1885
        %v1887 = vpop.f32.mrf.mxu0
        %1888 = vdwg.mxu0
        %v1889 = vadd.f32 %v1679, %v1827
        %v1890 = vadd.f32 %v1680, %v1830
        %v1891 = vadd.f32 %v1681, %v1835
        %v1892 = vadd.f32 %v1682, %v1838
        %v1893 = vadd.f32 %v1683, %v1843
        %v1894 = vadd.f32 %v1684, %v1846
        %v1895 = vadd.f32 %v1685, %v1851
        %v1896 = vadd.f32 %v1686, %v1854
        %v1897 = vadd.f32 %v1687, %v1859
        %v1898 = vadd.f32 %v1688, %v1862
        %v1899 = vadd.f32 %v1689, %v1867
        %v1900 = vadd.f32 %v1690, %v1870
        %v1901 = vadd.f32 %v1691, %v1875
        %v1902 = vadd.f32 %v1692, %v1878
        %v1903 = vadd.f32 %v1693, %v1883
        %v1904 = vadd.f32 %v1694, %v1886
        %v1905 = vld [vmem:[%s9] sm:$0x1]
        %v1907 = vlaneseq
        %v1908 = vshrl.u32 %v1907, 7
        %v1909 = vsub.s32 0, %v1908
        %v1910 = vrot.slane %v1905, %v1909
        %v1912 = vadd.f32 %v1889, %v1910
        %v1913 = vadd.f32 %v1890, %v1910
        %v1914 = vadd.f32 %v1891, %v1910
        %v1915 = vadd.f32 %v1892, %v1910
        %v1916 = vadd.f32 %v1893, %v1910
        %v1917 = vadd.f32 %v1894, %v1910
        %v1918 = vadd.f32 %v1895, %v1910
        %v1919 = vadd.f32 %v1896, %v1910
        %v1920 = vadd.f32 %v1897, %v1910
        %v1921 = vadd.f32 %v1898, %v1910
        %v1922 = vadd.f32 %v1899, %v1910
        %v1923 = vadd.f32 %v1900, %v1910
        %v1924 = vadd.f32 %v1901, %v1910
        %v1925 = vadd.f32 %v1902, %v1910
        %v1926 = vadd.f32 %v1903, %v1910
        %v1927 = vadd.f32 %v1904, %v1910
        %1928 = vst.msk [vmem:[%s519] sm:$0xff] %vm1004, %v1912
        %1929 = vst.msk [vmem:[%s519 + $0x8] sm:$0xff] %vm1004, %v1913
        %1930 = vst.msk [vmem:[%s519 + $0x10] sm:$0xff] %vm1004, %v1914
        %1931 = vst.msk [vmem:[%s519 + $0x18] sm:$0xff] %vm1004, %v1915
        %1932 = vst.msk [vmem:[%s519 + $0x20] sm:$0xff] %vm1004, %v1916
        %1933 = vst.msk [vmem:[%s519 + $0x28] sm:$0xff] %vm1004, %v1917
        %1934 = vst.msk [vmem:[%s519 + $0x30] sm:$0xff] %vm1004, %v1918
        %1935 = vst.msk [vmem:[%s519 + $0x38] sm:$0xff] %vm1004, %v1919
        %1936 = vst.msk [vmem:[%s519 + $0x40] sm:$0xff] %vm1004, %v1920
        %1937 = vst.msk [vmem:[%s519 + $0x48] sm:$0xff] %vm1004, %v1921
        %1938 = vst.msk [vmem:[%s519 + $0x50] sm:$0xff] %vm1004, %v1922
        %1939 = vst.msk [vmem:[%s519 + $0x58] sm:$0xff] %vm1004, %v1923
        %1940 = vst.msk [vmem:[%s519 + $0x60] sm:$0xff] %vm1004, %v1924
        %1941 = vst.msk [vmem:[%s519 + $0x68] sm:$0xff] %vm1004, %v1925
        %1942 = vst.msk [vmem:[%s519 + $0x70] sm:$0xff] %vm1004, %v1926
        %1943 = vst.msk [vmem:[%s519 + $0x78] sm:$0xff] %vm1004, %v1927
        %s1944 = sand.u32 %s310, 1
        %s1945 = scalar_lea.sflag [#allocation3], %s1944
        %s1946 = sand.u32 %s310, 1
        %s1947 = smul.addr %s1946, 128
        %s1948 = scalar_lea.vmem [#allocation2], %s1947
        // Predicated region
        $region61: #{_lambda_.5} parent=59 // pred_check
          %p1949 = pneg %p320
        $region62: #{_lambda_.5} parent=59 // pred_check_branch
          %1951 = sbr.rel (%p1949) target = $region64
        $region63: #{_lambda_.5} parent=59 // pred_region
          %s1952 = smul.u32 8, %s29
          %s1954 = ssub.s32 2048, 2048
          %1955 = vsyncadd %s1945, %s1954
          %s1956 = smul.addr %s1952, 2
          %s1957 = smul.addr %s28, 32
          %s1958 = sadd.s32 %s1956, %s1957
          %s1959 = smul.addr %s1958, 128
          %s1960 = scalar_lea.hbm %s10, %s1959
          %s1961 = sshll.u32 %s1948, 4
          %s1962 = int_to_ptr.vmem [resolvable:$true] %s1961
          %1967 = dma.vmem_to_hbm [thread:$0]  %s1962, 2048, %s1960, %s1945, 128, 128, 8
        $region64: #{_lambda_.5} parent=59 // pred_fallthru
          _
      $region60: #{_lambda_.5} parent=5 // pred_fallthru
        _
      %p1968 = scmp.le.s32.totalorder 2, %s19
      // Predicated region
      $region65: #{_lambda_.5} parent=5 // pred_check
        %p1969 = pneg %p1968
      $region66: #{_lambda_.5} parent=5 // pred_check_branch
        %1971 = sbr.rel (%p1969) target = $region68
      $region67: #{_lambda_.5} parent=5 // pred_region
        %s1972 = ssub.s32 %s19, 2
        // Predicated region
        $region69: #{_lambda_.5} parent=67 // pred_check
          %p1973 = pneg %p326
        $region70: #{_lambda_.5} parent=67 // pred_check_branch
          %1975 = sbr.rel (%p1973) target = $region72
        $region71: #{_lambda_.5} parent=67 // pred_region
          %s1976 = sand.u32 %s311, 1
          %s1977 = scalar_lea.sflag [#allocation3], %s1976
          %s1978 = sand.u32 %s311, 1
          %s1979 = smul.addr %s1978, 128
          %s1980 = scalar_lea.vmem [#allocation2], %s1979
          %1981 = dma.done %s1977, 2048
        $region72: #{_lambda_.5} parent=67 // pred_fallthru
          _
      $region68: #{_lambda_.5} parent=5 // pred_fallthru
        _
    $region6: #{_lambda_.5} parent=1 // loop_footer
      %s23 = sadd.s32 1, %s19
    $region7: #{_lambda_.5} parent=1 // loop_footer_branch
      %18 = sbr.rel target = $region3
    $region8: #{_lambda_.5} parent=1 // loop_exit
      _
    %1982 = vsyncpa [#allocation3], 1
    %s1983 = scalar_lea.sflag [#allocation3], 1
    %1984 = vsyncpa %s1983, 1

</llo_original>
